<compile_context>
chip_gen: v7x
topology: tpu7x:2x2x1
jax: 0.10.0
libtpu: 0.0.40
codegen_flags: <defaults>
</compile_context>

<pallas_src>
import functools
import math

import jax
import jax.numpy as jnp
import numpy as np
from jax.experimental import pallas as pl
from jax.experimental.pallas import tpu as pltpu


def _llama_attn_kernel(x_ref, wqkv_ref, bqkv_ref, wo_ref, bo_ref, cos_ref, sin_ref,
                       o_ref, kv_ref, acc_ref, *, head_dim, heads_per_step, q_tile):
    """One grid step == (batch b, query-row tile qi, head group g).

    x_ref    : (S, H)              bf16  resident for the whole batch element
    wqkv_ref : (H, hps*3*hd)       bf16  [ Wq_g | Wk_g | Wv_g ] for this head group
    bqkv_ref : (1, hps*3*hd)       f32
    wo_ref   : (hps*hd, H)         bf16  o_proj rows for this head group
    bo_ref   : (1, H)              f32
    cos_ref  : (S, hd)             f32
    sin_ref  : (S, hd)             f32   sign-folded sin (for pltpu.roll RoPE)
    o_ref    : (q_tile, H)         f32   written once, at the last head group
    kv_ref   : (nG, S, hps*2*hd)   bf16  scratch: RoPE'd K | V cache per head group
    acc_ref  : (q_tile, H)         f32   scratch: o_proj accumulator across head groups
    """
    qi = pl.program_id(1)
    g = pl.program_id(2)
    hd = head_dim
    hps = heads_per_step
    half = hd // 2
    q_start = pl.multiple_of(qi * q_tile, q_tile)

    def rope(t, cos, sin_signed):
        # t*cos + rotate_half(t)*sin  ==  t*cos + roll(t, hd/2)*sin_signed  (XLU roll,
        # no lane-axis concatenate / negation on the VPU).
        return t * cos + pltpu.roll(t, shift=half, axis=1) * sin_signed

    # ---- K/V projection (+ RoPE on K) for this head group: once per batch element,
    #      at the first q tile; cached in VMEM and reused by the other q tiles.
    @pl.when(qi == 0)
    def _():
        x_full = x_ref[...]                                            # (S, H) bf16
        kv = jnp.dot(x_full, wqkv_ref[:, hps * hd:],
                     preferred_element_type=jnp.float32)               # (S, hps*2*hd) f32
        kv = kv + bqkv_ref[:, hps * hd:]
        cos_f = cos_ref[...]
        sin_f = sin_ref[...]
        k_parts = [rope(kv[:, h * hd:(h + 1) * hd], cos_f, sin_f) for h in range(hps)]
        v_part = kv[:, hps * hd:]                                      # (S, hps*hd)
        kv_ref[g] = jnp.concatenate(k_parts + [v_part], axis=-1).astype(jnp.bfloat16)

    # ---- Q projection for this q tile (1/sqrt(head_dim) folded into Wq/bq on host).
    x_q = x_ref[pl.ds(q_start, q_tile), :]                             # (Sq, H) bf16
    q = jnp.dot(x_q, wqkv_ref[:, :hps * hd],
                preferred_element_type=jnp.float32) + bqkv_ref[:, :hps * hd]

    cos_q = cos_ref[pl.ds(q_start, q_tile), :]                         # (Sq, hd) f32
    sin_q = sin_ref[pl.ds(q_start, q_tile), :]

    kv_g = kv_ref[g]                                                   # (S, hps*2*hd) bf16

    ctx_parts = []
    for h in range(hps):
        q_h = rope(q[:, h * hd:(h + 1) * hd], cos_q, sin_q).astype(jnp.bfloat16)
        k_h = kv_g[:, h * hd:(h + 1) * hd]
        v_h = kv_g[:, hps * hd + h * hd: hps * hd + (h + 1) * hd]

        # scores: contract the last dims directly (no explicit k transpose), f32 acc
        s = jax.lax.dot_general(q_h, k_h, (((1,), (1,)), ((), ())),
                                preferred_element_type=jnp.float32)    # (Sq, S)
        s = s - jnp.max(s, axis=-1, keepdims=True)
        p = jnp.exp(s)                                                 # f32 softmax numerator
        l = jnp.sum(p, axis=-1, keepdims=True)                         # (Sq, 1)
        ctx = jnp.dot(p.astype(jnp.bfloat16), v_h,
                      preferred_element_type=jnp.float32)              # (Sq, hd)
        # deferred softmax normalisation: scale the (Sq, hd) context, not (Sq, S) probs
        ctx = ctx * pl.reciprocal(l, approx=True)
        # attention dropout: identity (eval mode)
        ctx_parts.append(ctx.astype(jnp.bfloat16))

    ctx_g = jnp.concatenate(ctx_parts, axis=-1) if hps > 1 else ctx_parts[0]
    contrib = jnp.dot(ctx_g, wo_ref[...], preferred_element_type=jnp.float32)  # (Sq, H)

    @pl.when(g == 0)
    def _():
        acc_ref[...] = contrib

    @pl.when(g > 0)
    def _():
        acc_ref[...] += contrib

    # single output write, at the last head group, with the o_proj bias fused in
    @pl.when(g == pl.num_programs(2) - 1)
    def _():
        o_ref[...] = (acc_ref[...] + bo_ref[...]).astype(o_ref.dtype)


def _vmem_limit_bytes():
    # v7x has 64 MiB VMEM per TensorCore, v5e/v6e have 128 MiB; leave ~16 MiB headroom
    # for Mosaic-internal scratch + the double-buffered pipeline, cap at 100 MiB.
    try:
        cap = int(getattr(pltpu.get_tpu_info(), "vmem_capacity_bytes"))
    except Exception:
        cap = 64 * 1024 * 1024
    return int(max(32 * 1024 * 1024, min(cap - 16 * 1024 * 1024, 100 * 1024 * 1024)))


def llama_attention_pallas(x, wq, bq, wk, bk, wv, bv, wo, bo, cos, sin, num_heads,
                           *, q_tile=None, heads_per_step=2):
    """x: (B,S,H) f32. Weights given as [H_in, H_out] (nn.Linear weight transposed)."""
    B, S, H = x.shape
    hd = H // num_heads
    assert num_heads * hd == H
    if num_heads % heads_per_step != 0:
        heads_per_step = 1                      # v5e-style fallback: one head per step
    hps = heads_per_step
    nG = num_heads // hps
    if q_tile is None:
        q_tile = min(S, 256)
    q_tile = min(q_tile, S)
    # TODO(synk): pad ragged sequence lengths; here S must be a multiple of q_tile.
    assert S % q_tile == 0 and q_tile % 8 == 0
    nQ = S // q_tile
    scale = 1.0 / math.sqrt(hd)
    half = hd // 2
    f32, bf16 = jnp.float32, jnp.bfloat16

    def per_head(w):                            # (H, nH*hd) -> (nH, H, hd)
        return w.reshape(H, num_heads, hd).transpose(1, 0, 2)

    def group_w(w_h):                           # (nH, H, hd) -> (nG, H, hps*hd)
        return w_h.reshape(nG, hps, H, hd).transpose(0, 2, 1, 3).reshape(nG, H, hps * hd)

    # fold 1/sqrt(head_dim) into the Q projection (RoPE is linear, so this is exact)
    wqkv = jnp.concatenate(
        [group_w(per_head(wq) * scale), group_w(per_head(wk)), group_w(per_head(wv))],
        axis=-1).astype(bf16)                                           # (nG, H, hps*3*hd)
    bqkv = jnp.concatenate(
        [(bq.reshape(-1) * scale).reshape(nG, 1, hps * hd),
         bk.reshape(-1).reshape(nG, 1, hps * hd),
         bv.reshape(-1).reshape(nG, 1, hps * hd)], axis=-1).astype(f32)  # (nG, 1, hps*3*hd)
    wo_g = wo.reshape(nG, hps * hd, H).astype(bf16)                      # (nG, hps*hd, H)
    bo32 = bo.reshape(1, H).astype(f32)

    x_bf16 = x.astype(bf16)
    cos32 = cos.astype(f32)
    # sign-folded sin so that rope(t) = t*cos + pltpu.roll(t, hd/2)*sin_signed
    sin_signed = jnp.concatenate([-sin[..., :half], sin[..., half:]], axis=-1).astype(f32)

    kernel = functools.partial(_llama_attn_kernel, head_dim=hd,
                               heads_per_step=hps, q_tile=q_tile)

    flops = int(2 * B * S * H * 3 * H            # QKV projections
                + 4 * B * S * S * H              # q.k^T + p.v over all heads
                + 2 * B * S * H * H)             # o_proj
    bytes_accessed = int(
        x_bf16.size * 2                                               # x: once per batch elt
        + B * nQ * (wqkv.size * 2 + wo_g.size * 2 + bqkv.size * 4)    # weights per (b, q tile)
        + (cos32.size + sin_signed.size) * 4 + bo32.size * 4
        + B * S * H * 4)                                              # f32 output write
    cost = pl.CostEstimate(flops=flops, transcendentals=int(B * num_heads * S * S),
                           bytes_accessed=bytes_accessed)

    return pl.pallas_call(
        kernel,
        out_shape=jax.ShapeDtypeStruct((B, S, H), jnp.float32),
        grid=(B, nQ, nG),
        in_specs=[
            pl.BlockSpec((None, S, H), lambda b, qi, g: (b, 0, 0)),             # x (per batch)
            pl.BlockSpec((None, H, hps * 3 * hd), lambda b, qi, g: (g, 0, 0)),  # fused QKV w
            pl.BlockSpec((None, 1, hps * 3 * hd), lambda b, qi, g: (g, 0, 0)),  # fused QKV b
            pl.BlockSpec((None, hps * hd, H), lambda b, qi, g: (g, 0, 0)),      # o_proj rows
            pl.BlockSpec((1, H), lambda b, qi, g: (0, 0)),                      # o_proj bias
            pl.BlockSpec((None, S, hd), lambda b, qi, g: (b, 0, 0)),            # cos
            pl.BlockSpec((None, S, hd), lambda b, qi, g: (b, 0, 0)),            # sin (signed)
        ],
        out_specs=pl.BlockSpec((None, q_tile, H), lambda b, qi, g: (b, qi, 0)),
        scratch_shapes=[
            pltpu.VMEM((nG, S, hps * 2 * hd), jnp.bfloat16),   # RoPE'd K | V cache
            pltpu.VMEM((q_tile, H), jnp.float32),              # o_proj accumulator
        ],
        compiler_params=pltpu.CompilerParams(
            # head-group axis = o_proj reduction (innermost, "arbitrary"); the q-tile
            # axis is "arbitrary" because the K/V cache written at qi==0 is reused by
            # later q tiles.  TODO(synk): to shard q tiles across v7x's 2 TCs when
            # B==1, drop the cross-tile K/V reuse (or track cache validity per core)
            # and mark this axis "parallel".
            dimension_semantics=("parallel", "arbitrary", "arbitrary"),
            vmem_limit_bytes=_vmem_limit_bytes()),
        cost_estimate=cost,
    )(x_bf16, wqkv, bqkv, wo_g, bo32, cos32, sin_signed)


def rope_cos_sin(position_ids, head_dim, theta=10000.0, dtype=jnp.float32):
    """position_ids: (B, S) int -> cos/sin of shape (B, S, head_dim) (LlamaRotaryEmbedding)."""
    inv_freq = 1.0 / (theta ** (jnp.arange(0, head_dim, 2, dtype=jnp.float32) / head_dim))
    freqs = position_ids.astype(jnp.float32)[..., None] * inv_freq[None, None, :]   # (B,S,hd/2)
    emb = jnp.concatenate([freqs, freqs], axis=-1)                                  # (B,S,hd)
    return jnp.cos(emb).astype(dtype), jnp.sin(emb).astype(dtype)


def reference_llama_attention(x, wq, bq, wk, bk, wv, bv, wo, bo, cos, sin, num_heads):
    """Pure-JAX f32 reference mirroring the PyTorch forward (mask=None, eval)."""
    B, S, H = x.shape
    hd = H // num_heads
    q = x @ wq + bq[0]
    k = x @ wk + bk[0]
    v = x @ wv + bv[0]

    def split(t):  # (B,S,H) -> (B,nH,S,hd)
        return t.reshape(B, S, num_heads, hd).transpose(0, 2, 1, 3)

    q, k, v = split(q), split(k), split(v)
    c = cos[:, None, :, :]
    s = sin[:, None, :, :]

    def rot_half(t):
        return jnp.concatenate([-t[..., hd // 2:], t[..., :hd // 2]], axis=-1)

    q = q * c + rot_half(q) * s
    k = k * c + rot_half(k) * s
    attn = jnp.einsum('bhqd,bhkd->bhqk', q, k) / math.sqrt(hd)
    attn = jax.nn.softmax(attn, axis=-1)
    out = jnp.einsum('bhqk,bhkd->bhqd', attn, v)
    out = out.transpose(0, 2, 1, 3).reshape(B, S, H)
    return out @ wo + bo[0]


if __name__ == "__main__":
    # head_dim = 128 so the RoPE roll is a full lane rotate and the MXU tiles are full;
    # still small overall (x is 0.5 MB, each weight 1 MB).
    B, S, H = 2, 128, 512
    num_heads = 4
    head_dim = H // num_heads

    key = jax.random.PRNGKey(0)
    ks = jax.random.split(key, 10)
    wscale = 1.0 / math.sqrt(H)
    x = jax.random.normal(ks[0], (B, S, H), jnp.float32)
    # weights stored as [H_in, H_out] (nn.Linear weights pre-transposed)
    wq = jax.random.normal(ks[1], (H, H), jnp.float32) * wscale
    wk = jax.random.normal(ks[2], (H, H), jnp.float32) * wscale
    wv = jax.random.normal(ks[3], (H, H), jnp.float32) * wscale
    wo = jax.random.normal(ks[4], (H, H), jnp.float32) * wscale
    bq = jax.random.normal(ks[5], (1, H), jnp.float32) * 0.02
    bk = jax.random.normal(ks[6], (1, H), jnp.float32) * 0.02
    bv = jax.random.normal(ks[7], (1, H), jnp.float32) * 0.02
    bo = jax.random.normal(ks[8], (1, H), jnp.float32) * 0.02

    position_ids = jnp.broadcast_to(jnp.arange(S, dtype=jnp.int32)[None, :], (B, S))
    cos, sin = rope_cos_sin(position_ids, head_dim, theta=10000.0)

    out = llama_attention_pallas(x, wq, bq, wk, bk, wv, bv, wo, bo, cos, sin,
                                 num_heads, q_tile=64, heads_per_step=2)
    out = jax.block_until_ready(out)

    ref = reference_llama_attention(x, wq, bq, wk, bk, wv, bv, wo, bo, cos, sin, num_heads)
    # Tolerance accounts for bf16 MXU operands and the approx softmax reciprocal
    # (softmax math and all accumulations are kept in f32).
    np.testing.assert_allclose(np.asarray(out), np.asarray(ref), rtol=3e-2, atol=3e-2)

    print("KERNEL_OK")
</pallas_src>

<mosaic_0001>
module attributes {stable_mosaic.version = 11 : i64} {
  func.func @_llama_attn_kernel(%arg0: i32, %arg1: i32, %arg2: i32, %arg3: memref<1x128x512xbf16, #tpu.memory_space<vmem>>, %arg4: memref<1x512x768xbf16, #tpu.memory_space<vmem>>, %arg5: memref<1x1x768xf32, #tpu.memory_space<vmem>>, %arg6: memref<1x256x512xbf16, #tpu.memory_space<vmem>>, %arg7: memref<1x512xf32, #tpu.memory_space<vmem>>, %arg8: memref<1x128x128xf32, #tpu.memory_space<vmem>>, %arg9: memref<1x128x128xf32, #tpu.memory_space<vmem>>, %arg10: memref<1x64x512xf32, #tpu.memory_space<vmem>>, %arg11: memref<2x128x512xbf16, #tpu.memory_space<vmem>>, %arg12: memref<64x512xf32, #tpu.memory_space<vmem>>) attributes {dimension_semantics = [#tpu.dimension_semantics<parallel>, #tpu.dimension_semantics<arbitrary>, #tpu.dimension_semantics<arbitrary>], iteration_bounds = array<i64: 2, 2, 2>, scalar_prefetch = 0 : i64, scratch_operands = 2 : i64, tpu.core_type = #tpu.core_type<tc>, window_params = [{transform_indices = @transform_0, window_bounds = array<i64: 1, 128, 512>}, {transform_indices = @transform_1, window_bounds = array<i64: 1, 512, 768>}, {transform_indices = @transform_2, window_bounds = array<i64: 1, 1, 768>}, {transform_indices = @transform_3, window_bounds = array<i64: 1, 256, 512>}, {pipeline_mode = #tpu.pipeline_mode<synchronous>, transform_indices = @transform_4, window_bounds = array<i64: 1, 512>}, {transform_indices = @transform_5, window_bounds = array<i64: 1, 128, 128>}, {transform_indices = @transform_6, window_bounds = array<i64: 1, 128, 128>}, {transform_indices = @transform_7, window_bounds = array<i64: 1, 64, 512>}]} {
    %c64_i32 = arith.constant 64 : i32
    %0 = arith.muli %arg1, %c64_i32 : i32
    %1 = tpu.assume_multiple %0, 64 : i32
    %c0_i32 = arith.constant 0 : i32
    %2 = arith.cmpi eq, %arg1, %c0_i32 : i32
    %3 = arith.extui %2 : i1 to i32
    %c0_i32_0 = arith.constant 0 : i32
    %4 = arith.cmpi ne, %3, %c0_i32_0 : i32
    scf.if %4 {
      %c0_33 = arith.constant 0 : index
      %c0_34 = arith.constant 0 : index
      %c0_35 = arith.constant 0 : index
      %81 = vector.load %arg3[%c0_33, %c0_34, %c0_35] : memref<1x128x512xbf16, #tpu.memory_space<vmem>>, vector<1x128x512xbf16>
      %82 = vector.shape_cast %81 : vector<1x128x512xbf16> to vector<128x512xbf16>
      %c0_36 = arith.constant 0 : index
      %c0_37 = arith.constant 0 : index
      %c256 = arith.constant 256 : index
      %83 = vector.load %arg4[%c0_36, %c0_37, %c256] : memref<1x512x768xbf16, #tpu.memory_space<vmem>>, vector<1x512x512xbf16>
      %84 = vector.shape_cast %83 : vector<1x512x512xbf16> to vector<512x512xbf16>
      %cst_38 = arith.constant dense<0.000000e+00> : vector<128x512xf32>
      %85 = tpu.matmul %82, %84, %cst_38 {dimension_numbers = #tpu.dot_dimension_numbers<[1], [0], [0], [1], [0, 0, 1, 1], [], []>} : vector<128x512xbf16>, vector<512x512xbf16>, vector<128x512xf32> -> vector<128x512xf32>
      %c0_39 = arith.constant 0 : index
      %c0_40 = arith.constant 0 : index
      %c256_41 = arith.constant 256 : index
      %86 = vector.load %arg5[%c0_39, %c0_40, %c256_41] : memref<1x1x768xf32, #tpu.memory_space<vmem>>, vector<1x1x512xf32>
      %87 = vector.shape_cast %86 : vector<1x1x512xf32> to vector<1x512xf32>
      %88 = vector.broadcast %87 : vector<1x512xf32> to vector<128x512xf32>
      %89 = arith.addf %85, %88 : vector<128x512xf32>
      %c0_42 = arith.constant 0 : index
      %c0_43 = arith.constant 0 : index
      %c0_44 = arith.constant 0 : index
      %90 = vector.load %arg8[%c0_42, %c0_43, %c0_44] : memref<1x128x128xf32, #tpu.memory_space<vmem>>, vector<1x128x128xf32>
      %91 = vector.shape_cast %90 : vector<1x128x128xf32> to vector<128x128xf32>
      %c0_45 = arith.constant 0 : index
      %c0_46 = arith.constant 0 : index
      %c0_47 = arith.constant 0 : index
      %92 = vector.load %arg9[%c0_45, %c0_46, %c0_47] : memref<1x128x128xf32, #tpu.memory_space<vmem>>, vector<1x128x128xf32>
      %93 = vector.shape_cast %92 : vector<1x128x128xf32> to vector<128x128xf32>
      %94 = vector.extract_strided_slice %89 {offsets = [0, 0], sizes = [128, 128], strides = [1, 1]} : vector<128x512xf32> to vector<128x128xf32>
      %95 = arith.mulf %94, %91 : vector<128x128xf32>
      %c64_i32_48 = arith.constant 64 : i32
      %96 = tpu.dynamic_rotate %94 by %c64_i32_48 dim 1 : vector<128x128xf32>, i32 -> vector<128x128xf32>
      %97 = arith.mulf %96, %93 : vector<128x128xf32>
      %98 = arith.addf %95, %97 : vector<128x128xf32>
      %99 = vector.extract_strided_slice %89 {offsets = [0, 128], sizes = [128, 128], strides = [1, 1]} : vector<128x512xf32> to vector<128x128xf32>
      %100 = arith.mulf %99, %91 : vector<128x128xf32>
      %c64_i32_49 = arith.constant 64 : i32
      %101 = tpu.dynamic_rotate %99 by %c64_i32_49 dim 1 : vector<128x128xf32>, i32 -> vector<128x128xf32>
      %102 = arith.mulf %101, %93 : vector<128x128xf32>
      %103 = arith.addf %100, %102 : vector<128x128xf32>
      %104 = vector.extract_strided_slice %89 {offsets = [0, 256], sizes = [128, 256], strides = [1, 1]} : vector<128x512xf32> to vector<128x256xf32>
      %105 = tpu.concatenate %98, %103, %104 in 1 : vector<128x128xf32>, vector<128x128xf32>, vector<128x256xf32> -> vector<128x512xf32>
      %106 = arith.truncf %105 : vector<128x512xf32> to vector<128x512xbf16>
      %107 = arith.index_cast %arg2 : i32 to index
      %c0_50 = arith.constant 0 : index
      %c0_51 = arith.constant 0 : index
      %108 = vector.load %arg11[%107, %c0_50, %c0_51] : memref<2x128x512xbf16, #tpu.memory_space<vmem>>, vector<1x128x512xbf16>
      %109 = vector.shape_cast %108 : vector<1x128x512xbf16> to vector<128x512xbf16>
      %110 = vector.shape_cast %106 : vector<128x512xbf16> to vector<1x128x512xbf16>
      tpu.vector_store %arg11[%107, %c0_50, %c0_51], %110 {strides = array<i32>} : memref<2x128x512xbf16, #tpu.memory_space<vmem>>, vector<1x128x512xbf16>,
    } else {
    }
    %c0 = arith.constant 0 : index
    %5 = arith.index_cast %1 : i32 to index
    %c0_1 = arith.constant 0 : index
    %6 = vector.load %arg3[%c0, %5, %c0_1] : memref<1x128x512xbf16, #tpu.memory_space<vmem>>, vector<1x64x512xbf16>
    %7 = vector.shape_cast %6 : vector<1x64x512xbf16> to vector<64x512xbf16>
    %c0_2 = arith.constant 0 : index
    %c0_3 = arith.constant 0 : index
    %c0_4 = arith.constant 0 : index
    %8 = vector.load %arg4[%c0_2, %c0_3, %c0_4] : memref<1x512x768xbf16, #tpu.memory_space<vmem>>, vector<1x512x256xbf16>
    %9 = vector.shape_cast %8 : vector<1x512x256xbf16> to vector<512x256xbf16>
    %cst = arith.constant dense<0.000000e+00> : vector<64x256xf32>
    %10 = tpu.matmul %7, %9, %cst {dimension_numbers = #tpu.dot_dimension_numbers<[1], [0], [0], [1], [0, 0, 1, 1], [], []>} : vector<64x512xbf16>, vector<512x256xbf16>, vector<64x256xf32> -> vector<64x256xf32>
    %c0_5 = arith.constant 0 : index
    %c0_6 = arith.constant 0 : index
    %c0_7 = arith.constant 0 : index
    %11 = vector.load %arg5[%c0_5, %c0_6, %c0_7] : memref<1x1x768xf32, #tpu.memory_space<vmem>>, vector<1x1x256xf32>
    %12 = vector.shape_cast %11 : vector<1x1x256xf32> to vector<1x256xf32>
    %13 = vector.broadcast %12 : vector<1x256xf32> to vector<64x256xf32>
    %14 = arith.addf %10, %13 : vector<64x256xf32>
    %c0_8 = arith.constant 0 : index
    %15 = arith.index_cast %1 : i32 to index
    %c0_9 = arith.constant 0 : index
    %16 = vector.load %arg8[%c0_8, %15, %c0_9] : memref<1x128x128xf32, #tpu.memory_space<vmem>>, vector<1x64x128xf32>
    %17 = vector.shape_cast %16 : vector<1x64x128xf32> to vector<64x128xf32>
    %c0_10 = arith.constant 0 : index
    %18 = arith.index_cast %1 : i32 to index
    %c0_11 = arith.constant 0 : index
    %19 = vector.load %arg9[%c0_10, %18, %c0_11] : memref<1x128x128xf32, #tpu.memory_space<vmem>>, vector<1x64x128xf32>
    %20 = vector.shape_cast %19 : vector<1x64x128xf32> to vector<64x128xf32>
    %21 = arith.index_cast %arg2 : i32 to index
    %c0_12 = arith.constant 0 : index
    %c0_13 = arith.constant 0 : index
    %22 = vector.load %arg11[%21, %c0_12, %c0_13] : memref<2x128x512xbf16, #tpu.memory_space<vmem>>, vector<1x128x512xbf16>
    %23 = vector.shape_cast %22 : vector<1x128x512xbf16> to vector<128x512xbf16>
    %24 = vector.extract_strided_slice %14 {offsets = [0, 0], sizes = [64, 128], strides = [1, 1]} : vector<64x256xf32> to vector<64x128xf32>
    %25 = arith.mulf %24, %17 : vector<64x128xf32>
    %c64_i32_14 = arith.constant 64 : i32
    %26 = tpu.dynamic_rotate %24 by %c64_i32_14 dim 1 : vector<64x128xf32>, i32 -> vector<64x128xf32>
    %27 = arith.mulf %26, %20 : vector<64x128xf32>
    %28 = arith.addf %25, %27 : vector<64x128xf32>
    %29 = arith.truncf %28 : vector<64x128xf32> to vector<64x128xbf16>
    %30 = vector.extract_strided_slice %23 {offsets = [0, 0], sizes = [128, 128], strides = [1, 1]} : vector<128x512xbf16> to vector<128x128xbf16>
    %31 = vector.extract_strided_slice %23 {offsets = [0, 256], sizes = [128, 128], strides = [1, 1]} : vector<128x512xbf16> to vector<128x128xbf16>
    %cst_15 = arith.constant dense<0.000000e+00> : vector<64x128xf32>
    %32 = tpu.matmul %29, %30, %cst_15 {dimension_numbers = #tpu.dot_dimension_numbers<[1], [1], [0], [0], [0, 0, 1, 0], [], []>} : vector<64x128xbf16>, vector<128x128xbf16>, vector<64x128xf32> -> vector<64x128xf32>
    %cst_16 = arith.constant dense<0xFF800000> : vector<64xf32>
    %33 = vector.multi_reduction <maximumf>, %32, %cst_16 [1] : vector<64x128xf32> to vector<64xf32>
    %34 = vector.shape_cast %33 : vector<64xf32> to vector<64x1xf32>
    %35 = vector.broadcast %34 : vector<64x1xf32> to vector<64x128xf32>
    %36 = arith.subf %32, %35 : vector<64x128xf32>
    %37 = math.exp %36 : vector<64x128xf32>
    %cst_17 = arith.constant dense<0.000000e+00> : vector<64xf32>
    %38 = vector.multi_reduction <add>, %37, %cst_17 [1] : vector<64x128xf32> to vector<64xf32>
    %39 = vector.shape_cast %38 : vector<64xf32> to vector<64x1xf32>
    %40 = arith.truncf %37 : vector<64x128xf32> to vector<64x128xbf16>
    %cst_18 = arith.constant dense<0.000000e+00> : vector<64x128xf32>
    %41 = tpu.matmul %40, %31, %cst_18 {dimension_numbers = #tpu.dot_dimension_numbers<[1], [0], [0], [1], [0, 0, 1, 1], [], []>} : vector<64x128xbf16>, vector<128x128xbf16>, vector<64x128xf32> -> vector<64x128xf32>
    %42 = tpu.reciprocal %39 {approx = true} : vector<64x1xf32> -> vector<64x1xf32>
    %43 = vector.broadcast %42 : vector<64x1xf32> to vector<64x128xf32>
    %44 = arith.mulf %41, %43 : vector<64x128xf32>
    %45 = arith.truncf %44 : vector<64x128xf32> to vector<64x128xbf16>
    %46 = vector.extract_strided_slice %14 {offsets = [0, 128], sizes = [64, 128], strides = [1, 1]} : vector<64x256xf32> to vector<64x128xf32>
    %47 = arith.mulf %46, %17 : vector<64x128xf32>
    %c64_i32_19 = arith.constant 64 : i32
    %48 = tpu.dynamic_rotate %46 by %c64_i32_19 dim 1 : vector<64x128xf32>, i32 -> vector<64x128xf32>
    %49 = arith.mulf %48, %20 : vector<64x128xf32>
    %50 = arith.addf %47, %49 : vector<64x128xf32>
    %51 = arith.truncf %50 : vector<64x128xf32> to vector<64x128xbf16>
    %52 = vector.extract_strided_slice %23 {offsets = [0, 128], sizes = [128, 128], strides = [1, 1]} : vector<128x512xbf16> to vector<128x128xbf16>
    %53 = vector.extract_strided_slice %23 {offsets = [0, 384], sizes = [128, 128], strides = [1, 1]} : vector<128x512xbf16> to vector<128x128xbf16>
    %cst_20 = arith.constant dense<0.000000e+00> : vector<64x128xf32>
    %54 = tpu.matmul %51, %52, %cst_20 {dimension_numbers = #tpu.dot_dimension_numbers<[1], [1], [0], [0], [0, 0, 1, 0], [], []>} : vector<64x128xbf16>, vector<128x128xbf16>, vector<64x128xf32> -> vector<64x128xf32>
    %cst_21 = arith.constant dense<0xFF800000> : vector<64xf32>
    %55 = vector.multi_reduction <maximumf>, %54, %cst_21 [1] : vector<64x128xf32> to vector<64xf32>
    %56 = vector.shape_cast %55 : vector<64xf32> to vector<64x1xf32>
    %57 = vector.broadcast %56 : vector<64x1xf32> to vector<64x128xf32>
    %58 = arith.subf %54, %57 : vector<64x128xf32>
    %59 = math.exp %58 : vector<64x128xf32>
    %cst_22 = arith.constant dense<0.000000e+00> : vector<64xf32>
    %60 = vector.multi_reduction <add>, %59, %cst_22 [1] : vector<64x128xf32> to vector<64xf32>
    %61 = vector.shape_cast %60 : vector<64xf32> to vector<64x1xf32>
    %62 = arith.truncf %59 : vector<64x128xf32> to vector<64x128xbf16>
    %cst_23 = arith.constant dense<0.000000e+00> : vector<64x128xf32>
    %63 = tpu.matmul %62, %53, %cst_23 {dimension_numbers = #tpu.dot_dimension_numbers<[1], [0], [0], [1], [0, 0, 1, 1], [], []>} : vector<64x128xbf16>, vector<128x128xbf16>, vector<64x128xf32> -> vector<64x128xf32>
    %64 = tpu.reciprocal %61 {approx = true} : vector<64x1xf32> -> vector<64x1xf32>
    %65 = vector.broadcast %64 : vector<64x1xf32> to vector<64x128xf32>
    %66 = arith.mulf %63, %65 : vector<64x128xf32>
    %67 = arith.truncf %66 : vector<64x128xf32> to vector<64x128xbf16>
    %68 = tpu.concatenate %45, %67 in 1 : vector<64x128xbf16>, vector<64x128xbf16> -> vector<64x256xbf16>
    %c0_24 = arith.constant 0 : index
    %c0_25 = arith.constant 0 : index
    %c0_26 = arith.constant 0 : index
    %69 = vector.load %arg6[%c0_24, %c0_25, %c0_26] : memref<1x256x512xbf16, #tpu.memory_space<vmem>>, vector<1x256x512xbf16>
    %70 = vector.shape_cast %69 : vector<1x256x512xbf16> to vector<256x512xbf16>
    %cst_27 = arith.constant dense<0.000000e+00> : vector<64x512xf32>
    %71 = tpu.matmul %68, %70, %cst_27 {dimension_numbers = #tpu.dot_dimension_numbers<[1], [0], [0], [1], [0, 0, 1, 1], [], []>} : vector<64x256xbf16>, vector<256x512xbf16>, vector<64x512xf32> -> vector<64x512xf32>
    %c0_i32_28 = arith.constant 0 : i32
    %72 = arith.cmpi eq, %arg2, %c0_i32_28 : i32
    %73 = arith.extui %72 : i1 to i32
    %c0_i32_29 = arith.constant 0 : i32
    %74 = arith.cmpi ne, %73, %c0_i32_29 : i32
    scf.if %74 {
      %c0_33 = arith.constant 0 : index
      %c0_34 = arith.constant 0 : index
      %81 = vector.load %arg12[%c0_33, %c0_34] : memref<64x512xf32, #tpu.memory_space<vmem>>, vector<64x512xf32>
      tpu.vector_store %arg12[%c0_33, %c0_34], %71 {strides = array<i32>} : memref<64x512xf32, #tpu.memory_space<vmem>>, vector<64x512xf32>,
    } else {
    }
    %c0_i32_30 = arith.constant 0 : i32
    %75 = arith.cmpi sgt, %arg2, %c0_i32_30 : i32
    %76 = arith.extui %75 : i1 to i32
    %c0_i32_31 = arith.constant 0 : i32
    %77 = arith.cmpi ne, %76, %c0_i32_31 : i32
    scf.if %77 {
      %c0_33 = arith.constant 0 : index
      %c0_34 = arith.constant 0 : index
      %81 = vector.load %arg12[%c0_33, %c0_34] : memref<64x512xf32, #tpu.memory_space<vmem>>, vector<64x512xf32>
      %82 = arith.addf %81, %71 : vector<64x512xf32>
      %c0_35 = arith.constant 0 : index
      %c0_36 = arith.constant 0 : index
      %83 = vector.load %arg12[%c0_35, %c0_36] : memref<64x512xf32, #tpu.memory_space<vmem>>, vector<64x512xf32>
      tpu.vector_store %arg12[%c0_35, %c0_36], %82 {strides = array<i32>} : memref<64x512xf32, #tpu.memory_space<vmem>>, vector<64x512xf32>,
    } else {
    }
    %c1_i32 = arith.constant 1 : i32
    %78 = arith.cmpi eq, %arg2, %c1_i32 : i32
    %79 = arith.extui %78 : i1 to i32
    %c0_i32_32 = arith.constant 0 : i32
    %80 = arith.cmpi ne, %79, %c0_i32_32 : i32
    scf.if %80 {
      %c0_33 = arith.constant 0 : index
      %c0_34 = arith.constant 0 : index
      %81 = vector.load %arg12[%c0_33, %c0_34] : memref<64x512xf32, #tpu.memory_space<vmem>>, vector<64x512xf32>
      %c0_35 = arith.constant 0 : index
      %c0_36 = arith.constant 0 : index
      %82 = vector.load %arg7[%c0_35, %c0_36] : memref<1x512xf32, #tpu.memory_space<vmem>>, vector<1x512xf32>
      %83 = vector.broadcast %82 : vector<1x512xf32> to vector<64x512xf32>
      %84 = arith.addf %81, %83 : vector<64x512xf32>
      %c0_37 = arith.constant 0 : index
      %c0_38 = arith.constant 0 : index
      %c0_39 = arith.constant 0 : index
      %85 = vector.load %arg10[%c0_37, %c0_38, %c0_39] : memref<1x64x512xf32, #tpu.memory_space<vmem>>, vector<1x64x512xf32>
      %86 = vector.shape_cast %85 : vector<1x64x512xf32> to vector<64x512xf32>
      %87 = vector.shape_cast %84 : vector<64x512xf32> to vector<1x64x512xf32>
      tpu.vector_store %arg10[%c0_37, %c0_38, %c0_39], %87 {strides = array<i32>} : memref<1x64x512xf32, #tpu.memory_space<vmem>>, vector<1x64x512xf32>,
    } else {
    }
    return
  }
  func.func @transform_0(%arg0: i32, %arg1: i32, %arg2: i32) -> (i32, i32, i32) {
    %c0_i32 = arith.constant 0 : i32
    %c0_i32_0 = arith.constant 0 : i32
    %c0_i32_1 = arith.constant 0 : i32
    return %arg0, %c0_i32, %c0_i32_0 : i32, i32, i32
  }
  func.func @transform_1(%arg0: i32, %arg1: i32, %arg2: i32) -> (i32, i32, i32) {
    %c0_i32 = arith.constant 0 : i32
    %c0_i32_0 = arith.constant 0 : i32
    %c0_i32_1 = arith.constant 0 : i32
    return %arg2, %c0_i32, %c0_i32_0 : i32, i32, i32
  }
  func.func @transform_2(%arg0: i32, %arg1: i32, %arg2: i32) -> (i32, i32, i32) {
    %c0_i32 = arith.constant 0 : i32
    %c0_i32_0 = arith.constant 0 : i32
    %c0_i32_1 = arith.constant 0 : i32
    return %arg2, %c0_i32, %c0_i32_0 : i32, i32, i32
  }
  func.func @transform_3(%arg0: i32, %arg1: i32, %arg2: i32) -> (i32, i32, i32) {
    %c0_i32 = arith.constant 0 : i32
    %c0_i32_0 = arith.constant 0 : i32
    %c0_i32_1 = arith.constant 0 : i32
    return %arg2, %c0_i32, %c0_i32_0 : i32, i32, i32
  }
  func.func @transform_4(%arg0: i32, %arg1: i32, %arg2: i32) -> (i32, i32) {
    %c0_i32 = arith.constant 0 : i32
    %c0_i32_0 = arith.constant 0 : i32
    %c0_i32_1 = arith.constant 0 : i32
    return %c0_i32, %c0_i32_0 : i32, i32
  }
  func.func @transform_5(%arg0: i32, %arg1: i32, %arg2: i32) -> (i32, i32, i32) {
    %c0_i32 = arith.constant 0 : i32
    %c0_i32_0 = arith.constant 0 : i32
    %c0_i32_1 = arith.constant 0 : i32
    return %arg0, %c0_i32, %c0_i32_0 : i32, i32, i32
  }
  func.func @transform_6(%arg0: i32, %arg1: i32, %arg2: i32) -> (i32, i32, i32) {
    %c0_i32 = arith.constant 0 : i32
    %c0_i32_0 = arith.constant 0 : i32
    %c0_i32_1 = arith.constant 0 : i32
    return %arg0, %c0_i32, %c0_i32_0 : i32, i32, i32
  }
  func.func @transform_7(%arg0: i32, %arg1: i32, %arg2: i32) -> (i32, i32, i32) {
    %c0_i32 = arith.constant 0 : i32
    %c0_i32_0 = arith.constant 0 : i32
    return %arg0, %arg1, %c0_i32 : i32, i32, i32
  }
}

</mosaic_0001>

<llo_original>
// kernel: tpu_custom_call.1
$region0: #{tpu_custom_call.1}
  #allocation0 [shape = 'u32[]', space=smem, size = 0x4, offset = 0x4, fixed_abs, tag = 'smem constant byte address 0x4 - core index']
  #allocation1 [shape = 'u32[144,128]{1,0:T(1,128)}', space=vmem, size = 0x12000, scoped, tag = 'internal scratch']
  #allocation2 [shape = 'bf16[2,128,512]{2,1,0:T(16,128)(2,1)}', space=vmem, size = 0x40000, scoped, tag = 'scratch operand']
  #allocation3 [shape = 'f32[64,512]{1,0:T(8,128)}', space=vmem, size = 0x20000, scoped, tag = 'scratch operand']
  %s0 = inlined_call_operand.hbm [shape: bf16[2,128,512], index: 0, kind: input, shape index: {}]
  %s1 = inlined_call_operand.hbm [shape: bf16[2,512,768], index: 1, kind: input, shape index: {}]
  %s2 = inlined_call_operand.hbm [shape: f32[2,1,768], index: 2, kind: input, shape index: {}]
  %s3 = inlined_call_operand.hbm [shape: bf16[2,256,512], index: 3, kind: input, shape index: {}]
  %s4 = inlined_call_operand.hbm [shape: f32[1,512], index: 4, kind: input, shape index: {}]
  %s5 = inlined_call_operand.hbm [shape: f32[2,128,128], index: 5, kind: input, shape index: {}]
  %s6 = inlined_call_operand.hbm [shape: f32[2,128,128], index: 6, kind: input, shape index: {}]
  %s7 = inlined_call_operand.hbm [shape: f32[2,128,512], index: 7, kind: output, shape index: {}]
  %s8 = sld [smem:[#allocation0]]
  $region105: #{tpu_custom_call.1} parent=0
    _
  %s10 = ssub.s32 1, %s8
  %s11 = scalar_select 0, %s10, %s8
  $region1: #{tpu_custom_call.1} parent=0
    #allocation4 [shape = 'u8[262144]{0}', space=vmem, size = 0x40000, scoped, tag = 'input window, operand 0']
    #allocation5 [shape = 's32[2]{0}', space=sflag, size = 0x8, scoped, tag = 'scoped memory for tpu_custom_call.1']
    #allocation6 [shape = 's32[2]{0}', space=sflag, size = 0x8, scoped, tag = 'scoped memory for tpu_custom_call.1']
    #allocation7 [shape = 'u8[1572864]{0}', space=vmem, size = 0x180000, scoped, tag = 'input window, operand 1']
    #allocation8 [shape = 's32[2]{0}', space=sflag, size = 0x8, scoped, tag = 'scoped memory for tpu_custom_call.1']
    #allocation9 [shape = 'u8[6144]{0}', space=vmem, size = 0x1800, scoped, tag = 'input window, operand 2']
    #allocation10 [shape = 'u8[524288]{0}', space=vmem, size = 0x80000, scoped, tag = 'input window, operand 3']
    #allocation11 [shape = 's32[2]{0}', space=sflag, size = 0x8, scoped, tag = 'scoped memory for tpu_custom_call.1']
    #allocation12 [shape = 'u8[2048]{0}', space=vmem, size = 0x800, scoped, tag = 'input window, operand 4, single buffered']
    #allocation13 [shape = 'u8[131072]{0}', space=vmem, size = 0x20000, scoped, tag = 'input window, operand 5']
    #allocation14 [shape = 's32[2]{0}', space=sflag, size = 0x8, scoped, tag = 'scoped memory for tpu_custom_call.1']
    #allocation15 [shape = 'u8[131072]{0}', space=vmem, size = 0x20000, scoped, tag = 'input window, operand 6']
    #allocation16 [shape = 'u8[262144]{0}', space=vmem, size = 0x40000, scoped, tag = 'output window, operand 0']
    %12 = vsyncpa [#allocation5], 0
    %s13 = scalar_lea.sflag [#allocation5], 1
    %14 = vsyncpa %s13, 0
    %15 = vsyncpa [#allocation8], 0
    %s16 = scalar_lea.sflag [#allocation8], 1
    %17 = vsyncpa %s16, 0
    %18 = vsyncpa [#allocation11], 0
    %s19 = scalar_lea.sflag [#allocation11], 1
    %20 = vsyncpa %s19, 0
    %21 = vsyncpa [#allocation14], 0
    %s22 = scalar_lea.sflag [#allocation14], 1
    %23 = vsyncpa %s22, 0
    %24 = vsyncpa [#allocation6], 0
    %s25 = scalar_lea.sflag [#allocation6], 1
    %26 = vsyncpa %s25, 0
    loop: start=0, step=1, limit=10
    $region2: #{tpu_custom_call.1} parent=1 // loop_pre_header
      _
    $region3: #{tpu_custom_call.1} parent=1 // loop_header
      %s28 = sphi 0, %s32
      %p29 = scmp.ge.s32.totalorder %s28, 10
      %s35 = sphi 0, %s54
      %s36 = sphi 0, %s50
      %s37 = sphi 0, %s46
      %s38 = sphi 0, %s35
      %s39 = sphi 0, %s36
      %s40 = sphi 0, %s37
      %s41 = sphi 0, %s38
      %s42 = sphi 0, %s39
      %s43 = sphi 0, %s40
      %s57 = sphi 0, %s59
      %s60 = sphi 0, %s57
      %s61 = sphi 0, %s60
      %s77 = sphi 0, %s61
      %s83 = sphi 0, %s85
      %s86 = sphi 0, %s83
      %s87 = sphi 0, %s86
      %s103 = sphi 0, %s87
      %s109 = sphi 0, %s111
      %s112 = sphi 0, %s109
      %s113 = sphi 0, %s112
      %s129 = sphi 0, %s113
      %s135 = sphi 0, %s137
      %s138 = sphi 0, %s135
      %s139 = sphi 0, %s138
      %s155 = sphi 0, %s139
      %s159 = sphi 0, %s159
      %s161 = sphi 0, %s159
      %s162 = sphi 0, %s161
      %s176 = sphi 0, %s162
      %s182 = sphi 0, %s184
      %s185 = sphi 0, %s182
      %s186 = sphi 0, %s185
      %s202 = sphi 0, %s186
      %s208 = sphi 0, %s210
      %s211 = sphi 0, %s208
      %s212 = sphi 0, %s211
      %s228 = sphi 0, %s212
      %s236 = sphi 0, %s238
      %s239 = sphi 0, %s236
      %s240 = sphi 0, %s239
      %s256 = sphi 0, %s240
    $region4: #{tpu_custom_call.1} parent=1 // loop_header_branch
      %31 = sbr.rel (%p29) target = $region8
    $region5: #{tpu_custom_call.1} parent=1 // loop_body
      %s33 = ssub.s32 %s28, 1
      %s34 = ssub.s32 %s28, 2
      %s44 = sadd.s32 1, %s37
      %p45 = scmp.ge.s32.totalorder %s44, 2
      %s46 = scalar_select %p45, 0, %s44
      %s47 = sadd.s32 1, %s36
      %s48 = scalar_select %p45, %s47, %s36
      %p49 = scmp.ge.s32.totalorder %s48, 2
      %s50 = scalar_select %p49, 0, %s48
      %s51 = sadd.s32 1, %s35
      %s52 = scalar_select %p49, %s51, %s35
      %p53 = scmp.ge.s32.totalorder %s52, 2
      %s54 = scalar_select %p53, 0, %s52
      %s55 = ssub.s32 %s35, %s54
      %p56 = scmp.eq.s32.totalorder %s55, 0
      %s58 = sadd.s32 %s57, 1
      %s59 = scalar_select %p56, %s57, %s58
      %p62 = pneg %p56
      %p63 = scmp.eq.s32.totalorder %s28, 7
      %p64 = por %p62, %p63
      %p65 = scmp.ne.s32.totalorder %s57, %s60
      %p66 = scmp.eq.s32.totalorder %s28, 0
      %p67 = por %p65, %p66
      %p68 = scmp.ne.s32.totalorder %s57, %s60
      %p69 = scmp.eq.s32.totalorder %s33, 7
      %p70 = por %p68, %p69
      %p71 = scmp.ne.s32.totalorder %s60, %s61
      %p72 = scmp.eq.s32.totalorder %s33, 0
      %p73 = por %p71, %p72
      %p74 = scmp.ne.s32.totalorder %s60, %s61
      %p75 = scmp.eq.s32.totalorder %s34, 7
      %p76 = por %p74, %p75
      %p78 = scmp.ne.s32.totalorder %s61, %s77
      %p79 = scmp.eq.s32.totalorder %s34, 0
      %p80 = por %p78, %p79
      %s81 = ssub.s32 %s37, %s46
      %p82 = scmp.eq.s32.totalorder %s81, 0
      %s84 = sadd.s32 %s83, 1
      %s85 = scalar_select %p82, %s83, %s84
      %p88 = pneg %p82
      %p89 = scmp.eq.s32.totalorder %s28, 7
      %p90 = por %p88, %p89
      %p91 = scmp.ne.s32.totalorder %s83, %s86
      %p92 = scmp.eq.s32.totalorder %s28, 0
      %p93 = por %p91, %p92
      %p94 = scmp.ne.s32.totalorder %s83, %s86
      %p95 = scmp.eq.s32.totalorder %s33, 7
      %p96 = por %p94, %p95
      %p97 = scmp.ne.s32.totalorder %s86, %s87
      %p98 = scmp.eq.s32.totalorder %s33, 0
      %p99 = por %p97, %p98
      %p100 = scmp.ne.s32.totalorder %s86, %s87
      %p101 = scmp.eq.s32.totalorder %s34, 7
      %p102 = por %p100, %p101
      %p104 = scmp.ne.s32.totalorder %s87, %s103
      %p105 = scmp.eq.s32.totalorder %s34, 0
      %p106 = por %p104, %p105
      %s107 = ssub.s32 %s37, %s46
      %p108 = scmp.eq.s32.totalorder %s107, 0
      %s110 = sadd.s32 %s109, 1
      %s111 = scalar_select %p108, %s109, %s110
      %p114 = pneg %p108
      %p115 = scmp.eq.s32.totalorder %s28, 7
      %p116 = por %p114, %p115
      %p117 = scmp.ne.s32.totalorder %s109, %s112
      %p118 = scmp.eq.s32.totalorder %s28, 0
      %p119 = por %p117, %p118
      %p120 = scmp.ne.s32.totalorder %s109, %s112
      %p121 = scmp.eq.s32.totalorder %s33, 7
      %p122 = por %p120, %p121
      %p123 = scmp.ne.s32.totalorder %s112, %s113
      %p124 = scmp.eq.s32.totalorder %s33, 0
      %p125 = por %p123, %p124
      %p126 = scmp.ne.s32.totalorder %s112, %s113
      %p127 = scmp.eq.s32.totalorder %s34, 7
      %p128 = por %p126, %p127
      %p130 = scmp.ne.s32.totalorder %s113, %s129
      %p131 = scmp.eq.s32.totalorder %s34, 0
      %p132 = por %p130, %p131
      %s133 = ssub.s32 %s37, %s46
      %p134 = scmp.eq.s32.totalorder %s133, 0
      %s136 = sadd.s32 %s135, 1
      %s137 = scalar_select %p134, %s135, %s136
      %p140 = pneg %p134
      %p141 = scmp.eq.s32.totalorder %s28, 7
      %p142 = por %p140, %p141
      %p143 = scmp.ne.s32.totalorder %s135, %s138
      %p144 = scmp.eq.s32.totalorder %s28, 0
      %p145 = por %p143, %p144
      %p146 = scmp.ne.s32.totalorder %s135, %s138
      %p147 = scmp.eq.s32.totalorder %s33, 7
      %p148 = por %p146, %p147
      %p149 = scmp.ne.s32.totalorder %s138, %s139
      %p150 = scmp.eq.s32.totalorder %s33, 0
      %p151 = por %p149, %p150
      %p152 = scmp.ne.s32.totalorder %s138, %s139
      %p153 = scmp.eq.s32.totalorder %s34, 7
      %p154 = por %p152, %p153
      %p156 = scmp.ne.s32.totalorder %s139, %s155
      %p157 = scmp.eq.s32.totalorder %s34, 0
      %p158 = por %p156, %p157
      %s160 = sadd.s32 %s159, 1
      %p163 = scmp.eq.s32.totalorder %s28, 7
      %p164 = scmp.ne.s32.totalorder %s159, %s161
      %p165 = scmp.eq.s32.totalorder %s28, 0
      %p166 = por %p164, %p165
      %p167 = scmp.ne.s32.totalorder %s159, %s161
      %p168 = scmp.eq.s32.totalorder %s33, 7
      %p169 = por %p167, %p168
      %p170 = scmp.ne.s32.totalorder %s161, %s162
      %p171 = scmp.eq.s32.totalorder %s33, 0
      %p172 = por %p170, %p171
      %p173 = scmp.ne.s32.totalorder %s161, %s162
      %p174 = scmp.eq.s32.totalorder %s34, 7
      %p175 = por %p173, %p174
      %p177 = scmp.ne.s32.totalorder %s162, %s176
      %p178 = scmp.eq.s32.totalorder %s34, 0
      %p179 = por %p177, %p178
      %s180 = ssub.s32 %s35, %s54
      %p181 = scmp.eq.s32.totalorder %s180, 0
      %s183 = sadd.s32 %s182, 1
      %s184 = scalar_select %p181, %s182, %s183
      %p187 = pneg %p181
      %p188 = scmp.eq.s32.totalorder %s28, 7
      %p189 = por %p187, %p188
      %p190 = scmp.ne.s32.totalorder %s182, %s185
      %p191 = scmp.eq.s32.totalorder %s28, 0
      %p192 = por %p190, %p191
      %p193 = scmp.ne.s32.totalorder %s182, %s185
      %p194 = scmp.eq.s32.totalorder %s33, 7
      %p195 = por %p193, %p194
      %p196 = scmp.ne.s32.totalorder %s185, %s186
      %p197 = scmp.eq.s32.totalorder %s33, 0
      %p198 = por %p196, %p197
      %p199 = scmp.ne.s32.totalorder %s185, %s186
      %p200 = scmp.eq.s32.totalorder %s34, 7
      %p201 = por %p199, %p200
      %p203 = scmp.ne.s32.totalorder %s186, %s202
      %p204 = scmp.eq.s32.totalorder %s34, 0
      %p205 = por %p203, %p204
      %s206 = ssub.s32 %s35, %s54
      %p207 = scmp.eq.s32.totalorder %s206, 0
      %s209 = sadd.s32 %s208, 1
      %s210 = scalar_select %p207, %s208, %s209
      %p213 = pneg %p207
      %p214 = scmp.eq.s32.totalorder %s28, 7
      %p215 = por %p213, %p214
      %p216 = scmp.ne.s32.totalorder %s208, %s211
      %p217 = scmp.eq.s32.totalorder %s28, 0
      %p218 = por %p216, %p217
      %p219 = scmp.ne.s32.totalorder %s208, %s211
      %p220 = scmp.eq.s32.totalorder %s33, 7
      %p221 = por %p219, %p220
      %p222 = scmp.ne.s32.totalorder %s211, %s212
      %p223 = scmp.eq.s32.totalorder %s33, 0
      %p224 = por %p222, %p223
      %p225 = scmp.ne.s32.totalorder %s211, %s212
      %p226 = scmp.eq.s32.totalorder %s34, 7
      %p227 = por %p225, %p226
      %p229 = scmp.ne.s32.totalorder %s212, %s228
      %p230 = scmp.eq.s32.totalorder %s34, 0
      %p231 = por %p229, %p230
      %s232 = ssub.s32 %s35, %s54
      %s233 = ssub.s32 %s36, %s50
      %s234 = sor.u32 %s232, %s233
      %p235 = scmp.eq.s32.totalorder %s234, 0
      %s237 = sadd.s32 %s236, 1
      %s238 = scalar_select %p235, %s236, %s237
      %p241 = pneg %p235
      %p242 = scmp.eq.s32.totalorder %s28, 7
      %p243 = por %p241, %p242
      %p244 = scmp.ne.s32.totalorder %s236, %s239
      %p245 = scmp.eq.s32.totalorder %s28, 0
      %p246 = por %p244, %p245
      %p247 = scmp.ne.s32.totalorder %s236, %s239
      %p248 = scmp.eq.s32.totalorder %s33, 7
      %p249 = por %p247, %p248
      %p250 = scmp.ne.s32.totalorder %s239, %s240
      %p251 = scmp.eq.s32.totalorder %s33, 0
      %p252 = por %p250, %p251
      %p253 = scmp.ne.s32.totalorder %s239, %s240
      %p254 = scmp.eq.s32.totalorder %s34, 7
      %p255 = por %p253, %p254
      %p257 = scmp.ne.s32.totalorder %s240, %s256
      %p258 = scmp.eq.s32.totalorder %s34, 0
      %p259 = por %p257, %p258
      %p260 = scmp.le.s32.totalorder 1, %s28
      %p261 = scmp.lt.s32.totalorder %s28, 9
      %p262 = pnand %p260, %p261
      %p263 = pneg %p262
      // Predicated region
      $region9: #{tpu_custom_call.1} parent=5 // pred_check
        _
      $region10: #{tpu_custom_call.1} parent=5 // pred_check_branch
        %265 = sbr.rel (%p262) target = $region12
      $region11: #{tpu_custom_call.1} parent=5 // pred_region
        %s266 = ssub.s32 %s28, 1
        // Predicated region
        $region13: #{tpu_custom_call.1} parent=11 // pred_check
          %p267 = pneg %p172
        $region14: #{tpu_custom_call.1} parent=11 // pred_check_branch
          %269 = sbr.rel (%p267) target = $region16
        $region15: #{tpu_custom_call.1} parent=11 // pred_region
          %s271 = ssub.s32 64, 64
          %272 = vsyncadd [#allocation11], %s271
          %s274 = sshll.u32 [#allocation12], 4
          %s275 = int_to_ptr.vmem [resolvable:$true] %s274
          %277 = dma.hbm_to_vmem [thread:$0]  %s4, 64, %s275, [#allocation11]
        $region16: #{tpu_custom_call.1} parent=11 // pred_fallthru
          _
      $region12: #{tpu_custom_call.1} parent=5 // pred_fallthru
        _
      %p278 = scmp.lt.s32.totalorder %s28, 8
      // Predicated region
      $region17: #{tpu_custom_call.1} parent=5 // pred_check
        %p279 = pneg %p278
      $region18: #{tpu_custom_call.1} parent=5 // pred_check_branch
        %281 = sbr.rel (%p279) target = $region20
      $region19: #{tpu_custom_call.1} parent=5 // pred_region
        // Predicated region
        $region21: #{tpu_custom_call.1} parent=19 // pred_check
          %p282 = pneg %p67
        $region22: #{tpu_custom_call.1} parent=19 // pred_check_branch
          %284 = sbr.rel (%p282) target = $region24
        $region23: #{tpu_custom_call.1} parent=19 // pred_region
          %s285 = sand.u32 %s57, 1
          %s286 = scalar_lea.sflag [#allocation5], %s285
          %s287 = sand.u32 %s57, 1
          %s288 = smul.addr %s287, 256
          %s289 = scalar_lea.vmem [#allocation4], %s288
          %s291 = ssub.s32 4096, 4096
          %292 = vsyncadd %s286, %s291
          %s293 = smul.addr %s35, 64
          %s294 = smul.addr %s293, 64
          %s295 = scalar_lea.hbm %s0, %s294
          %s296 = sshll.u32 %s289, 4
          %s297 = int_to_ptr.vmem [resolvable:$true] %s296
          %302 = dma.hbm_to_vmem [thread:$0]  %s295, 4096, %s297, %s286, 256, 256, 16
        $region24: #{tpu_custom_call.1} parent=19 // pred_fallthru
          _
        // Predicated region
        $region25: #{tpu_custom_call.1} parent=19 // pred_check
          %p303 = pneg %p93
        $region26: #{tpu_custom_call.1} parent=19 // pred_check_branch
          %305 = sbr.rel (%p303) target = $region28
        $region27: #{tpu_custom_call.1} parent=19 // pred_region
          %s306 = sand.u32 %s28, 1
          %s307 = scalar_lea.sflag [#allocation8], %s306
          %s308 = sand.u32 %s83, 1
          %s309 = smul.addr %s308, 1536
          %s310 = scalar_lea.vmem [#allocation7], %s309
          %s312 = ssub.s32 24576, 24576
          %313 = vsyncadd %s307, %s312
          %s314 = smul.addr %s37, 384
          %s315 = smul.addr %s314, 64
          %s316 = scalar_lea.hbm %s1, %s315
          %s317 = sshll.u32 %s310, 4
          %s318 = int_to_ptr.vmem [resolvable:$true] %s317
          %323 = dma.hbm_to_vmem [thread:$0]  %s316, 24576, %s318, %s307, 384, 384, 24
        $region28: #{tpu_custom_call.1} parent=19 // pred_fallthru
          _
        // Predicated region
        $region29: #{tpu_custom_call.1} parent=19 // pred_check
          %p324 = pneg %p119
        $region30: #{tpu_custom_call.1} parent=19 // pred_check_branch
          %326 = sbr.rel (%p324) target = $region32
        $region31: #{tpu_custom_call.1} parent=19 // pred_region
          %s327 = sand.u32 %s28, 1
          %s328 = scalar_lea.sflag [#allocation8], %s327
          %s329 = sand.u32 %s109, 1
          %s330 = smul.addr %s329, 6
          %s331 = scalar_lea.vmem [#allocation9], %s330
          %s333 = ssub.s32 96, 96
          %334 = vsyncadd %s328, %s333
          %s335 = smul.addr %s37, 6
          %s336 = smul.addr %s335, 16
          %s337 = scalar_lea.hbm %s2, %s336
          %s339 = sshll.u32 %s331, 4
          %s340 = int_to_ptr.vmem [resolvable:$true] %s339
          %342 = dma.hbm_to_vmem [thread:$0]  %s337, 96, %s340, %s328
        $region32: #{tpu_custom_call.1} parent=19 // pred_fallthru
          _
        // Predicated region
        $region33: #{tpu_custom_call.1} parent=19 // pred_check
          %p343 = pneg %p145
        $region34: #{tpu_custom_call.1} parent=19 // pred_check_branch
          %345 = sbr.rel (%p343) target = $region36
        $region35: #{tpu_custom_call.1} parent=19 // pred_region
          %s346 = sand.u32 %s28, 1
          %s347 = scalar_lea.sflag [#allocation11], %s346
          %s348 = sand.u32 %s135, 1
          %s349 = smul.addr %s348, 512
          %s350 = scalar_lea.vmem [#allocation10], %s349
          %s352 = ssub.s32 8192, 8192
          %353 = vsyncadd %s347, %s352
          %s354 = smul.addr %s37, 128
          %s355 = smul.addr %s354, 64
          %s356 = scalar_lea.hbm %s3, %s355
          %s357 = sshll.u32 %s350, 4
          %s358 = int_to_ptr.vmem [resolvable:$true] %s357
          %363 = dma.hbm_to_vmem [thread:$0]  %s356, 8192, %s358, %s347, 256, 256, 16
        $region36: #{tpu_custom_call.1} parent=19 // pred_fallthru
          _
        // Predicated region
        $region37: #{tpu_custom_call.1} parent=19 // pred_check
          %p364 = pneg %p192
        $region38: #{tpu_custom_call.1} parent=19 // pred_check_branch
          %366 = sbr.rel (%p364) target = $region40
        $region39: #{tpu_custom_call.1} parent=19 // pred_region
          %s367 = sand.u32 %s28, 1
          %s368 = scalar_lea.sflag [#allocation14], %s367
          %s369 = sand.u32 %s182, 1
          %s370 = smul.addr %s369, 128
          %s371 = scalar_lea.vmem [#allocation13], %s370
          %s373 = ssub.s32 2048, 2048
          %374 = vsyncadd %s368, %s373
          %s375 = smul.addr %s35, 16
          %s376 = smul.addr %s375, 128
          %s377 = scalar_lea.hbm %s5, %s376
          %s378 = sshll.u32 %s371, 4
          %s379 = int_to_ptr.vmem [resolvable:$true] %s378
          %384 = dma.hbm_to_vmem [thread:$0]  %s377, 2048, %s379, %s368, 128, 128, 8
        $region40: #{tpu_custom_call.1} parent=19 // pred_fallthru
          _
        // Predicated region
        $region41: #{tpu_custom_call.1} parent=19 // pred_check
          %p385 = pneg %p218
        $region42: #{tpu_custom_call.1} parent=19 // pred_check_branch
          %387 = sbr.rel (%p385) target = $region44
        $region43: #{tpu_custom_call.1} parent=19 // pred_region
          %s388 = sand.u32 %s28, 1
          %s389 = scalar_lea.sflag [#allocation14], %s388
          %s390 = sand.u32 %s208, 1
          %s391 = smul.addr %s390, 128
          %s392 = scalar_lea.vmem [#allocation15], %s391
          %s394 = ssub.s32 2048, 2048
          %395 = vsyncadd %s389, %s394
          %s396 = smul.addr %s35, 16
          %s397 = smul.addr %s396, 128
          %s398 = scalar_lea.hbm %s6, %s397
          %s399 = sshll.u32 %s392, 4
          %s400 = int_to_ptr.vmem [resolvable:$true] %s399
          %405 = dma.hbm_to_vmem [thread:$0]  %s398, 2048, %s400, %s389, 128, 128, 8
        $region44: #{tpu_custom_call.1} parent=19 // pred_fallthru
          _
      $region20: #{tpu_custom_call.1} parent=5 // pred_fallthru
        _
      %p406 = scmp.le.s32.totalorder 1, %s28
      %p407 = scmp.lt.s32.totalorder %s28, 9
      %p408 = pnand %p406, %p407
      %p409 = pneg %p408
      // Predicated region
      $region45: #{tpu_custom_call.1} parent=5 // pred_check
        _
      $region46: #{tpu_custom_call.1} parent=5 // pred_check_branch
        %411 = sbr.rel (%p408) target = $region48
      $region47: #{tpu_custom_call.1} parent=5 // pred_region
        %s412 = ssub.s32 %s28, 1
        %s413 = sand.u32 %s60, 1
        %s414 = scalar_lea.sflag [#allocation5], %s413
        %s415 = sand.u32 %s60, 1
        %s416 = smul.addr %s415, 256
        %s417 = scalar_lea.vmem [#allocation4], %s416
        // Predicated region
        $region49: #{tpu_custom_call.1} parent=47 // pred_check
          %p418 = pneg %p73
        $region50: #{tpu_custom_call.1} parent=47 // pred_check_branch
          %420 = sbr.rel (%p418) target = $region52
        $region51: #{tpu_custom_call.1} parent=47 // pred_region
          %421 = dma.done %s414, 4096
        $region52: #{tpu_custom_call.1} parent=47 // pred_fallthru
          _
        %s422 = sand.u32 %s33, 1
        %s423 = scalar_lea.sflag [#allocation8], %s422
        %s424 = sand.u32 %s86, 1
        %s425 = smul.addr %s424, 1536
        %s426 = scalar_lea.vmem [#allocation7], %s425
        // Predicated region
        $region53: #{tpu_custom_call.1} parent=47 // pred_check
          %p427 = pneg %p99
        $region54: #{tpu_custom_call.1} parent=47 // pred_check_branch
          %429 = sbr.rel (%p427) target = $region56
        $region55: #{tpu_custom_call.1} parent=47 // pred_region
          %430 = dma.done %s423, 24576
        $region56: #{tpu_custom_call.1} parent=47 // pred_fallthru
          _
        %s431 = sand.u32 %s33, 1
        %s432 = scalar_lea.sflag [#allocation8], %s431
        %s433 = sand.u32 %s112, 1
        %s434 = smul.addr %s433, 6
        %s435 = scalar_lea.vmem [#allocation9], %s434
        // Predicated region
        $region57: #{tpu_custom_call.1} parent=47 // pred_check
          %p436 = pneg %p125
        $region58: #{tpu_custom_call.1} parent=47 // pred_check_branch
          %438 = sbr.rel (%p436) target = $region60
        $region59: #{tpu_custom_call.1} parent=47 // pred_region
          %439 = dma.done %s432, 96
        $region60: #{tpu_custom_call.1} parent=47 // pred_fallthru
          _
        %s440 = sand.u32 %s33, 1
        %s441 = scalar_lea.sflag [#allocation11], %s440
        %s442 = sand.u32 %s138, 1
        %s443 = smul.addr %s442, 512
        %s444 = scalar_lea.vmem [#allocation10], %s443
        // Predicated region
        $region61: #{tpu_custom_call.1} parent=47 // pred_check
          %p445 = pneg %p151
        $region62: #{tpu_custom_call.1} parent=47 // pred_check_branch
          %447 = sbr.rel (%p445) target = $region64
        $region63: #{tpu_custom_call.1} parent=47 // pred_region
          %448 = dma.done %s441, 8192
        $region64: #{tpu_custom_call.1} parent=47 // pred_fallthru
          _
        // Predicated region
        $region65: #{tpu_custom_call.1} parent=47 // pred_check
          %p449 = pneg %p172
        $region66: #{tpu_custom_call.1} parent=47 // pred_check_branch
          %451 = sbr.rel (%p449) target = $region68
        $region67: #{tpu_custom_call.1} parent=47 // pred_region
          %452 = dma.done [#allocation11], 64
        $region68: #{tpu_custom_call.1} parent=47 // pred_fallthru
          _
        %s453 = sand.u32 %s33, 1
        %s454 = scalar_lea.sflag [#allocation14], %s453
        %s455 = sand.u32 %s185, 1
        %s456 = smul.addr %s455, 128
        %s457 = scalar_lea.vmem [#allocation13], %s456
        // Predicated region
        $region69: #{tpu_custom_call.1} parent=47 // pred_check
          %p458 = pneg %p198
        $region70: #{tpu_custom_call.1} parent=47 // pred_check_branch
          %460 = sbr.rel (%p458) target = $region72
        $region71: #{tpu_custom_call.1} parent=47 // pred_region
          %461 = dma.done %s454, 2048
        $region72: #{tpu_custom_call.1} parent=47 // pred_fallthru
          _
        %s462 = sand.u32 %s33, 1
        %s463 = scalar_lea.sflag [#allocation14], %s462
        %s464 = sand.u32 %s211, 1
        %s465 = smul.addr %s464, 128
        %s466 = scalar_lea.vmem [#allocation15], %s465
        // Predicated region
        $region73: #{tpu_custom_call.1} parent=47 // pred_check
          %p467 = pneg %p224
        $region74: #{tpu_custom_call.1} parent=47 // pred_check_branch
          %469 = sbr.rel (%p467) target = $region76
        $region75: #{tpu_custom_call.1} parent=47 // pred_region
          %470 = dma.done %s463, 2048
        $region76: #{tpu_custom_call.1} parent=47 // pred_fallthru
          _
        %s471 = sand.u32 %s60, 1
        %s472 = scalar_lea.sflag [#allocation5], %s471
        %s473 = sand.u32 %s60, 1
        %s474 = smul.addr %s473, 256
        %s475 = scalar_lea.vmem [#allocation4], %s474
        %p476 = pneg %p73
        %p477 = pneg %p70
        %s478 = sand.u32 %s33, 1
        %s479 = scalar_lea.sflag [#allocation8], %s478
        %s480 = sand.u32 %s86, 1
        %s481 = smul.addr %s480, 1536
        %s482 = scalar_lea.vmem [#allocation7], %s481
        %p483 = pneg %p99
        %p484 = pneg %p96
        %s485 = sand.u32 %s33, 1
        %s486 = scalar_lea.sflag [#allocation8], %s485
        %s487 = sand.u32 %s112, 1
        %s488 = smul.addr %s487, 6
        %s489 = scalar_lea.vmem [#allocation9], %s488
        %p490 = pneg %p125
        %p491 = pneg %p122
        %s492 = sand.u32 %s33, 1
        %s493 = scalar_lea.sflag [#allocation11], %s492
        %s494 = sand.u32 %s138, 1
        %s495 = smul.addr %s494, 512
        %s496 = scalar_lea.vmem [#allocation10], %s495
        %p497 = pneg %p151
        %p498 = pneg %p148
        %p499 = pneg %p172
        %p500 = pneg %p169
        %s501 = sand.u32 %s33, 1
        %s502 = scalar_lea.sflag [#allocation14], %s501
        %s503 = sand.u32 %s185, 1
        %s504 = smul.addr %s503, 128
        %s505 = scalar_lea.vmem [#allocation13], %s504
        %p506 = pneg %p198
        %p507 = pneg %p195
        %s508 = sand.u32 %s33, 1
        %s509 = scalar_lea.sflag [#allocation14], %s508
        %s510 = sand.u32 %s211, 1
        %s511 = smul.addr %s510, 128
        %s512 = scalar_lea.vmem [#allocation15], %s511
        %p513 = pneg %p224
        %p514 = pneg %p221
        %p515 = pneg %p252
        %p516 = pneg %p249
        %s517 = sand.u32 %s239, 1
        %s518 = scalar_lea.sflag [#allocation6], %s517
        %s519 = sand.u32 %s239, 1
        %s520 = smul.addr %s519, 256
        %s521 = scalar_lea.vmem [#allocation16], %s520
        %s522 = smul.u32 8, %s39
        %s524 = smul.u32 %s39, 64
        %p525 = scmp.eq.s32.totalorder %s39, 0
        // Predicated region
        $region77: #{tpu_custom_call.1} parent=47 // pred_check
          %p526 = pneg %p525
        $region78: #{tpu_custom_call.1} parent=47 // pred_check_branch
          %528 = sbr.rel (%p526) target = $region80
        $region79: #{tpu_custom_call.1} parent=47 // pred_region
          %v529 = vld [vmem:[%s417] sm:$0xff]
          %v530 = vld [vmem:[%s417 + $0x8] sm:$0xff]
          %v531 = vld [vmem:[%s417 + $0x10] sm:$0xff]
          %v532 = vld [vmem:[%s417 + $0x18] sm:$0xff]
          %v533 = vld [vmem:[%s417 + $0x20] sm:$0xff]
          %v534 = vld [vmem:[%s417 + $0x28] sm:$0xff]
          %v535 = vld [vmem:[%s417 + $0x30] sm:$0xff]
          %v536 = vld [vmem:[%s417 + $0x38] sm:$0xff]
          %v537 = vld [vmem:[%s417 + $0x40] sm:$0xff]
          %v538 = vld [vmem:[%s417 + $0x48] sm:$0xff]
          %v539 = vld [vmem:[%s417 + $0x50] sm:$0xff]
          %v540 = vld [vmem:[%s417 + $0x58] sm:$0xff]
          %v541 = vld [vmem:[%s417 + $0x60] sm:$0xff]
          %v542 = vld [vmem:[%s417 + $0x68] sm:$0xff]
          %v543 = vld [vmem:[%s417 + $0x70] sm:$0xff]
          %v544 = vld [vmem:[%s417 + $0x78] sm:$0xff]
          %v545 = vld [vmem:[%s417 + $0x80] sm:$0xff]
          %v546 = vld [vmem:[%s417 + $0x88] sm:$0xff]
          %v547 = vld [vmem:[%s417 + $0x90] sm:$0xff]
          %v548 = vld [vmem:[%s417 + $0x98] sm:$0xff]
          %v549 = vld [vmem:[%s417 + $0xa0] sm:$0xff]
          %v550 = vld [vmem:[%s417 + $0xa8] sm:$0xff]
          %v551 = vld [vmem:[%s417 + $0xb0] sm:$0xff]
          %v552 = vld [vmem:[%s417 + $0xb8] sm:$0xff]
          %v553 = vld [vmem:[%s417 + $0xc0] sm:$0xff]
          %v554 = vld [vmem:[%s417 + $0xc8] sm:$0xff]
          %v555 = vld [vmem:[%s417 + $0xd0] sm:$0xff]
          %v556 = vld [vmem:[%s417 + $0xd8] sm:$0xff]
          %v557 = vld [vmem:[%s417 + $0xe0] sm:$0xff]
          %v558 = vld [vmem:[%s417 + $0xe8] sm:$0xff]
          %v559 = vld [vmem:[%s417 + $0xf0] sm:$0xff]
          %v560 = vld [vmem:[%s417 + $0xf8] sm:$0xff]
          %v561 = vld [vmem:[%s426 + $0x8] sm:$0xff]
          %v562 = vld [vmem:[%s426 + $0x10] sm:$0xff]
          %v563 = vld [vmem:[%s426 + $0x20] sm:$0xff]
          %v564 = vld [vmem:[%s426 + $0x28] sm:$0xff]
          %v565 = vld [vmem:[%s426 + $0x38] sm:$0xff]
          %v566 = vld [vmem:[%s426 + $0x40] sm:$0xff]
          %v567 = vld [vmem:[%s426 + $0x50] sm:$0xff]
          %v568 = vld [vmem:[%s426 + $0x58] sm:$0xff]
          %v569 = vld [vmem:[%s426 + $0x68] sm:$0xff]
          %v570 = vld [vmem:[%s426 + $0x70] sm:$0xff]
          %v571 = vld [vmem:[%s426 + $0x80] sm:$0xff]
          %v572 = vld [vmem:[%s426 + $0x88] sm:$0xff]
          %v573 = vld [vmem:[%s426 + $0x98] sm:$0xff]
          %v574 = vld [vmem:[%s426 + $0xa0] sm:$0xff]
          %v575 = vld [vmem:[%s426 + $0xb0] sm:$0xff]
          %v576 = vld [vmem:[%s426 + $0xb8] sm:$0xff]
          %v577 = vld [vmem:[%s426 + $0xc8] sm:$0xff]
          %v578 = vld [vmem:[%s426 + $0xd0] sm:$0xff]
          %v579 = vld [vmem:[%s426 + $0xe0] sm:$0xff]
          %v580 = vld [vmem:[%s426 + $0xe8] sm:$0xff]
          %v581 = vld [vmem:[%s426 + $0xf8] sm:$0xff]
          %v582 = vld [vmem:[%s426 + $0x100] sm:$0xff]
          %v583 = vld [vmem:[%s426 + $0x110] sm:$0xff]
          %v584 = vld [vmem:[%s426 + $0x118] sm:$0xff]
          %v585 = vld [vmem:[%s426 + $0x128] sm:$0xff]
          %v586 = vld [vmem:[%s426 + $0x130] sm:$0xff]
          %v587 = vld [vmem:[%s426 + $0x140] sm:$0xff]
          %v588 = vld [vmem:[%s426 + $0x148] sm:$0xff]
          %v589 = vld [vmem:[%s426 + $0x158] sm:$0xff]
          %v590 = vld [vmem:[%s426 + $0x160] sm:$0xff]
          %v591 = vld [vmem:[%s426 + $0x170] sm:$0xff]
          %v592 = vld [vmem:[%s426 + $0x178] sm:$0xff]
          %v593 = vld [vmem:[%s426 + $0x188] sm:$0xff]
          %v594 = vld [vmem:[%s426 + $0x190] sm:$0xff]
          %v595 = vld [vmem:[%s426 + $0x1a0] sm:$0xff]
          %v596 = vld [vmem:[%s426 + $0x1a8] sm:$0xff]
          %v597 = vld [vmem:[%s426 + $0x1b8] sm:$0xff]
          %v598 = vld [vmem:[%s426 + $0x1c0] sm:$0xff]
          %v599 = vld [vmem:[%s426 + $0x1d0] sm:$0xff]
          %v600 = vld [vmem:[%s426 + $0x1d8] sm:$0xff]
          %v601 = vld [vmem:[%s426 + $0x1e8] sm:$0xff]
          %v602 = vld [vmem:[%s426 + $0x1f0] sm:$0xff]
          %v603 = vld [vmem:[%s426 + $0x200] sm:$0xff]
          %v604 = vld [vmem:[%s426 + $0x208] sm:$0xff]
          %v605 = vld [vmem:[%s426 + $0x218] sm:$0xff]
          %v606 = vld [vmem:[%s426 + $0x220] sm:$0xff]
          %v607 = vld [vmem:[%s426 + $0x230] sm:$0xff]
          %v608 = vld [vmem:[%s426 + $0x238] sm:$0xff]
          %v609 = vld [vmem:[%s426 + $0x248] sm:$0xff]
          %v610 = vld [vmem:[%s426 + $0x250] sm:$0xff]
          %v611 = vld [vmem:[%s426 + $0x260] sm:$0xff]
          %v612 = vld [vmem:[%s426 + $0x268] sm:$0xff]
          %v613 = vld [vmem:[%s426 + $0x278] sm:$0xff]
          %v614 = vld [vmem:[%s426 + $0x280] sm:$0xff]
          %v615 = vld [vmem:[%s426 + $0x290] sm:$0xff]
          %v616 = vld [vmem:[%s426 + $0x298] sm:$0xff]
          %v617 = vld [vmem:[%s426 + $0x2a8] sm:$0xff]
          %v618 = vld [vmem:[%s426 + $0x2b0] sm:$0xff]
          %v619 = vld [vmem:[%s426 + $0x2c0] sm:$0xff]
          %v620 = vld [vmem:[%s426 + $0x2c8] sm:$0xff]
          %v621 = vld [vmem:[%s426 + $0x2d8] sm:$0xff]
          %v622 = vld [vmem:[%s426 + $0x2e0] sm:$0xff]
          %v623 = vld [vmem:[%s426 + $0x2f0] sm:$0xff]
          %v624 = vld [vmem:[%s426 + $0x2f8] sm:$0xff]
          %v625 = vld [vmem:[%s426 + $0x308] sm:$0xff]
          %v626 = vld [vmem:[%s426 + $0x310] sm:$0xff]
          %v627 = vld [vmem:[%s426 + $0x320] sm:$0xff]
          %v628 = vld [vmem:[%s426 + $0x328] sm:$0xff]
          %v629 = vld [vmem:[%s426 + $0x338] sm:$0xff]
          %v630 = vld [vmem:[%s426 + $0x340] sm:$0xff]
          %v631 = vld [vmem:[%s426 + $0x350] sm:$0xff]
          %v632 = vld [vmem:[%s426 + $0x358] sm:$0xff]
          %v633 = vld [vmem:[%s426 + $0x368] sm:$0xff]
          %v634 = vld [vmem:[%s426 + $0x370] sm:$0xff]
          %v635 = vld [vmem:[%s426 + $0x380] sm:$0xff]
          %v636 = vld [vmem:[%s426 + $0x388] sm:$0xff]
          %v637 = vld [vmem:[%s426 + $0x398] sm:$0xff]
          %v638 = vld [vmem:[%s426 + $0x3a0] sm:$0xff]
          %v639 = vld [vmem:[%s426 + $0x3b0] sm:$0xff]
          %v640 = vld [vmem:[%s426 + $0x3b8] sm:$0xff]
          %v641 = vld [vmem:[%s426 + $0x3c8] sm:$0xff]
          %v642 = vld [vmem:[%s426 + $0x3d0] sm:$0xff]
          %v643 = vld [vmem:[%s426 + $0x3e0] sm:$0xff]
          %v644 = vld [vmem:[%s426 + $0x3e8] sm:$0xff]
          %v645 = vld [vmem:[%s426 + $0x3f8] sm:$0xff]
          %v646 = vld [vmem:[%s426 + $0x400] sm:$0xff]
          %v647 = vld [vmem:[%s426 + $0x410] sm:$0xff]
          %v648 = vld [vmem:[%s426 + $0x418] sm:$0xff]
          %v649 = vld [vmem:[%s426 + $0x428] sm:$0xff]
          %v650 = vld [vmem:[%s426 + $0x430] sm:$0xff]
          %v651 = vld [vmem:[%s426 + $0x440] sm:$0xff]
          %v652 = vld [vmem:[%s426 + $0x448] sm:$0xff]
          %v653 = vld [vmem:[%s426 + $0x458] sm:$0xff]
          %v654 = vld [vmem:[%s426 + $0x460] sm:$0xff]
          %v655 = vld [vmem:[%s426 + $0x470] sm:$0xff]
          %v656 = vld [vmem:[%s426 + $0x478] sm:$0xff]
          %v657 = vld [vmem:[%s426 + $0x488] sm:$0xff]
          %v658 = vld [vmem:[%s426 + $0x490] sm:$0xff]
          %v659 = vld [vmem:[%s426 + $0x4a0] sm:$0xff]
          %v660 = vld [vmem:[%s426 + $0x4a8] sm:$0xff]
          %v661 = vld [vmem:[%s426 + $0x4b8] sm:$0xff]
          %v662 = vld [vmem:[%s426 + $0x4c0] sm:$0xff]
          %v663 = vld [vmem:[%s426 + $0x4d0] sm:$0xff]
          %v664 = vld [vmem:[%s426 + $0x4d8] sm:$0xff]
          %v665 = vld [vmem:[%s426 + $0x4e8] sm:$0xff]
          %v666 = vld [vmem:[%s426 + $0x4f0] sm:$0xff]
          %v667 = vld [vmem:[%s426 + $0x500] sm:$0xff]
          %v668 = vld [vmem:[%s426 + $0x508] sm:$0xff]
          %v669 = vld [vmem:[%s426 + $0x518] sm:$0xff]
          %v670 = vld [vmem:[%s426 + $0x520] sm:$0xff]
          %v671 = vld [vmem:[%s426 + $0x530] sm:$0xff]
          %v672 = vld [vmem:[%s426 + $0x538] sm:$0xff]
          %v673 = vld [vmem:[%s426 + $0x548] sm:$0xff]
          %v674 = vld [vmem:[%s426 + $0x550] sm:$0xff]
          %v675 = vld [vmem:[%s426 + $0x560] sm:$0xff]
          %v676 = vld [vmem:[%s426 + $0x568] sm:$0xff]
          %v677 = vld [vmem:[%s426 + $0x578] sm:$0xff]
          %v678 = vld [vmem:[%s426 + $0x580] sm:$0xff]
          %v679 = vld [vmem:[%s426 + $0x590] sm:$0xff]
          %v680 = vld [vmem:[%s426 + $0x598] sm:$0xff]
          %v681 = vld [vmem:[%s426 + $0x5a8] sm:$0xff]
          %v682 = vld [vmem:[%s426 + $0x5b0] sm:$0xff]
          %v683 = vld [vmem:[%s426 + $0x5c0] sm:$0xff]
          %v684 = vld [vmem:[%s426 + $0x5c8] sm:$0xff]
          %v685 = vld [vmem:[%s426 + $0x5d8] sm:$0xff]
          %v686 = vld [vmem:[%s426 + $0x5e0] sm:$0xff]
          %v687 = vld [vmem:[%s426 + $0x5f0] sm:$0xff]
          %v688 = vld [vmem:[%s426 + $0x5f8] sm:$0xff]
          %v689 = vld [vmem:[%s435 + $0x2] sm:$0xf]
          %v691 = vlaneseq
          %v692 = vshrl.u32 %v691, 7
          %v693 = vsub.s32 0, %v692
          %v694 = vrot.slane %v689, %v693
          %v695 = vlaneseq
          %v696 = vshrl.u32 %v695, 7
          %v697 = vsub.s32 1, %v696
          %v698 = vrot.slane %v689, %v697
          %v699 = vlaneseq
          %v700 = vshrl.u32 %v699, 7
          %v701 = vsub.s32 2, %v700
          %v702 = vrot.slane %v689, %v701
          %v703 = vlaneseq
          %v704 = vshrl.u32 %v703, 7
          %v705 = vsub.s32 3, %v704
          %v706 = vrot.slane %v689, %v705
          %v743 = vunpack.c.l.b16 %v529
          %v744 = vunpack.c.h.b16 %v529
          %v745 = vunpack.c.l.b16 %v530
          %v746 = vunpack.c.h.b16 %v530
          %v747 = vunpack.c.l.b16 %v531
          %v748 = vunpack.c.h.b16 %v531
          %v749 = vunpack.c.l.b16 %v532
          %v750 = vunpack.c.h.b16 %v532
          %v751 = vunpack.c.l.b16 %v533
          %v752 = vunpack.c.h.b16 %v533
          %v753 = vunpack.c.l.b16 %v534
          %v754 = vunpack.c.h.b16 %v534
          %v755 = vunpack.c.l.b16 %v535
          %v756 = vunpack.c.h.b16 %v535
          %v757 = vunpack.c.l.b16 %v536
          %v758 = vunpack.c.h.b16 %v536
          %v759 = vunpack.c.l.b16 %v537
          %v760 = vunpack.c.h.b16 %v537
          %v761 = vunpack.c.l.b16 %v538
          %v762 = vunpack.c.h.b16 %v538
          %v763 = vunpack.c.l.b16 %v539
          %v764 = vunpack.c.h.b16 %v539
          %v765 = vunpack.c.l.b16 %v540
          %v766 = vunpack.c.h.b16 %v540
          %v767 = vunpack.c.l.b16 %v541
          %v768 = vunpack.c.h.b16 %v541
          %v769 = vunpack.c.l.b16 %v542
          %v770 = vunpack.c.h.b16 %v542
          %v771 = vunpack.c.l.b16 %v543
          %v772 = vunpack.c.h.b16 %v543
          %v773 = vunpack.c.l.b16 %v544
          %v774 = vunpack.c.h.b16 %v544
          %v775 = vunpack.c.l.b16 %v545
          %v776 = vunpack.c.h.b16 %v545
          %v777 = vunpack.c.l.b16 %v546
          %v778 = vunpack.c.h.b16 %v546
          %v779 = vunpack.c.l.b16 %v547
          %v780 = vunpack.c.h.b16 %v547
          %v781 = vunpack.c.l.b16 %v548
          %v782 = vunpack.c.h.b16 %v548
          %v783 = vunpack.c.l.b16 %v549
          %v784 = vunpack.c.h.b16 %v549
          %v785 = vunpack.c.l.b16 %v550
          %v786 = vunpack.c.h.b16 %v550
          %v787 = vunpack.c.l.b16 %v551
          %v788 = vunpack.c.h.b16 %v551
          %v789 = vunpack.c.l.b16 %v552
          %v790 = vunpack.c.h.b16 %v552
          %v791 = vunpack.c.l.b16 %v553
          %v792 = vunpack.c.h.b16 %v553
          %v793 = vunpack.c.l.b16 %v554
          %v794 = vunpack.c.h.b16 %v554
          %v795 = vunpack.c.l.b16 %v555
          %v796 = vunpack.c.h.b16 %v555
          %v797 = vunpack.c.l.b16 %v556
          %v798 = vunpack.c.h.b16 %v556
          %v799 = vunpack.c.l.b16 %v557
          %v800 = vunpack.c.h.b16 %v557
          %v801 = vunpack.c.l.b16 %v558
          %v802 = vunpack.c.h.b16 %v558
          %v803 = vunpack.c.l.b16 %v559
          %v804 = vunpack.c.h.b16 %v559
          %v805 = vunpack.c.l.b16 %v560
          %v806 = vunpack.c.h.b16 %v560
          %v807 = vpack.c.b16 %v747, %v743
          %v808 = vpack.c.b16 %v748, %v744
          %v809 = vpack.c.b16 %v749, %v745
          %v810 = vpack.c.b16 %v750, %v746
          %v811 = vpack.c.b16 %v755, %v751
          %v812 = vpack.c.b16 %v756, %v752
          %v813 = vpack.c.b16 %v757, %v753
          %v814 = vpack.c.b16 %v758, %v754
          %v815 = vpack.c.b16 %v763, %v759
          %v816 = vpack.c.b16 %v764, %v760
          %v817 = vpack.c.b16 %v765, %v761
          %v818 = vpack.c.b16 %v766, %v762
          %v819 = vpack.c.b16 %v771, %v767
          %v820 = vpack.c.b16 %v772, %v768
          %v821 = vpack.c.b16 %v773, %v769
          %v822 = vpack.c.b16 %v774, %v770
          %v823 = vpack.c.b16 %v779, %v775
          %v824 = vpack.c.b16 %v780, %v776
          %v825 = vpack.c.b16 %v781, %v777
          %v826 = vpack.c.b16 %v782, %v778
          %v827 = vpack.c.b16 %v787, %v783
          %v828 = vpack.c.b16 %v788, %v784
          %v829 = vpack.c.b16 %v789, %v785
          %v830 = vpack.c.b16 %v790, %v786
          %v831 = vpack.c.b16 %v795, %v791
          %v832 = vpack.c.b16 %v796, %v792
          %v833 = vpack.c.b16 %v797, %v793
          %v834 = vpack.c.b16 %v798, %v794
          %v835 = vpack.c.b16 %v803, %v799
          %v836 = vpack.c.b16 %v804, %v800
          %v837 = vpack.c.b16 %v805, %v801
          %v838 = vpack.c.b16 %v806, %v802
          %v999 = vunpack.c.l.b16 %v561
          %v1000 = vunpack.c.h.b16 %v561
          %v1001 = vunpack.c.l.b16 %v562
          %v1002 = vunpack.c.h.b16 %v562
          %v1003 = vunpack.c.l.b16 %v563
          %v1004 = vunpack.c.h.b16 %v563
          %v1005 = vunpack.c.l.b16 %v564
          %v1006 = vunpack.c.h.b16 %v564
          %v1007 = vunpack.c.l.b16 %v565
          %v1008 = vunpack.c.h.b16 %v565
          %v1009 = vunpack.c.l.b16 %v566
          %v1010 = vunpack.c.h.b16 %v566
          %v1011 = vunpack.c.l.b16 %v567
          %v1012 = vunpack.c.h.b16 %v567
          %v1013 = vunpack.c.l.b16 %v568
          %v1014 = vunpack.c.h.b16 %v568
          %v1015 = vunpack.c.l.b16 %v569
          %v1016 = vunpack.c.h.b16 %v569
          %v1017 = vunpack.c.l.b16 %v570
          %v1018 = vunpack.c.h.b16 %v570
          %v1019 = vunpack.c.l.b16 %v571
          %v1020 = vunpack.c.h.b16 %v571
          %v1021 = vunpack.c.l.b16 %v572
          %v1022 = vunpack.c.h.b16 %v572
          %v1023 = vunpack.c.l.b16 %v573
          %v1024 = vunpack.c.h.b16 %v573
          %v1025 = vunpack.c.l.b16 %v574
          %v1026 = vunpack.c.h.b16 %v574
          %v1027 = vunpack.c.l.b16 %v575
          %v1028 = vunpack.c.h.b16 %v575
          %v1029 = vunpack.c.l.b16 %v576
          %v1030 = vunpack.c.h.b16 %v576
          %v1031 = vunpack.c.l.b16 %v577
          %v1032 = vunpack.c.h.b16 %v577
          %v1033 = vunpack.c.l.b16 %v578
          %v1034 = vunpack.c.h.b16 %v578
          %v1035 = vunpack.c.l.b16 %v579
          %v1036 = vunpack.c.h.b16 %v579
          %v1037 = vunpack.c.l.b16 %v580
          %v1038 = vunpack.c.h.b16 %v580
          %v1039 = vunpack.c.l.b16 %v581
          %v1040 = vunpack.c.h.b16 %v581
          %v1041 = vunpack.c.l.b16 %v582
          %v1042 = vunpack.c.h.b16 %v582
          %v1043 = vunpack.c.l.b16 %v583
          %v1044 = vunpack.c.h.b16 %v583
          %v1045 = vunpack.c.l.b16 %v584
          %v1046 = vunpack.c.h.b16 %v584
          %v1047 = vunpack.c.l.b16 %v585
          %v1048 = vunpack.c.h.b16 %v585
          %v1049 = vunpack.c.l.b16 %v586
          %v1050 = vunpack.c.h.b16 %v586
          %v1051 = vunpack.c.l.b16 %v587
          %v1052 = vunpack.c.h.b16 %v587
          %v1053 = vunpack.c.l.b16 %v588
          %v1054 = vunpack.c.h.b16 %v588
          %v1055 = vunpack.c.l.b16 %v589
          %v1056 = vunpack.c.h.b16 %v589
          %v1057 = vunpack.c.l.b16 %v590
          %v1058 = vunpack.c.h.b16 %v590
          %v1059 = vunpack.c.l.b16 %v591
          %v1060 = vunpack.c.h.b16 %v591
          %v1061 = vunpack.c.l.b16 %v592
          %v1062 = vunpack.c.h.b16 %v592
          %v1063 = vunpack.c.l.b16 %v593
          %v1064 = vunpack.c.h.b16 %v593
          %v1065 = vunpack.c.l.b16 %v594
          %v1066 = vunpack.c.h.b16 %v594
          %v1067 = vunpack.c.l.b16 %v595
          %v1068 = vunpack.c.h.b16 %v595
          %v1069 = vunpack.c.l.b16 %v596
          %v1070 = vunpack.c.h.b16 %v596
          %v1071 = vunpack.c.l.b16 %v597
          %v1072 = vunpack.c.h.b16 %v597
          %v1073 = vunpack.c.l.b16 %v598
          %v1074 = vunpack.c.h.b16 %v598
          %v1075 = vunpack.c.l.b16 %v599
          %v1076 = vunpack.c.h.b16 %v599
          %v1077 = vunpack.c.l.b16 %v600
          %v1078 = vunpack.c.h.b16 %v600
          %v1079 = vunpack.c.l.b16 %v601
          %v1080 = vunpack.c.h.b16 %v601
          %v1081 = vunpack.c.l.b16 %v602
          %v1082 = vunpack.c.h.b16 %v602
          %v1083 = vunpack.c.l.b16 %v603
          %v1084 = vunpack.c.h.b16 %v603
          %v1085 = vunpack.c.l.b16 %v604
          %v1086 = vunpack.c.h.b16 %v604
          %v1087 = vunpack.c.l.b16 %v605
          %v1088 = vunpack.c.h.b16 %v605
          %v1089 = vunpack.c.l.b16 %v606
          %v1090 = vunpack.c.h.b16 %v606
          %v1091 = vunpack.c.l.b16 %v607
          %v1092 = vunpack.c.h.b16 %v607
          %v1093 = vunpack.c.l.b16 %v608
          %v1094 = vunpack.c.h.b16 %v608
          %v1095 = vunpack.c.l.b16 %v609
          %v1096 = vunpack.c.h.b16 %v609
          %v1097 = vunpack.c.l.b16 %v610
          %v1098 = vunpack.c.h.b16 %v610
          %v1099 = vunpack.c.l.b16 %v611
          %v1100 = vunpack.c.h.b16 %v611
          %v1101 = vunpack.c.l.b16 %v612
          %v1102 = vunpack.c.h.b16 %v612
          %v1103 = vunpack.c.l.b16 %v613
          %v1104 = vunpack.c.h.b16 %v613
          %v1105 = vunpack.c.l.b16 %v614
          %v1106 = vunpack.c.h.b16 %v614
          %v1107 = vunpack.c.l.b16 %v615
          %v1108 = vunpack.c.h.b16 %v615
          %v1109 = vunpack.c.l.b16 %v616
          %v1110 = vunpack.c.h.b16 %v616
          %v1111 = vunpack.c.l.b16 %v617
          %v1112 = vunpack.c.h.b16 %v617
          %v1113 = vunpack.c.l.b16 %v618
          %v1114 = vunpack.c.h.b16 %v618
          %v1115 = vunpack.c.l.b16 %v619
          %v1116 = vunpack.c.h.b16 %v619
          %v1117 = vunpack.c.l.b16 %v620
          %v1118 = vunpack.c.h.b16 %v620
          %v1119 = vunpack.c.l.b16 %v621
          %v1120 = vunpack.c.h.b16 %v621
          %v1121 = vunpack.c.l.b16 %v622
          %v1122 = vunpack.c.h.b16 %v622
          %v1123 = vunpack.c.l.b16 %v623
          %v1124 = vunpack.c.h.b16 %v623
          %v1125 = vunpack.c.l.b16 %v624
          %v1126 = vunpack.c.h.b16 %v624
          %v1127 = vunpack.c.l.b16 %v625
          %v1128 = vunpack.c.h.b16 %v625
          %v1129 = vunpack.c.l.b16 %v626
          %v1130 = vunpack.c.h.b16 %v626
          %v1131 = vunpack.c.l.b16 %v627
          %v1132 = vunpack.c.h.b16 %v627
          %v1133 = vunpack.c.l.b16 %v628
          %v1134 = vunpack.c.h.b16 %v628
          %v1135 = vunpack.c.l.b16 %v629
          %v1136 = vunpack.c.h.b16 %v629
          %v1137 = vunpack.c.l.b16 %v630
          %v1138 = vunpack.c.h.b16 %v630
          %v1139 = vunpack.c.l.b16 %v631
          %v1140 = vunpack.c.h.b16 %v631
          %v1141 = vunpack.c.l.b16 %v632
          %v1142 = vunpack.c.h.b16 %v632
          %v1143 = vunpack.c.l.b16 %v633
          %v1144 = vunpack.c.h.b16 %v633
          %v1145 = vunpack.c.l.b16 %v634
          %v1146 = vunpack.c.h.b16 %v634
          %v1147 = vunpack.c.l.b16 %v635
          %v1148 = vunpack.c.h.b16 %v635
          %v1149 = vunpack.c.l.b16 %v636
          %v1150 = vunpack.c.h.b16 %v636
          %v1151 = vunpack.c.l.b16 %v637
          %v1152 = vunpack.c.h.b16 %v637
          %v1153 = vunpack.c.l.b16 %v638
          %v1154 = vunpack.c.h.b16 %v638
          %v1155 = vunpack.c.l.b16 %v639
          %v1156 = vunpack.c.h.b16 %v639
          %v1157 = vunpack.c.l.b16 %v640
          %v1158 = vunpack.c.h.b16 %v640
          %v1159 = vunpack.c.l.b16 %v641
          %v1160 = vunpack.c.h.b16 %v641
          %v1161 = vunpack.c.l.b16 %v642
          %v1162 = vunpack.c.h.b16 %v642
          %v1163 = vunpack.c.l.b16 %v643
          %v1164 = vunpack.c.h.b16 %v643
          %v1165 = vunpack.c.l.b16 %v644
          %v1166 = vunpack.c.h.b16 %v644
          %v1167 = vunpack.c.l.b16 %v645
          %v1168 = vunpack.c.h.b16 %v645
          %v1169 = vunpack.c.l.b16 %v646
          %v1170 = vunpack.c.h.b16 %v646
          %v1171 = vunpack.c.l.b16 %v647
          %v1172 = vunpack.c.h.b16 %v647
          %v1173 = vunpack.c.l.b16 %v648
          %v1174 = vunpack.c.h.b16 %v648
          %v1175 = vunpack.c.l.b16 %v649
          %v1176 = vunpack.c.h.b16 %v649
          %v1177 = vunpack.c.l.b16 %v650
          %v1178 = vunpack.c.h.b16 %v650
          %v1179 = vunpack.c.l.b16 %v651
          %v1180 = vunpack.c.h.b16 %v651
          %v1181 = vunpack.c.l.b16 %v652
          %v1182 = vunpack.c.h.b16 %v652
          %v1183 = vunpack.c.l.b16 %v653
          %v1184 = vunpack.c.h.b16 %v653
          %v1185 = vunpack.c.l.b16 %v654
          %v1186 = vunpack.c.h.b16 %v654
          %v1187 = vunpack.c.l.b16 %v655
          %v1188 = vunpack.c.h.b16 %v655
          %v1189 = vunpack.c.l.b16 %v656
          %v1190 = vunpack.c.h.b16 %v656
          %v1191 = vunpack.c.l.b16 %v657
          %v1192 = vunpack.c.h.b16 %v657
          %v1193 = vunpack.c.l.b16 %v658
          %v1194 = vunpack.c.h.b16 %v658
          %v1195 = vunpack.c.l.b16 %v659
          %v1196 = vunpack.c.h.b16 %v659
          %v1197 = vunpack.c.l.b16 %v660
          %v1198 = vunpack.c.h.b16 %v660
          %v1199 = vunpack.c.l.b16 %v661
          %v1200 = vunpack.c.h.b16 %v661
          %v1201 = vunpack.c.l.b16 %v662
          %v1202 = vunpack.c.h.b16 %v662
          %v1203 = vunpack.c.l.b16 %v663
          %v1204 = vunpack.c.h.b16 %v663
          %v1205 = vunpack.c.l.b16 %v664
          %v1206 = vunpack.c.h.b16 %v664
          %v1207 = vunpack.c.l.b16 %v665
          %v1208 = vunpack.c.h.b16 %v665
          %v1209 = vunpack.c.l.b16 %v666
          %v1210 = vunpack.c.h.b16 %v666
          %v1211 = vunpack.c.l.b16 %v667
          %v1212 = vunpack.c.h.b16 %v667
          %v1213 = vunpack.c.l.b16 %v668
          %v1214 = vunpack.c.h.b16 %v668
          %v1215 = vunpack.c.l.b16 %v669
          %v1216 = vunpack.c.h.b16 %v669
          %v1217 = vunpack.c.l.b16 %v670
          %v1218 = vunpack.c.h.b16 %v670
          %v1219 = vunpack.c.l.b16 %v671
          %v1220 = vunpack.c.h.b16 %v671
          %v1221 = vunpack.c.l.b16 %v672
          %v1222 = vunpack.c.h.b16 %v672
          %v1223 = vunpack.c.l.b16 %v673
          %v1224 = vunpack.c.h.b16 %v673
          %v1225 = vunpack.c.l.b16 %v674
          %v1226 = vunpack.c.h.b16 %v674
          %v1227 = vunpack.c.l.b16 %v675
          %v1228 = vunpack.c.h.b16 %v675
          %v1229 = vunpack.c.l.b16 %v676
          %v1230 = vunpack.c.h.b16 %v676
          %v1231 = vunpack.c.l.b16 %v677
          %v1232 = vunpack.c.h.b16 %v677
          %v1233 = vunpack.c.l.b16 %v678
          %v1234 = vunpack.c.h.b16 %v678
          %v1235 = vunpack.c.l.b16 %v679
          %v1236 = vunpack.c.h.b16 %v679
          %v1237 = vunpack.c.l.b16 %v680
          %v1238 = vunpack.c.h.b16 %v680
          %v1239 = vunpack.c.l.b16 %v681
          %v1240 = vunpack.c.h.b16 %v681
          %v1241 = vunpack.c.l.b16 %v682
          %v1242 = vunpack.c.h.b16 %v682
          %v1243 = vunpack.c.l.b16 %v683
          %v1244 = vunpack.c.h.b16 %v683
          %v1245 = vunpack.c.l.b16 %v684
          %v1246 = vunpack.c.h.b16 %v684
          %v1247 = vunpack.c.l.b16 %v685
          %v1248 = vunpack.c.h.b16 %v685
          %v1249 = vunpack.c.l.b16 %v686
          %v1250 = vunpack.c.h.b16 %v686
          %v1251 = vunpack.c.l.b16 %v687
          %v1252 = vunpack.c.h.b16 %v687
          %v1253 = vunpack.c.l.b16 %v688
          %v1254 = vunpack.c.h.b16 %v688
          %v1255 = vpack.c.b16 %v1003, %v999
          %v1256 = vpack.c.b16 %v1004, %v1000
          %v1257 = vpack.c.b16 %v1005, %v1001
          %v1258 = vpack.c.b16 %v1006, %v1002
          %v1259 = vpack.c.b16 %v1011, %v1007
          %v1260 = vpack.c.b16 %v1012, %v1008
          %v1261 = vpack.c.b16 %v1013, %v1009
          %v1262 = vpack.c.b16 %v1014, %v1010
          %v1263 = vpack.c.b16 %v1019, %v1015
          %v1264 = vpack.c.b16 %v1020, %v1016
          %v1265 = vpack.c.b16 %v1021, %v1017
          %v1266 = vpack.c.b16 %v1022, %v1018
          %v1267 = vpack.c.b16 %v1027, %v1023
          %v1268 = vpack.c.b16 %v1028, %v1024
          %v1269 = vpack.c.b16 %v1029, %v1025
          %v1270 = vpack.c.b16 %v1030, %v1026
          %v1271 = vpack.c.b16 %v1035, %v1031
          %v1272 = vpack.c.b16 %v1036, %v1032
          %v1273 = vpack.c.b16 %v1037, %v1033
          %v1274 = vpack.c.b16 %v1038, %v1034
          %v1275 = vpack.c.b16 %v1043, %v1039
          %v1276 = vpack.c.b16 %v1044, %v1040
          %v1277 = vpack.c.b16 %v1045, %v1041
          %v1278 = vpack.c.b16 %v1046, %v1042
          %v1279 = vpack.c.b16 %v1051, %v1047
          %v1280 = vpack.c.b16 %v1052, %v1048
          %v1281 = vpack.c.b16 %v1053, %v1049
          %v1282 = vpack.c.b16 %v1054, %v1050
          %v1283 = vpack.c.b16 %v1059, %v1055
          %v1284 = vpack.c.b16 %v1060, %v1056
          %v1285 = vpack.c.b16 %v1061, %v1057
          %v1286 = vpack.c.b16 %v1062, %v1058
          %v1287 = vpack.c.b16 %v1067, %v1063
          %v1288 = vpack.c.b16 %v1068, %v1064
          %v1289 = vpack.c.b16 %v1069, %v1065
          %v1290 = vpack.c.b16 %v1070, %v1066
          %v1291 = vpack.c.b16 %v1075, %v1071
          %v1292 = vpack.c.b16 %v1076, %v1072
          %v1293 = vpack.c.b16 %v1077, %v1073
          %v1294 = vpack.c.b16 %v1078, %v1074
          %v1295 = vpack.c.b16 %v1083, %v1079
          %v1296 = vpack.c.b16 %v1084, %v1080
          %v1297 = vpack.c.b16 %v1085, %v1081
          %v1298 = vpack.c.b16 %v1086, %v1082
          %v1299 = vpack.c.b16 %v1091, %v1087
          %v1300 = vpack.c.b16 %v1092, %v1088
          %v1301 = vpack.c.b16 %v1093, %v1089
          %v1302 = vpack.c.b16 %v1094, %v1090
          %v1303 = vpack.c.b16 %v1099, %v1095
          %v1304 = vpack.c.b16 %v1100, %v1096
          %v1305 = vpack.c.b16 %v1101, %v1097
          %v1306 = vpack.c.b16 %v1102, %v1098
          %v1307 = vpack.c.b16 %v1107, %v1103
          %v1308 = vpack.c.b16 %v1108, %v1104
          %v1309 = vpack.c.b16 %v1109, %v1105
          %v1310 = vpack.c.b16 %v1110, %v1106
          %v1311 = vpack.c.b16 %v1115, %v1111
          %v1312 = vpack.c.b16 %v1116, %v1112
          %v1313 = vpack.c.b16 %v1117, %v1113
          %v1314 = vpack.c.b16 %v1118, %v1114
          %v1315 = vpack.c.b16 %v1123, %v1119
          %v1316 = vpack.c.b16 %v1124, %v1120
          %v1317 = vpack.c.b16 %v1125, %v1121
          %v1318 = vpack.c.b16 %v1126, %v1122
          %v1319 = vpack.c.b16 %v1131, %v1127
          %v1320 = vpack.c.b16 %v1132, %v1128
          %v1321 = vpack.c.b16 %v1133, %v1129
          %v1322 = vpack.c.b16 %v1134, %v1130
          %v1323 = vpack.c.b16 %v1139, %v1135
          %v1324 = vpack.c.b16 %v1140, %v1136
          %v1325 = vpack.c.b16 %v1141, %v1137
          %v1326 = vpack.c.b16 %v1142, %v1138
          %v1327 = vpack.c.b16 %v1147, %v1143
          %v1328 = vpack.c.b16 %v1148, %v1144
          %v1329 = vpack.c.b16 %v1149, %v1145
          %v1330 = vpack.c.b16 %v1150, %v1146
          %v1331 = vpack.c.b16 %v1155, %v1151
          %v1332 = vpack.c.b16 %v1156, %v1152
          %v1333 = vpack.c.b16 %v1157, %v1153
          %v1334 = vpack.c.b16 %v1158, %v1154
          %v1335 = vpack.c.b16 %v1163, %v1159
          %v1336 = vpack.c.b16 %v1164, %v1160
          %v1337 = vpack.c.b16 %v1165, %v1161
          %v1338 = vpack.c.b16 %v1166, %v1162
          %v1339 = vpack.c.b16 %v1171, %v1167
          %v1340 = vpack.c.b16 %v1172, %v1168
          %v1341 = vpack.c.b16 %v1173, %v1169
          %v1342 = vpack.c.b16 %v1174, %v1170
          %v1343 = vpack.c.b16 %v1179, %v1175
          %v1344 = vpack.c.b16 %v1180, %v1176
          %v1345 = vpack.c.b16 %v1181, %v1177
          %v1346 = vpack.c.b16 %v1182, %v1178
          %v1347 = vpack.c.b16 %v1187, %v1183
          %v1348 = vpack.c.b16 %v1188, %v1184
          %v1349 = vpack.c.b16 %v1189, %v1185
          %v1350 = vpack.c.b16 %v1190, %v1186
          %v1351 = vpack.c.b16 %v1195, %v1191
          %v1352 = vpack.c.b16 %v1196, %v1192
          %v1353 = vpack.c.b16 %v1197, %v1193
          %v1354 = vpack.c.b16 %v1198, %v1194
          %v1355 = vpack.c.b16 %v1203, %v1199
          %v1356 = vpack.c.b16 %v1204, %v1200
          %v1357 = vpack.c.b16 %v1205, %v1201
          %v1358 = vpack.c.b16 %v1206, %v1202
          %v1359 = vpack.c.b16 %v1211, %v1207
          %v1360 = vpack.c.b16 %v1212, %v1208
          %v1361 = vpack.c.b16 %v1213, %v1209
          %v1362 = vpack.c.b16 %v1214, %v1210
          %v1363 = vpack.c.b16 %v1219, %v1215
          %v1364 = vpack.c.b16 %v1220, %v1216
          %v1365 = vpack.c.b16 %v1221, %v1217
          %v1366 = vpack.c.b16 %v1222, %v1218
          %v1367 = vpack.c.b16 %v1227, %v1223
          %v1368 = vpack.c.b16 %v1228, %v1224
          %v1369 = vpack.c.b16 %v1229, %v1225
          %v1370 = vpack.c.b16 %v1230, %v1226
          %v1371 = vpack.c.b16 %v1235, %v1231
          %v1372 = vpack.c.b16 %v1236, %v1232
          %v1373 = vpack.c.b16 %v1237, %v1233
          %v1374 = vpack.c.b16 %v1238, %v1234
          %v1375 = vpack.c.b16 %v1243, %v1239
          %v1376 = vpack.c.b16 %v1244, %v1240
          %v1377 = vpack.c.b16 %v1245, %v1241
          %v1378 = vpack.c.b16 %v1246, %v1242
          %v1379 = vpack.c.b16 %v1251, %v1247
          %v1380 = vpack.c.b16 %v1252, %v1248
          %v1381 = vpack.c.b16 %v1253, %v1249
          %v1382 = vpack.c.b16 %v1254, %v1250
          %1511 = vmatprep.subr.bf16.mxu0 %v1256
          %1512 = vmatpush1.bf16.msra.mxu0 %v1255
          %1513 = vmatprep.subr.bf16.mxu0 %v1260
          %1514 = vmatpush1.bf16.msra.mxu0 %v1259
          %1515 = vmatprep.subr.bf16.mxu0 %v1264
          %1516 = vmatpush1.bf16.msra.mxu0 %v1263
          %1517 = vmatprep.subr.bf16.mxu0 %v1268
          %1518 = vmatpush1.bf16.msra.mxu0 %v1267
          %1519 = vmatprep.subr.bf16.mxu0 %v1272
          %1520 = vmatpush1.bf16.msra.mxu0 %v1271
          %1521 = vmatprep.subr.bf16.mxu0 %v1276
          %1522 = vmatpush1.bf16.msra.mxu0 %v1275
          %1523 = vmatprep.subr.bf16.mxu0 %v1280
          %1524 = vmatpush1.bf16.msra.mxu0 %v1279
          %1525 = vmatprep.subr.bf16.mxu0 %v1284
          %1526 = vmatpush1.bf16.msra.mxu0 %v1283
          %1527 = vmatprep.subr.bf16.mxu0 %v1288
          %1528 = vmatpush1.bf16.msra.mxu0 %v1287
          %1529 = vmatprep.subr.bf16.mxu0 %v1292
          %1530 = vmatpush1.bf16.msra.mxu0 %v1291
          %1531 = vmatprep.subr.bf16.mxu0 %v1296
          %1532 = vmatpush1.bf16.msra.mxu0 %v1295
          %1533 = vmatprep.subr.bf16.mxu0 %v1300
          %1534 = vmatpush1.bf16.msra.mxu0 %v1299
          %1535 = vmatprep.subr.bf16.mxu0 %v1304
          %1536 = vmatpush1.bf16.msra.mxu0 %v1303
          %1537 = vmatprep.subr.bf16.mxu0 %v1308
          %1538 = vmatpush1.bf16.msra.mxu0 %v1307
          %1539 = vmatprep.subr.bf16.mxu0 %v1312
          %1540 = vmatpush1.bf16.msra.mxu0 %v1311
          %1541 = vmatprep.subr.bf16.mxu0 %v1316
          %1542 = vmatpush1.bf16.msra.mxu0 %v1315
          %1543 = vmatprep.mubr.bf16.mxu0 %v808
          %1544 = vmatmul.mubr.bf16.gmra.mrb[0].mxu0 %v807
          %v1545 = vpop.f32.mrb[0].mxu0
          %v1546 = vadd.f32 %v694, %v1545
          %v1547 = vpop.f32.mrb[0].mxu0
          %v1548 = vadd.f32 %v698, %v1547
          %v1549 = vpop.f32.mrb[0].mxu0
          %v1550 = vadd.f32 %v694, %v1549
          %v1551 = vpop.f32.mrb[0].mxu0
          %v1552 = vadd.f32 %v698, %v1551
          %1553 = vmatprep.mubr.bf16.mxu0 %v812
          %1554 = vmatmul.mubr.bf16.gmra.mrb[0].mxu0 %v811
          %v1555 = vpop.f32.mrb[0].mxu0
          %v1556 = vadd.f32 %v694, %v1555
          %v1557 = vpop.f32.mrb[0].mxu0
          %v1558 = vadd.f32 %v698, %v1557
          %v1559 = vpop.f32.mrb[0].mxu0
          %v1560 = vadd.f32 %v694, %v1559
          %v1561 = vpop.f32.mrb[0].mxu0
          %v1562 = vadd.f32 %v698, %v1561
          %1563 = vmatprep.mubr.bf16.mxu0 %v816
          %1564 = vmatmul.mubr.bf16.gmra.mrb[0].mxu0 %v815
          %v1565 = vpop.f32.mrb[0].mxu0
          %v1566 = vadd.f32 %v694, %v1565
          %v1567 = vpop.f32.mrb[0].mxu0
          %v1568 = vadd.f32 %v698, %v1567
          %v1569 = vpop.f32.mrb[0].mxu0
          %v1570 = vadd.f32 %v694, %v1569
          %v1571 = vpop.f32.mrb[0].mxu0
          %v1572 = vadd.f32 %v698, %v1571
          %1573 = vmatprep.mubr.bf16.mxu0 %v820
          %1574 = vmatmul.mubr.bf16.gmra.mrb[0].mxu0 %v819
          %v1575 = vpop.f32.mrb[0].mxu0
          %v1576 = vadd.f32 %v694, %v1575
          %v1577 = vpop.f32.mrb[0].mxu0
          %v1578 = vadd.f32 %v698, %v1577
          %v1579 = vpop.f32.mrb[0].mxu0
          %v1580 = vadd.f32 %v694, %v1579
          %v1581 = vpop.f32.mrb[0].mxu0
          %v1582 = vadd.f32 %v698, %v1581
          %1583 = vmatprep.mubr.bf16.mxu0 %v824
          %1584 = vmatmul.mubr.bf16.gmra.mrb[0].mxu0 %v823
          %v1585 = vpop.f32.mrb[0].mxu0
          %v1586 = vadd.f32 %v694, %v1585
          %v1587 = vpop.f32.mrb[0].mxu0
          %v1588 = vadd.f32 %v698, %v1587
          %v1589 = vpop.f32.mrb[0].mxu0
          %v1590 = vadd.f32 %v694, %v1589
          %v1591 = vpop.f32.mrb[0].mxu0
          %v1592 = vadd.f32 %v698, %v1591
          %1593 = vmatprep.mubr.bf16.mxu0 %v828
          %1594 = vmatmul.mubr.bf16.gmra.mrb[0].mxu0 %v827
          %v1595 = vpop.f32.mrb[0].mxu0
          %v1596 = vadd.f32 %v694, %v1595
          %v1597 = vpop.f32.mrb[0].mxu0
          %v1598 = vadd.f32 %v698, %v1597
          %v1599 = vpop.f32.mrb[0].mxu0
          %v1600 = vadd.f32 %v694, %v1599
          %v1601 = vpop.f32.mrb[0].mxu0
          %v1602 = vadd.f32 %v698, %v1601
          %1603 = vmatprep.mubr.bf16.mxu0 %v832
          %1604 = vmatmul.mubr.bf16.gmra.mrb[0].mxu0 %v831
          %v1605 = vpop.f32.mrb[0].mxu0
          %v1606 = vadd.f32 %v694, %v1605
          %v1607 = vpop.f32.mrb[0].mxu0
          %v1608 = vadd.f32 %v698, %v1607
          %v1609 = vpop.f32.mrb[0].mxu0
          %v1610 = vadd.f32 %v694, %v1609
          %v1611 = vpop.f32.mrb[0].mxu0
          %v1612 = vadd.f32 %v698, %v1611
          %1613 = vmatprep.mubr.bf16.mxu0 %v836
          %1614 = vmatmul.mubr.bf16.gmra.mrb[0].mxu0 %v835
          %v1615 = vpop.f32.mrb[0].mxu0
          %v1616 = vadd.f32 %v694, %v1615
          %v1617 = vpop.f32.mrb[0].mxu0
          %v1618 = vadd.f32 %v698, %v1617
          %v1619 = vpop.f32.mrb[0].mxu0
          %v1620 = vadd.f32 %v694, %v1619
          %v1621 = vpop.f32.mrb[0].mxu0
          %v1622 = vadd.f32 %v698, %v1621
          %1623 = vdwg.mxu0
          %1624 = vmatprep.subr.bf16.mxu0 %v1320
          %1625 = vmatpush1.bf16.msra.mxu0 %v1319
          %1626 = vmatprep.subr.bf16.mxu0 %v1324
          %1627 = vmatpush1.bf16.msra.mxu0 %v1323
          %1628 = vmatprep.subr.bf16.mxu0 %v1328
          %1629 = vmatpush1.bf16.msra.mxu0 %v1327
          %1630 = vmatprep.subr.bf16.mxu0 %v1332
          %1631 = vmatpush1.bf16.msra.mxu0 %v1331
          %1632 = vmatprep.subr.bf16.mxu0 %v1336
          %1633 = vmatpush1.bf16.msra.mxu0 %v1335
          %1634 = vmatprep.subr.bf16.mxu0 %v1340
          %1635 = vmatpush1.bf16.msra.mxu0 %v1339
          %1636 = vmatprep.subr.bf16.mxu0 %v1344
          %1637 = vmatpush1.bf16.msra.mxu0 %v1343
          %1638 = vmatprep.subr.bf16.mxu0 %v1348
          %1639 = vmatpush1.bf16.msra.mxu0 %v1347
          %1640 = vmatprep.subr.bf16.mxu0 %v1352
          %1641 = vmatpush1.bf16.msra.mxu0 %v1351
          %1642 = vmatprep.subr.bf16.mxu0 %v1356
          %1643 = vmatpush1.bf16.msra.mxu0 %v1355
          %1644 = vmatprep.subr.bf16.mxu0 %v1360
          %1645 = vmatpush1.bf16.msra.mxu0 %v1359
          %1646 = vmatprep.subr.bf16.mxu0 %v1364
          %1647 = vmatpush1.bf16.msra.mxu0 %v1363
          %1648 = vmatprep.subr.bf16.mxu0 %v1368
          %1649 = vmatpush1.bf16.msra.mxu0 %v1367
          %1650 = vmatprep.subr.bf16.mxu0 %v1372
          %1651 = vmatpush1.bf16.msra.mxu0 %v1371
          %1652 = vmatprep.subr.bf16.mxu0 %v1376
          %1653 = vmatpush1.bf16.msra.mxu0 %v1375
          %1654 = vmatprep.subr.bf16.mxu0 %v1380
          %1655 = vmatpush1.bf16.msra.mxu0 %v1379
          %1656 = vmatprep.mubr.bf16.mxu0 %v810
          %1657 = vmatmul.mubr.bf16.gmra.mrb[0].mxu0 %v809
          %v1658 = vpop.f32.mrb[0].mxu0
          %v1659 = vadd.f32 %v1546, %v1658
          %v1660 = vpop.f32.mrb[0].mxu0
          %v1661 = vadd.f32 %v1548, %v1660
          %v1662 = vpop.f32.mrb[0].mxu0
          %v1663 = vadd.f32 %v1550, %v1662
          %v1664 = vpop.f32.mrb[0].mxu0
          %v1665 = vadd.f32 %v1552, %v1664
          %1666 = vmatprep.mubr.bf16.mxu0 %v814
          %1667 = vmatmul.mubr.bf16.gmra.mrb[0].mxu0 %v813
          %v1668 = vpop.f32.mrb[0].mxu0
          %v1669 = vadd.f32 %v1556, %v1668
          %v1670 = vpop.f32.mrb[0].mxu0
          %v1671 = vadd.f32 %v1558, %v1670
          %v1672 = vpop.f32.mrb[0].mxu0
          %v1673 = vadd.f32 %v1560, %v1672
          %v1674 = vpop.f32.mrb[0].mxu0
          %v1675 = vadd.f32 %v1562, %v1674
          %1676 = vmatprep.mubr.bf16.mxu0 %v818
          %1677 = vmatmul.mubr.bf16.gmra.mrb[0].mxu0 %v817
          %v1678 = vpop.f32.mrb[0].mxu0
          %v1679 = vadd.f32 %v1566, %v1678
          %v1680 = vpop.f32.mrb[0].mxu0
          %v1681 = vadd.f32 %v1568, %v1680
          %v1682 = vpop.f32.mrb[0].mxu0
          %v1683 = vadd.f32 %v1570, %v1682
          %v1684 = vpop.f32.mrb[0].mxu0
          %v1685 = vadd.f32 %v1572, %v1684
          %1686 = vmatprep.mubr.bf16.mxu0 %v822
          %1687 = vmatmul.mubr.bf16.gmra.mrb[0].mxu0 %v821
          %v1688 = vpop.f32.mrb[0].mxu0
          %v1689 = vadd.f32 %v1576, %v1688
          %v1690 = vpop.f32.mrb[0].mxu0
          %v1691 = vadd.f32 %v1578, %v1690
          %v1692 = vpop.f32.mrb[0].mxu0
          %v1693 = vadd.f32 %v1580, %v1692
          %v1694 = vpop.f32.mrb[0].mxu0
          %v1695 = vadd.f32 %v1582, %v1694
          %1696 = vmatprep.mubr.bf16.mxu0 %v826
          %1697 = vmatmul.mubr.bf16.gmra.mrb[0].mxu0 %v825
          %v1698 = vpop.f32.mrb[0].mxu0
          %v1699 = vadd.f32 %v1586, %v1698
          %v1700 = vpop.f32.mrb[0].mxu0
          %v1701 = vadd.f32 %v1588, %v1700
          %v1702 = vpop.f32.mrb[0].mxu0
          %v1703 = vadd.f32 %v1590, %v1702
          %v1704 = vpop.f32.mrb[0].mxu0
          %v1705 = vadd.f32 %v1592, %v1704
          %1706 = vmatprep.mubr.bf16.mxu0 %v830
          %1707 = vmatmul.mubr.bf16.gmra.mrb[0].mxu0 %v829
          %v1708 = vpop.f32.mrb[0].mxu0
          %v1709 = vadd.f32 %v1596, %v1708
          %v1710 = vpop.f32.mrb[0].mxu0
          %v1711 = vadd.f32 %v1598, %v1710
          %v1712 = vpop.f32.mrb[0].mxu0
          %v1713 = vadd.f32 %v1600, %v1712
          %v1714 = vpop.f32.mrb[0].mxu0
          %v1715 = vadd.f32 %v1602, %v1714
          %1716 = vmatprep.mubr.bf16.mxu0 %v834
          %1717 = vmatmul.mubr.bf16.gmra.mrb[0].mxu0 %v833
          %v1718 = vpop.f32.mrb[0].mxu0
          %v1719 = vadd.f32 %v1606, %v1718
          %v1720 = vpop.f32.mrb[0].mxu0
          %v1721 = vadd.f32 %v1608, %v1720
          %v1722 = vpop.f32.mrb[0].mxu0
          %v1723 = vadd.f32 %v1610, %v1722
          %v1724 = vpop.f32.mrb[0].mxu0
          %v1725 = vadd.f32 %v1612, %v1724
          %1726 = vmatprep.mubr.bf16.mxu0 %v838
          %1727 = vmatmul.mubr.bf16.gmra.mrb[0].mxu0 %v837
          %v1728 = vpop.f32.mrb[0].mxu0
          %v1729 = vadd.f32 %v1616, %v1728
          %v1730 = vpop.f32.mrb[0].mxu0
          %v1731 = vadd.f32 %v1618, %v1730
          %v1732 = vpop.f32.mrb[0].mxu0
          %v1733 = vadd.f32 %v1620, %v1732
          %v1734 = vpop.f32.mrb[0].mxu0
          %v1735 = vadd.f32 %v1622, %v1734
          %1736 = vdwg.mxu0
          %1737 = vmatprep.subr.bf16.mxu0 %v1258
          %1738 = vmatpush1.bf16.msra.mxu0 %v1257
          %1739 = vmatprep.subr.bf16.mxu0 %v1262
          %1740 = vmatpush1.bf16.msra.mxu0 %v1261
          %1741 = vmatprep.subr.bf16.mxu0 %v1266
          %1742 = vmatpush1.bf16.msra.mxu0 %v1265
          %1743 = vmatprep.subr.bf16.mxu0 %v1270
          %1744 = vmatpush1.bf16.msra.mxu0 %v1269
          %1745 = vmatprep.subr.bf16.mxu0 %v1274
          %1746 = vmatpush1.bf16.msra.mxu0 %v1273
          %1747 = vmatprep.subr.bf16.mxu0 %v1278
          %1748 = vmatpush1.bf16.msra.mxu0 %v1277
          %1749 = vmatprep.subr.bf16.mxu0 %v1282
          %1750 = vmatpush1.bf16.msra.mxu0 %v1281
          %1751 = vmatprep.subr.bf16.mxu0 %v1286
          %1752 = vmatpush1.bf16.msra.mxu0 %v1285
          %1753 = vmatprep.subr.bf16.mxu0 %v1290
          %1754 = vmatpush1.bf16.msra.mxu0 %v1289
          %1755 = vmatprep.subr.bf16.mxu0 %v1294
          %1756 = vmatpush1.bf16.msra.mxu0 %v1293
          %1757 = vmatprep.subr.bf16.mxu0 %v1298
          %1758 = vmatpush1.bf16.msra.mxu0 %v1297
          %1759 = vmatprep.subr.bf16.mxu0 %v1302
          %1760 = vmatpush1.bf16.msra.mxu0 %v1301
          %1761 = vmatprep.subr.bf16.mxu0 %v1306
          %1762 = vmatpush1.bf16.msra.mxu0 %v1305
          %1763 = vmatprep.subr.bf16.mxu0 %v1310
          %1764 = vmatpush1.bf16.msra.mxu0 %v1309
          %1765 = vmatprep.subr.bf16.mxu0 %v1314
          %1766 = vmatpush1.bf16.msra.mxu0 %v1313
          %1767 = vmatprep.subr.bf16.mxu0 %v1318
          %1768 = vmatpush1.bf16.msra.mxu0 %v1317
          %1769 = vmatprep.mubr.bf16.mxu0 %v808
          %1770 = vmatmul.mubr.bf16.gmra.mrb[0].mxu0 %v807
          %v1771 = vpop.f32.mrb[0].mxu0
          %v1772 = vadd.f32 %v702, %v1771
          %v1773 = vpop.f32.mrb[0].mxu0
          %v1774 = vadd.f32 %v706, %v1773
          %v1775 = vpop.f32.mrb[0].mxu0
          %v1776 = vadd.f32 %v702, %v1775
          %v1777 = vpop.f32.mrb[0].mxu0
          %v1778 = vadd.f32 %v706, %v1777
          %1779 = vmatprep.mubr.bf16.mxu0 %v812
          %1780 = vmatmul.mubr.bf16.gmra.mrb[0].mxu0 %v811
          %v1781 = vpop.f32.mrb[0].mxu0
          %v1782 = vadd.f32 %v702, %v1781
          %v1783 = vpop.f32.mrb[0].mxu0
          %v1784 = vadd.f32 %v706, %v1783
          %v1785 = vpop.f32.mrb[0].mxu0
          %v1786 = vadd.f32 %v702, %v1785
          %v1787 = vpop.f32.mrb[0].mxu0
          %v1788 = vadd.f32 %v706, %v1787
          %1789 = vmatprep.mubr.bf16.mxu0 %v816
          %1790 = vmatmul.mubr.bf16.gmra.mrb[0].mxu0 %v815
          %v1791 = vpop.f32.mrb[0].mxu0
          %v1792 = vadd.f32 %v702, %v1791
          %v1793 = vpop.f32.mrb[0].mxu0
          %v1794 = vadd.f32 %v706, %v1793
          %v1795 = vpop.f32.mrb[0].mxu0
          %v1796 = vadd.f32 %v702, %v1795
          %v1797 = vpop.f32.mrb[0].mxu0
          %v1798 = vadd.f32 %v706, %v1797
          %1799 = vmatprep.mubr.bf16.mxu0 %v820
          %1800 = vmatmul.mubr.bf16.gmra.mrb[0].mxu0 %v819
          %v1801 = vpop.f32.mrb[0].mxu0
          %v1802 = vadd.f32 %v702, %v1801
          %v1803 = vpop.f32.mrb[0].mxu0
          %v1804 = vadd.f32 %v706, %v1803
          %v1805 = vpop.f32.mrb[0].mxu0
          %v1806 = vadd.f32 %v702, %v1805
          %v1807 = vpop.f32.mrb[0].mxu0
          %v1808 = vadd.f32 %v706, %v1807
          %1809 = vmatprep.mubr.bf16.mxu0 %v824
          %1810 = vmatmul.mubr.bf16.gmra.mrb[0].mxu0 %v823
          %v1811 = vpop.f32.mrb[0].mxu0
          %v1812 = vadd.f32 %v702, %v1811
          %v1813 = vpop.f32.mrb[0].mxu0
          %v1814 = vadd.f32 %v706, %v1813
          %v1815 = vpop.f32.mrb[0].mxu0
          %v1816 = vadd.f32 %v702, %v1815
          %v1817 = vpop.f32.mrb[0].mxu0
          %v1818 = vadd.f32 %v706, %v1817
          %1819 = vmatprep.mubr.bf16.mxu0 %v828
          %1820 = vmatmul.mubr.bf16.gmra.mrb[0].mxu0 %v827
          %v1821 = vpop.f32.mrb[0].mxu0
          %v1822 = vadd.f32 %v702, %v1821
          %v1823 = vpop.f32.mrb[0].mxu0
          %v1824 = vadd.f32 %v706, %v1823
          %v1825 = vpop.f32.mrb[0].mxu0
          %v1826 = vadd.f32 %v702, %v1825
          %v1827 = vpop.f32.mrb[0].mxu0
          %v1828 = vadd.f32 %v706, %v1827
          %1829 = vmatprep.mubr.bf16.mxu0 %v832
          %1830 = vmatmul.mubr.bf16.gmra.mrb[0].mxu0 %v831
          %v1831 = vpop.f32.mrb[0].mxu0
          %v1832 = vadd.f32 %v702, %v1831
          %v1833 = vpop.f32.mrb[0].mxu0
          %v1834 = vadd.f32 %v706, %v1833
          %v1835 = vpop.f32.mrb[0].mxu0
          %v1836 = vadd.f32 %v702, %v1835
          %v1837 = vpop.f32.mrb[0].mxu0
          %v1838 = vadd.f32 %v706, %v1837
          %1839 = vmatprep.mubr.bf16.mxu0 %v836
          %1840 = vmatmul.mubr.bf16.gmra.mrb[0].mxu0 %v835
          %v1841 = vpop.f32.mrb[0].mxu0
          %v1842 = vadd.f32 %v702, %v1841
          %v1843 = vpop.f32.mrb[0].mxu0
          %v1844 = vadd.f32 %v706, %v1843
          %v1845 = vpop.f32.mrb[0].mxu0
          %v1846 = vadd.f32 %v702, %v1845
          %v1847 = vpop.f32.mrb[0].mxu0
          %v1848 = vadd.f32 %v706, %v1847
          %1849 = vdwg.mxu0
          %1850 = vmatprep.subr.bf16.mxu0 %v1322
          %1851 = vmatpush1.bf16.msra.mxu0 %v1321
          %1852 = vmatprep.subr.bf16.mxu0 %v1326
          %1853 = vmatpush1.bf16.msra.mxu0 %v1325
          %1854 = vmatprep.subr.bf16.mxu0 %v1330
          %1855 = vmatpush1.bf16.msra.mxu0 %v1329
          %1856 = vmatprep.subr.bf16.mxu0 %v1334
          %1857 = vmatpush1.bf16.msra.mxu0 %v1333
          %1858 = vmatprep.subr.bf16.mxu0 %v1338
          %1859 = vmatpush1.bf16.msra.mxu0 %v1337
          %1860 = vmatprep.subr.bf16.mxu0 %v1342
          %1861 = vmatpush1.bf16.msra.mxu0 %v1341
          %1862 = vmatprep.subr.bf16.mxu0 %v1346
          %1863 = vmatpush1.bf16.msra.mxu0 %v1345
          %1864 = vmatprep.subr.bf16.mxu0 %v1350
          %1865 = vmatpush1.bf16.msra.mxu0 %v1349
          %1866 = vmatprep.subr.bf16.mxu0 %v1354
          %1867 = vmatpush1.bf16.msra.mxu0 %v1353
          %1868 = vmatprep.subr.bf16.mxu0 %v1358
          %1869 = vmatpush1.bf16.msra.mxu0 %v1357
          %1870 = vmatprep.subr.bf16.mxu0 %v1362
          %1871 = vmatpush1.bf16.msra.mxu0 %v1361
          %1872 = vmatprep.subr.bf16.mxu0 %v1366
          %1873 = vmatpush1.bf16.msra.mxu0 %v1365
          %1874 = vmatprep.subr.bf16.mxu0 %v1370
          %1875 = vmatpush1.bf16.msra.mxu0 %v1369
          %1876 = vmatprep.subr.bf16.mxu0 %v1374
          %1877 = vmatpush1.bf16.msra.mxu0 %v1373
          %1878 = vmatprep.subr.bf16.mxu0 %v1378
          %1879 = vmatpush1.bf16.msra.mxu0 %v1377
          %1880 = vmatprep.subr.bf16.mxu0 %v1382
          %1881 = vmatpush1.bf16.msra.mxu0 %v1381
          %1882 = vmatprep.mubr.bf16.mxu0 %v810
          %1883 = vmatmul.mubr.bf16.gmra.mrb[0].mxu0 %v809
          %v1884 = vpop.f32.mrb[0].mxu0
          %v1885 = vadd.f32 %v1772, %v1884
          %v1886 = vpop.f32.mrb[0].mxu0
          %v1887 = vadd.f32 %v1774, %v1886
          %v1888 = vpop.f32.mrb[0].mxu0
          %v1889 = vadd.f32 %v1776, %v1888
          %v1890 = vpop.f32.mrb[0].mxu0
          %v1891 = vadd.f32 %v1778, %v1890
          %1892 = vmatprep.mubr.bf16.mxu0 %v814
          %1893 = vmatmul.mubr.bf16.gmra.mrb[0].mxu0 %v813
          %v1894 = vpop.f32.mrb[0].mxu0
          %v1895 = vadd.f32 %v1782, %v1894
          %v1896 = vpop.f32.mrb[0].mxu0
          %v1897 = vadd.f32 %v1784, %v1896
          %v1898 = vpop.f32.mrb[0].mxu0
          %v1899 = vadd.f32 %v1786, %v1898
          %v1900 = vpop.f32.mrb[0].mxu0
          %v1901 = vadd.f32 %v1788, %v1900
          %1902 = vmatprep.mubr.bf16.mxu0 %v818
          %1903 = vmatmul.mubr.bf16.gmra.mrb[0].mxu0 %v817
          %v1904 = vpop.f32.mrb[0].mxu0
          %v1905 = vadd.f32 %v1792, %v1904
          %v1906 = vpop.f32.mrb[0].mxu0
          %v1907 = vadd.f32 %v1794, %v1906
          %v1908 = vpop.f32.mrb[0].mxu0
          %v1909 = vadd.f32 %v1796, %v1908
          %v1910 = vpop.f32.mrb[0].mxu0
          %v1911 = vadd.f32 %v1798, %v1910
          %1912 = vmatprep.mubr.bf16.mxu0 %v822
          %1913 = vmatmul.mubr.bf16.gmra.mrb[0].mxu0 %v821
          %v1914 = vpop.f32.mrb[0].mxu0
          %v1915 = vadd.f32 %v1802, %v1914
          %v1916 = vpop.f32.mrb[0].mxu0
          %v1917 = vadd.f32 %v1804, %v1916
          %v1918 = vpop.f32.mrb[0].mxu0
          %v1919 = vadd.f32 %v1806, %v1918
          %v1920 = vpop.f32.mrb[0].mxu0
          %v1921 = vadd.f32 %v1808, %v1920
          %1922 = vmatprep.mubr.bf16.mxu0 %v826
          %1923 = vmatmul.mubr.bf16.gmra.mrb[0].mxu0 %v825
          %v1924 = vpop.f32.mrb[0].mxu0
          %v1925 = vadd.f32 %v1812, %v1924
          %v1926 = vpop.f32.mrb[0].mxu0
          %v1927 = vadd.f32 %v1814, %v1926
          %v1928 = vpop.f32.mrb[0].mxu0
          %v1929 = vadd.f32 %v1816, %v1928
          %v1930 = vpop.f32.mrb[0].mxu0
          %v1931 = vadd.f32 %v1818, %v1930
          %1932 = vmatprep.mubr.bf16.mxu0 %v830
          %1933 = vmatmul.mubr.bf16.gmra.mrb[0].mxu0 %v829
          %v1934 = vpop.f32.mrb[0].mxu0
          %v1935 = vadd.f32 %v1822, %v1934
          %v1936 = vpop.f32.mrb[0].mxu0
          %v1937 = vadd.f32 %v1824, %v1936
          %v1938 = vpop.f32.mrb[0].mxu0
          %v1939 = vadd.f32 %v1826, %v1938
          %v1940 = vpop.f32.mrb[0].mxu0
          %v1941 = vadd.f32 %v1828, %v1940
          %1942 = vmatprep.mubr.bf16.mxu0 %v834
          %1943 = vmatmul.mubr.bf16.gmra.mrb[0].mxu0 %v833
          %v1944 = vpop.f32.mrb[0].mxu0
          %v1945 = vadd.f32 %v1832, %v1944
          %v1946 = vpop.f32.mrb[0].mxu0
          %v1947 = vadd.f32 %v1834, %v1946
          %v1948 = vpop.f32.mrb[0].mxu0
          %v1949 = vadd.f32 %v1836, %v1948
          %v1950 = vpop.f32.mrb[0].mxu0
          %v1951 = vadd.f32 %v1838, %v1950
          %1952 = vmatprep.mubr.bf16.mxu0 %v838
          %1953 = vmatmul.mubr.bf16.gmra.mrb[0].mxu0 %v837
          %v1954 = vpop.f32.mrb[0].mxu0
          %v1955 = vadd.f32 %v1842, %v1954
          %v1956 = vpop.f32.mrb[0].mxu0
          %v1957 = vadd.f32 %v1844, %v1956
          %v1958 = vpop.f32.mrb[0].mxu0
          %v1959 = vadd.f32 %v1846, %v1958
          %v1960 = vpop.f32.mrb[0].mxu0
          %v1961 = vadd.f32 %v1848, %v1960
          %1962 = vdwg.mxu0
          %v1963 = vld [vmem:[%s457] sm:$0xff]
          %v1964 = vld [vmem:[%s457 + $0x8] sm:$0xff]
          %v1965 = vld [vmem:[%s457 + $0x10] sm:$0xff]
          %v1966 = vld [vmem:[%s457 + $0x18] sm:$0xff]
          %v1967 = vld [vmem:[%s457 + $0x20] sm:$0xff]
          %v1968 = vld [vmem:[%s457 + $0x28] sm:$0xff]
          %v1969 = vld [vmem:[%s457 + $0x30] sm:$0xff]
          %v1970 = vld [vmem:[%s457 + $0x38] sm:$0xff]
          %v1971 = vld [vmem:[%s457 + $0x40] sm:$0xff]
          %v1972 = vld [vmem:[%s457 + $0x48] sm:$0xff]
          %v1973 = vld [vmem:[%s457 + $0x50] sm:$0xff]
          %v1974 = vld [vmem:[%s457 + $0x58] sm:$0xff]
          %v1975 = vld [vmem:[%s457 + $0x60] sm:$0xff]
          %v1976 = vld [vmem:[%s457 + $0x68] sm:$0xff]
          %v1977 = vld [vmem:[%s457 + $0x70] sm:$0xff]
          %v1978 = vld [vmem:[%s457 + $0x78] sm:$0xff]
          %v1979 = vld [vmem:[%s466] sm:$0xff]
          %v1980 = vld [vmem:[%s466 + $0x8] sm:$0xff]
          %v1981 = vld [vmem:[%s466 + $0x10] sm:$0xff]
          %v1982 = vld [vmem:[%s466 + $0x18] sm:$0xff]
          %v1983 = vld [vmem:[%s466 + $0x20] sm:$0xff]
          %v1984 = vld [vmem:[%s466 + $0x28] sm:$0xff]
          %v1985 = vld [vmem:[%s466 + $0x30] sm:$0xff]
          %v1986 = vld [vmem:[%s466 + $0x38] sm:$0xff]
          %v1987 = vld [vmem:[%s466 + $0x40] sm:$0xff]
          %v1988 = vld [vmem:[%s466 + $0x48] sm:$0xff]
          %v1989 = vld [vmem:[%s466 + $0x50] sm:$0xff]
          %v1990 = vld [vmem:[%s466 + $0x58] sm:$0xff]
          %v1991 = vld [vmem:[%s466 + $0x60] sm:$0xff]
          %v1992 = vld [vmem:[%s466 + $0x68] sm:$0xff]
          %v1993 = vld [vmem:[%s466 + $0x70] sm:$0xff]
          %v1994 = vld [vmem:[%s466 + $0x78] sm:$0xff]
          %v1995 = vmul.f32 %v1659, %v1963
          %v1996 = vmul.f32 %v1663, %v1964
          %v1997 = vmul.f32 %v1669, %v1965
          %v1998 = vmul.f32 %v1673, %v1966
          %v1999 = vmul.f32 %v1679, %v1967
          %v2000 = vmul.f32 %v1683, %v1968
          %v2001 = vmul.f32 %v1689, %v1969
          %v2002 = vmul.f32 %v1693, %v1970
          %v2003 = vmul.f32 %v1699, %v1971
          %v2004 = vmul.f32 %v1703, %v1972
          %v2005 = vmul.f32 %v1709, %v1973
          %v2006 = vmul.f32 %v1713, %v1974
          %v2007 = vmul.f32 %v1719, %v1975
          %v2008 = vmul.f32 %v1723, %v1976
          %v2009 = vmul.f32 %v1729, %v1977
          %v2010 = vmul.f32 %v1733, %v1978
          %2011 = vrot.lane.b32.xlu0 %v1659, 64
          %v2012 = vpop.permute.xlu0 %2011
          %2013 = vrot.lane.b32.xlu0 %v1663, 64
          %v2014 = vpop.permute.xlu0 %2013
          %2015 = vrot.lane.b32.xlu0 %v1669, 64
          %v2016 = vpop.permute.xlu0 %2015
          %2017 = vrot.lane.b32.xlu0 %v1673, 64
          %v2018 = vpop.permute.xlu0 %2017
          %2019 = vrot.lane.b32.xlu0 %v1679, 64
          %v2020 = vpop.permute.xlu0 %2019
          %2021 = vrot.lane.b32.xlu0 %v1683, 64
          %v2022 = vpop.permute.xlu0 %2021
          %2023 = vrot.lane.b32.xlu0 %v1689, 64
          %v2024 = vpop.permute.xlu0 %2023
          %2025 = vrot.lane.b32.xlu0 %v1693, 64
          %v2026 = vpop.permute.xlu0 %2025
          %2027 = vrot.lane.b32.xlu0 %v1699, 64
          %v2028 = vpop.permute.xlu0 %2027
          %2029 = vrot.lane.b32.xlu0 %v1703, 64
          %v2030 = vpop.permute.xlu0 %2029
          %2031 = vrot.lane.b32.xlu0 %v1709, 64
          %v2032 = vpop.permute.xlu0 %2031
          %2033 = vrot.lane.b32.xlu0 %v1713, 64
          %v2034 = vpop.permute.xlu0 %2033
          %2035 = vrot.lane.b32.xlu0 %v1719, 64
          %v2036 = vpop.permute.xlu0 %2035
          %2037 = vrot.lane.b32.xlu0 %v1723, 64
          %v2038 = vpop.permute.xlu0 %2037
          %2039 = vrot.lane.b32.xlu0 %v1729, 64
          %v2040 = vpop.permute.xlu0 %2039
          %2041 = vrot.lane.b32.xlu0 %v1733, 64
          %v2042 = vpop.permute.xlu0 %2041
          %v2043 = vmul.f32 %v2012, %v1979
          %v2044 = vmul.f32 %v2014, %v1980
          %v2045 = vmul.f32 %v2016, %v1981
          %v2046 = vmul.f32 %v2018, %v1982
          %v2047 = vmul.f32 %v2020, %v1983
          %v2048 = vmul.f32 %v2022, %v1984
          %v2049 = vmul.f32 %v2024, %v1985
          %v2050 = vmul.f32 %v2026, %v1986
          %v2051 = vmul.f32 %v2028, %v1987
          %v2052 = vmul.f32 %v2030, %v1988
          %v2053 = vmul.f32 %v2032, %v1989
          %v2054 = vmul.f32 %v2034, %v1990
          %v2055 = vmul.f32 %v2036, %v1991
          %v2056 = vmul.f32 %v2038, %v1992
          %v2057 = vmul.f32 %v2040, %v1993
          %v2058 = vmul.f32 %v2042, %v1994
          %v2059 = vadd.f32 %v1995, %v2043
          %v2060 = vadd.f32 %v1996, %v2044
          %v2061 = vadd.f32 %v1997, %v2045
          %v2062 = vadd.f32 %v1998, %v2046
          %v2063 = vadd.f32 %v1999, %v2047
          %v2064 = vadd.f32 %v2000, %v2048
          %v2065 = vadd.f32 %v2001, %v2049
          %v2066 = vadd.f32 %v2002, %v2050
          %v2067 = vadd.f32 %v2003, %v2051
          %v2068 = vadd.f32 %v2004, %v2052
          %v2069 = vadd.f32 %v2005, %v2053
          %v2070 = vadd.f32 %v2006, %v2054
          %v2071 = vadd.f32 %v2007, %v2055
          %v2072 = vadd.f32 %v2008, %v2056
          %v2073 = vadd.f32 %v2009, %v2057
          %v2074 = vadd.f32 %v2010, %v2058
          %v2075 = vmul.f32 %v1661, %v1963
          %v2076 = vmul.f32 %v1665, %v1964
          %v2077 = vmul.f32 %v1671, %v1965
          %v2078 = vmul.f32 %v1675, %v1966
          %v2079 = vmul.f32 %v1681, %v1967
          %v2080 = vmul.f32 %v1685, %v1968
          %v2081 = vmul.f32 %v1691, %v1969
          %v2082 = vmul.f32 %v1695, %v1970
          %v2083 = vmul.f32 %v1701, %v1971
          %v2084 = vmul.f32 %v1705, %v1972
          %v2085 = vmul.f32 %v1711, %v1973
          %v2086 = vmul.f32 %v1715, %v1974
          %v2087 = vmul.f32 %v1721, %v1975
          %v2088 = vmul.f32 %v1725, %v1976
          %v2089 = vmul.f32 %v1731, %v1977
          %v2090 = vmul.f32 %v1735, %v1978
          %2091 = vrot.lane.b32.xlu0 %v1661, 64
          %v2092 = vpop.permute.xlu0 %2091
          %2093 = vrot.lane.b32.xlu0 %v1665, 64
          %v2094 = vpop.permute.xlu0 %2093
          %2095 = vrot.lane.b32.xlu0 %v1671, 64
          %v2096 = vpop.permute.xlu0 %2095
          %2097 = vrot.lane.b32.xlu0 %v1675, 64
          %v2098 = vpop.permute.xlu0 %2097
          %2099 = vrot.lane.b32.xlu0 %v1681, 64
          %v2100 = vpop.permute.xlu0 %2099
          %2101 = vrot.lane.b32.xlu0 %v1685, 64
          %v2102 = vpop.permute.xlu0 %2101
          %2103 = vrot.lane.b32.xlu0 %v1691, 64
          %v2104 = vpop.permute.xlu0 %2103
          %2105 = vrot.lane.b32.xlu0 %v1695, 64
          %v2106 = vpop.permute.xlu0 %2105
          %2107 = vrot.lane.b32.xlu0 %v1701, 64
          %v2108 = vpop.permute.xlu0 %2107
          %2109 = vrot.lane.b32.xlu0 %v1705, 64
          %v2110 = vpop.permute.xlu0 %2109
          %2111 = vrot.lane.b32.xlu0 %v1711, 64
          %v2112 = vpop.permute.xlu0 %2111
          %2113 = vrot.lane.b32.xlu0 %v1715, 64
          %v2114 = vpop.permute.xlu0 %2113
          %2115 = vrot.lane.b32.xlu0 %v1721, 64
          %v2116 = vpop.permute.xlu0 %2115
          %2117 = vrot.lane.b32.xlu0 %v1725, 64
          %v2118 = vpop.permute.xlu0 %2117
          %2119 = vrot.lane.b32.xlu0 %v1731, 64
          %v2120 = vpop.permute.xlu0 %2119
          %2121 = vrot.lane.b32.xlu0 %v1735, 64
          %v2122 = vpop.permute.xlu0 %2121
          %v2123 = vmul.f32 %v2092, %v1979
          %v2124 = vmul.f32 %v2094, %v1980
          %v2125 = vmul.f32 %v2096, %v1981
          %v2126 = vmul.f32 %v2098, %v1982
          %v2127 = vmul.f32 %v2100, %v1983
          %v2128 = vmul.f32 %v2102, %v1984
          %v2129 = vmul.f32 %v2104, %v1985
          %v2130 = vmul.f32 %v2106, %v1986
          %v2131 = vmul.f32 %v2108, %v1987
          %v2132 = vmul.f32 %v2110, %v1988
          %v2133 = vmul.f32 %v2112, %v1989
          %v2134 = vmul.f32 %v2114, %v1990
          %v2135 = vmul.f32 %v2116, %v1991
          %v2136 = vmul.f32 %v2118, %v1992
          %v2137 = vmul.f32 %v2120, %v1993
          %v2138 = vmul.f32 %v2122, %v1994
          %v2139 = vadd.f32 %v2075, %v2123
          %v2140 = vadd.f32 %v2076, %v2124
          %v2141 = vadd.f32 %v2077, %v2125
          %v2142 = vadd.f32 %v2078, %v2126
          %v2143 = vadd.f32 %v2079, %v2127
          %v2144 = vadd.f32 %v2080, %v2128
          %v2145 = vadd.f32 %v2081, %v2129
          %v2146 = vadd.f32 %v2082, %v2130
          %v2147 = vadd.f32 %v2083, %v2131
          %v2148 = vadd.f32 %v2084, %v2132
          %v2149 = vadd.f32 %v2085, %v2133
          %v2150 = vadd.f32 %v2086, %v2134
          %v2151 = vadd.f32 %v2087, %v2135
          %v2152 = vadd.f32 %v2088, %v2136
          %v2153 = vadd.f32 %v2089, %v2137
          %v2154 = vadd.f32 %v2090, %v2138
          %v2155 = vpack.c.bf16 %v2060, %v2059
          %v2156 = vpack.c.bf16 %v2140, %v2139
          %v2157 = vpack.c.bf16 %v1889, %v1885
          %v2158 = vpack.c.bf16 %v1891, %v1887
          %v2159 = vpack.c.bf16 %v2062, %v2061
          %v2160 = vpack.c.bf16 %v2142, %v2141
          %v2161 = vpack.c.bf16 %v1899, %v1895
          %v2162 = vpack.c.bf16 %v1901, %v1897
          %v2163 = vpack.c.bf16 %v2064, %v2063
          %v2164 = vpack.c.bf16 %v2144, %v2143
          %v2165 = vpack.c.bf16 %v1909, %v1905
          %v2166 = vpack.c.bf16 %v1911, %v1907
          %v2167 = vpack.c.bf16 %v2066, %v2065
          %v2168 = vpack.c.bf16 %v2146, %v2145
          %v2169 = vpack.c.bf16 %v1919, %v1915
          %v2170 = vpack.c.bf16 %v1921, %v1917
          %v2171 = vpack.c.bf16 %v2068, %v2067
          %v2172 = vpack.c.bf16 %v2148, %v2147
          %v2173 = vpack.c.bf16 %v1929, %v1925
          %v2174 = vpack.c.bf16 %v1931, %v1927
          %v2175 = vpack.c.bf16 %v2070, %v2069
          %v2176 = vpack.c.bf16 %v2150, %v2149
          %v2177 = vpack.c.bf16 %v1939, %v1935
          %v2178 = vpack.c.bf16 %v1941, %v1937
          %v2179 = vpack.c.bf16 %v2072, %v2071
          %v2180 = vpack.c.bf16 %v2152, %v2151
          %v2181 = vpack.c.bf16 %v1949, %v1945
          %v2182 = vpack.c.bf16 %v1951, %v1947
          %v2183 = vpack.c.bf16 %v2074, %v2073
          %v2184 = vpack.c.bf16 %v2154, %v2153
          %v2185 = vpack.c.bf16 %v1959, %v1955
          %v2186 = vpack.c.bf16 %v1961, %v1957
          %s2187 = smul.u32 %s40, 32
          %s2188 = smul.addr %s2187, 8
          %s2189 = scalar_lea.vmem [#allocation2], %s2188
          %2190 = vst [vmem:[%s2189] sm:$0xff] %v2155
          %2191 = vst [vmem:[%s2189 + $0x8] sm:$0xff] %v2156
          %2192 = vst [vmem:[%s2189 + $0x10] sm:$0xff] %v2157
          %2193 = vst [vmem:[%s2189 + $0x18] sm:$0xff] %v2158
          %2194 = vst [vmem:[%s2189 + $0x20] sm:$0xff] %v2159
          %2195 = vst [vmem:[%s2189 + $0x28] sm:$0xff] %v2160
          %2196 = vst [vmem:[%s2189 + $0x30] sm:$0xff] %v2161
          %2197 = vst [vmem:[%s2189 + $0x38] sm:$0xff] %v2162
          %2198 = vst [vmem:[%s2189 + $0x40] sm:$0xff] %v2163
          %2199 = vst [vmem:[%s2189 + $0x48] sm:$0xff] %v2164
          %2200 = vst [vmem:[%s2189 + $0x50] sm:$0xff] %v2165
          %2201 = vst [vmem:[%s2189 + $0x58] sm:$0xff] %v2166
          %2202 = vst [vmem:[%s2189 + $0x60] sm:$0xff] %v2167
          %2203 = vst [vmem:[%s2189 + $0x68] sm:$0xff] %v2168
          %2204 = vst [vmem:[%s2189 + $0x70] sm:$0xff] %v2169
          %2205 = vst [vmem:[%s2189 + $0x78] sm:$0xff] %v2170
          %2206 = vst [vmem:[%s2189 + $0x80] sm:$0xff] %v2171
          %2207 = vst [vmem:[%s2189 + $0x88] sm:$0xff] %v2172
          %2208 = vst [vmem:[%s2189 + $0x90] sm:$0xff] %v2173
          %2209 = vst [vmem:[%s2189 + $0x98] sm:$0xff] %v2174
          %2210 = vst [vmem:[%s2189 + $0xa0] sm:$0xff] %v2175
          %2211 = vst [vmem:[%s2189 + $0xa8] sm:$0xff] %v2176
          %2212 = vst [vmem:[%s2189 + $0xb0] sm:$0xff] %v2177
          %2213 = vst [vmem:[%s2189 + $0xb8] sm:$0xff] %v2178
          %2214 = vst [vmem:[%s2189 + $0xc0] sm:$0xff] %v2179
          %2215 = vst [vmem:[%s2189 + $0xc8] sm:$0xff] %v2180
          %2216 = vst [vmem:[%s2189 + $0xd0] sm:$0xff] %v2181
          %2217 = vst [vmem:[%s2189 + $0xd8] sm:$0xff] %v2182
          %2218 = vst [vmem:[%s2189 + $0xe0] sm:$0xff] %v2183
          %2219 = vst [vmem:[%s2189 + $0xe8] sm:$0xff] %v2184
          %2220 = vst [vmem:[%s2189 + $0xf0] sm:$0xff] %v2185
          %2221 = vst [vmem:[%s2189 + $0xf8] sm:$0xff] %v2186
        $region80: #{tpu_custom_call.1} parent=47 // pred_fallthru
          _
        %s2222 = sshra.s32 %s524, 3
        %s2223 = sand.u32 %s524, 7
        %s2224 = smul.u32 %s2222, 4
        %s2225 = smul.addr %s2224, 4
        %s2226 = scalar_lea.vmem %s417, %s2225 [#allocation4]
        %v2227 = vld [vmem:[%s2226] sm:$0xff]
        %v2228 = vld [vmem:[%s2226 + $0x8] sm:$0xff]
        %v2229 = vld [vmem:[%s2226 + $0x10] sm:$0xff]
        %v2230 = vld [vmem:[%s2226 + $0x18] sm:$0xff]
        %v2231 = vld [vmem:[%s2226 + $0x20] sm:$0xff]
        %v2232 = vld [vmem:[%s2226 + $0x28] sm:$0xff]
        %v2233 = vld [vmem:[%s2226 + $0x30] sm:$0xff]
        %v2234 = vld [vmem:[%s2226 + $0x38] sm:$0xff]
        %v2235 = vld [vmem:[%s2226 + $0x40] sm:$0xff]
        %v2236 = vld [vmem:[%s2226 + $0x48] sm:$0xff]
        %v2237 = vld [vmem:[%s2226 + $0x50] sm:$0xff]
        %v2238 = vld [vmem:[%s2226 + $0x58] sm:$0xff]
        %v2239 = vld [vmem:[%s2226 + $0x60] sm:$0xff]
        %v2240 = vld [vmem:[%s2226 + $0x68] sm:$0xff]
        %v2241 = vld [vmem:[%s2226 + $0x70] sm:$0xff]
        %v2242 = vld [vmem:[%s2226 + $0x78] sm:$0xff]
        %v2243 = vld [vmem:[%s426] sm:$0xff]
        %v2244 = vld [vmem:[%s426 + $0x18] sm:$0xff]
        %v2245 = vld [vmem:[%s426 + $0x30] sm:$0xff]
        %v2246 = vld [vmem:[%s426 + $0x48] sm:$0xff]
        %v2247 = vld [vmem:[%s426 + $0x60] sm:$0xff]
        %v2248 = vld [vmem:[%s426 + $0x78] sm:$0xff]
        %v2249 = vld [vmem:[%s426 + $0x90] sm:$0xff]
        %v2250 = vld [vmem:[%s426 + $0xa8] sm:$0xff]
        %v2251 = vld [vmem:[%s426 + $0xc0] sm:$0xff]
        %v2252 = vld [vmem:[%s426 + $0xd8] sm:$0xff]
        %v2253 = vld [vmem:[%s426 + $0xf0] sm:$0xff]
        %v2254 = vld [vmem:[%s426 + $0x108] sm:$0xff]
        %v2255 = vld [vmem:[%s426 + $0x120] sm:$0xff]
        %v2256 = vld [vmem:[%s426 + $0x138] sm:$0xff]
        %v2257 = vld [vmem:[%s426 + $0x150] sm:$0xff]
        %v2258 = vld [vmem:[%s426 + $0x168] sm:$0xff]
        %v2259 = vld [vmem:[%s426 + $0x180] sm:$0xff]
        %v2260 = vld [vmem:[%s426 + $0x198] sm:$0xff]
        %v2261 = vld [vmem:[%s426 + $0x1b0] sm:$0xff]
        %v2262 = vld [vmem:[%s426 + $0x1c8] sm:$0xff]
        %v2263 = vld [vmem:[%s426 + $0x1e0] sm:$0xff]
        %v2264 = vld [vmem:[%s426 + $0x1f8] sm:$0xff]
        %v2265 = vld [vmem:[%s426 + $0x210] sm:$0xff]
        %v2266 = vld [vmem:[%s426 + $0x228] sm:$0xff]
        %v2267 = vld [vmem:[%s426 + $0x240] sm:$0xff]
        %v2268 = vld [vmem:[%s426 + $0x258] sm:$0xff]
        %v2269 = vld [vmem:[%s426 + $0x270] sm:$0xff]
        %v2270 = vld [vmem:[%s426 + $0x288] sm:$0xff]
        %v2271 = vld [vmem:[%s426 + $0x2a0] sm:$0xff]
        %v2272 = vld [vmem:[%s426 + $0x2b8] sm:$0xff]
        %v2273 = vld [vmem:[%s426 + $0x2d0] sm:$0xff]
        %v2274 = vld [vmem:[%s426 + $0x2e8] sm:$0xff]
        %v2275 = vld [vmem:[%s426 + $0x300] sm:$0xff]
        %v2276 = vld [vmem:[%s426 + $0x318] sm:$0xff]
        %v2277 = vld [vmem:[%s426 + $0x330] sm:$0xff]
        %v2278 = vld [vmem:[%s426 + $0x348] sm:$0xff]
        %v2279 = vld [vmem:[%s426 + $0x360] sm:$0xff]
        %v2280 = vld [vmem:[%s426 + $0x378] sm:$0xff]
        %v2281 = vld [vmem:[%s426 + $0x390] sm:$0xff]
        %v2282 = vld [vmem:[%s426 + $0x3a8] sm:$0xff]
        %v2283 = vld [vmem:[%s426 + $0x3c0] sm:$0xff]
        %v2284 = vld [vmem:[%s426 + $0x3d8] sm:$0xff]
        %v2285 = vld [vmem:[%s426 + $0x3f0] sm:$0xff]
        %v2286 = vld [vmem:[%s426 + $0x408] sm:$0xff]
        %v2287 = vld [vmem:[%s426 + $0x420] sm:$0xff]
        %v2288 = vld [vmem:[%s426 + $0x438] sm:$0xff]
        %v2289 = vld [vmem:[%s426 + $0x450] sm:$0xff]
        %v2290 = vld [vmem:[%s426 + $0x468] sm:$0xff]
        %v2291 = vld [vmem:[%s426 + $0x480] sm:$0xff]
        %v2292 = vld [vmem:[%s426 + $0x498] sm:$0xff]
        %v2293 = vld [vmem:[%s426 + $0x4b0] sm:$0xff]
        %v2294 = vld [vmem:[%s426 + $0x4c8] sm:$0xff]
        %v2295 = vld [vmem:[%s426 + $0x4e0] sm:$0xff]
        %v2296 = vld [vmem:[%s426 + $0x4f8] sm:$0xff]
        %v2297 = vld [vmem:[%s426 + $0x510] sm:$0xff]
        %v2298 = vld [vmem:[%s426 + $0x528] sm:$0xff]
        %v2299 = vld [vmem:[%s426 + $0x540] sm:$0xff]
        %v2300 = vld [vmem:[%s426 + $0x558] sm:$0xff]
        %v2301 = vld [vmem:[%s426 + $0x570] sm:$0xff]
        %v2302 = vld [vmem:[%s426 + $0x588] sm:$0xff]
        %v2303 = vld [vmem:[%s426 + $0x5a0] sm:$0xff]
        %v2304 = vld [vmem:[%s426 + $0x5b8] sm:$0xff]
        %v2305 = vld [vmem:[%s426 + $0x5d0] sm:$0xff]
        %v2306 = vld [vmem:[%s426 + $0x5e8] sm:$0xff]
        %v2307 = vld [vmem:[%s435] sm:$0x3]
        %v2309 = vlaneseq
        %v2310 = vshrl.u32 %v2309, 7
        %v2311 = vsub.s32 0, %v2310
        %v2312 = vrot.slane %v2307, %v2311
        %v2313 = vlaneseq
        %v2314 = vshrl.u32 %v2313, 7
        %v2315 = vsub.s32 1, %v2314
        %v2316 = vrot.slane %v2307, %v2315
        %v2335 = vunpack.c.l.b16 %v2227
        %v2336 = vunpack.c.h.b16 %v2227
        %v2337 = vunpack.c.l.b16 %v2228
        %v2338 = vunpack.c.h.b16 %v2228
        %v2339 = vunpack.c.l.b16 %v2229
        %v2340 = vunpack.c.h.b16 %v2229
        %v2341 = vunpack.c.l.b16 %v2230
        %v2342 = vunpack.c.h.b16 %v2230
        %v2343 = vunpack.c.l.b16 %v2231
        %v2344 = vunpack.c.h.b16 %v2231
        %v2345 = vunpack.c.l.b16 %v2232
        %v2346 = vunpack.c.h.b16 %v2232
        %v2347 = vunpack.c.l.b16 %v2233
        %v2348 = vunpack.c.h.b16 %v2233
        %v2349 = vunpack.c.l.b16 %v2234
        %v2350 = vunpack.c.h.b16 %v2234
        %v2351 = vunpack.c.l.b16 %v2235
        %v2352 = vunpack.c.h.b16 %v2235
        %v2353 = vunpack.c.l.b16 %v2236
        %v2354 = vunpack.c.h.b16 %v2236
        %v2355 = vunpack.c.l.b16 %v2237
        %v2356 = vunpack.c.h.b16 %v2237
        %v2357 = vunpack.c.l.b16 %v2238
        %v2358 = vunpack.c.h.b16 %v2238
        %v2359 = vunpack.c.l.b16 %v2239
        %v2360 = vunpack.c.h.b16 %v2239
        %v2361 = vunpack.c.l.b16 %v2240
        %v2362 = vunpack.c.h.b16 %v2240
        %v2363 = vunpack.c.l.b16 %v2241
        %v2364 = vunpack.c.h.b16 %v2241
        %v2365 = vunpack.c.l.b16 %v2242
        %v2366 = vunpack.c.h.b16 %v2242
        %v2367 = vpack.c.b16 %v2339, %v2335
        %v2368 = vpack.c.b16 %v2340, %v2336
        %v2369 = vpack.c.b16 %v2341, %v2337
        %v2370 = vpack.c.b16 %v2342, %v2338
        %v2371 = vpack.c.b16 %v2347, %v2343
        %v2372 = vpack.c.b16 %v2348, %v2344
        %v2373 = vpack.c.b16 %v2349, %v2345
        %v2374 = vpack.c.b16 %v2350, %v2346
        %v2375 = vpack.c.b16 %v2355, %v2351
        %v2376 = vpack.c.b16 %v2356, %v2352
        %v2377 = vpack.c.b16 %v2357, %v2353
        %v2378 = vpack.c.b16 %v2358, %v2354
        %v2379 = vpack.c.b16 %v2363, %v2359
        %v2380 = vpack.c.b16 %v2364, %v2360
        %v2381 = vpack.c.b16 %v2365, %v2361
        %v2382 = vpack.c.b16 %v2366, %v2362
        %v2463 = vunpack.c.l.b16 %v2243
        %v2464 = vunpack.c.h.b16 %v2243
        %v2465 = vunpack.c.l.b16 %v2244
        %v2466 = vunpack.c.h.b16 %v2244
        %v2467 = vunpack.c.l.b16 %v2245
        %v2468 = vunpack.c.h.b16 %v2245
        %v2469 = vunpack.c.l.b16 %v2246
        %v2470 = vunpack.c.h.b16 %v2246
        %v2471 = vunpack.c.l.b16 %v2247
        %v2472 = vunpack.c.h.b16 %v2247
        %v2473 = vunpack.c.l.b16 %v2248
        %v2474 = vunpack.c.h.b16 %v2248
        %v2475 = vunpack.c.l.b16 %v2249
        %v2476 = vunpack.c.h.b16 %v2249
        %v2477 = vunpack.c.l.b16 %v2250
        %v2478 = vunpack.c.h.b16 %v2250
        %v2479 = vunpack.c.l.b16 %v2251
        %v2480 = vunpack.c.h.b16 %v2251
        %v2481 = vunpack.c.l.b16 %v2252
        %v2482 = vunpack.c.h.b16 %v2252
        %v2483 = vunpack.c.l.b16 %v2253
        %v2484 = vunpack.c.h.b16 %v2253
        %v2485 = vunpack.c.l.b16 %v2254
        %v2486 = vunpack.c.h.b16 %v2254
        %v2487 = vunpack.c.l.b16 %v2255
        %v2488 = vunpack.c.h.b16 %v2255
        %v2489 = vunpack.c.l.b16 %v2256
        %v2490 = vunpack.c.h.b16 %v2256
        %v2491 = vunpack.c.l.b16 %v2257
        %v2492 = vunpack.c.h.b16 %v2257
        %v2493 = vunpack.c.l.b16 %v2258
        %v2494 = vunpack.c.h.b16 %v2258
        %v2495 = vunpack.c.l.b16 %v2259
        %v2496 = vunpack.c.h.b16 %v2259
        %v2497 = vunpack.c.l.b16 %v2260
        %v2498 = vunpack.c.h.b16 %v2260
        %v2499 = vunpack.c.l.b16 %v2261
        %v2500 = vunpack.c.h.b16 %v2261
        %v2501 = vunpack.c.l.b16 %v2262
        %v2502 = vunpack.c.h.b16 %v2262
        %v2503 = vunpack.c.l.b16 %v2263
        %v2504 = vunpack.c.h.b16 %v2263
        %v2505 = vunpack.c.l.b16 %v2264
        %v2506 = vunpack.c.h.b16 %v2264
        %v2507 = vunpack.c.l.b16 %v2265
        %v2508 = vunpack.c.h.b16 %v2265
        %v2509 = vunpack.c.l.b16 %v2266
        %v2510 = vunpack.c.h.b16 %v2266
        %v2511 = vunpack.c.l.b16 %v2267
        %v2512 = vunpack.c.h.b16 %v2267
        %v2513 = vunpack.c.l.b16 %v2268
        %v2514 = vunpack.c.h.b16 %v2268
        %v2515 = vunpack.c.l.b16 %v2269
        %v2516 = vunpack.c.h.b16 %v2269
        %v2517 = vunpack.c.l.b16 %v2270
        %v2518 = vunpack.c.h.b16 %v2270
        %v2519 = vunpack.c.l.b16 %v2271
        %v2520 = vunpack.c.h.b16 %v2271
        %v2521 = vunpack.c.l.b16 %v2272
        %v2522 = vunpack.c.h.b16 %v2272
        %v2523 = vunpack.c.l.b16 %v2273
        %v2524 = vunpack.c.h.b16 %v2273
        %v2525 = vunpack.c.l.b16 %v2274
        %v2526 = vunpack.c.h.b16 %v2274
        %v2527 = vunpack.c.l.b16 %v2275
        %v2528 = vunpack.c.h.b16 %v2275
        %v2529 = vunpack.c.l.b16 %v2276
        %v2530 = vunpack.c.h.b16 %v2276
        %v2531 = vunpack.c.l.b16 %v2277
        %v2532 = vunpack.c.h.b16 %v2277
        %v2533 = vunpack.c.l.b16 %v2278
        %v2534 = vunpack.c.h.b16 %v2278
        %v2535 = vunpack.c.l.b16 %v2279
        %v2536 = vunpack.c.h.b16 %v2279
        %v2537 = vunpack.c.l.b16 %v2280
        %v2538 = vunpack.c.h.b16 %v2280
        %v2539 = vunpack.c.l.b16 %v2281
        %v2540 = vunpack.c.h.b16 %v2281
        %v2541 = vunpack.c.l.b16 %v2282
        %v2542 = vunpack.c.h.b16 %v2282
        %v2543 = vunpack.c.l.b16 %v2283
        %v2544 = vunpack.c.h.b16 %v2283
        %v2545 = vunpack.c.l.b16 %v2284
        %v2546 = vunpack.c.h.b16 %v2284
        %v2547 = vunpack.c.l.b16 %v2285
        %v2548 = vunpack.c.h.b16 %v2285
        %v2549 = vunpack.c.l.b16 %v2286
        %v2550 = vunpack.c.h.b16 %v2286
        %v2551 = vunpack.c.l.b16 %v2287
        %v2552 = vunpack.c.h.b16 %v2287
        %v2553 = vunpack.c.l.b16 %v2288
        %v2554 = vunpack.c.h.b16 %v2288
        %v2555 = vunpack.c.l.b16 %v2289
        %v2556 = vunpack.c.h.b16 %v2289
        %v2557 = vunpack.c.l.b16 %v2290
        %v2558 = vunpack.c.h.b16 %v2290
        %v2559 = vunpack.c.l.b16 %v2291
        %v2560 = vunpack.c.h.b16 %v2291
        %v2561 = vunpack.c.l.b16 %v2292
        %v2562 = vunpack.c.h.b16 %v2292
        %v2563 = vunpack.c.l.b16 %v2293
        %v2564 = vunpack.c.h.b16 %v2293
        %v2565 = vunpack.c.l.b16 %v2294
        %v2566 = vunpack.c.h.b16 %v2294
        %v2567 = vunpack.c.l.b16 %v2295
        %v2568 = vunpack.c.h.b16 %v2295
        %v2569 = vunpack.c.l.b16 %v2296
        %v2570 = vunpack.c.h.b16 %v2296
        %v2571 = vunpack.c.l.b16 %v2297
        %v2572 = vunpack.c.h.b16 %v2297
        %v2573 = vunpack.c.l.b16 %v2298
        %v2574 = vunpack.c.h.b16 %v2298
        %v2575 = vunpack.c.l.b16 %v2299
        %v2576 = vunpack.c.h.b16 %v2299
        %v2577 = vunpack.c.l.b16 %v2300
        %v2578 = vunpack.c.h.b16 %v2300
        %v2579 = vunpack.c.l.b16 %v2301
        %v2580 = vunpack.c.h.b16 %v2301
        %v2581 = vunpack.c.l.b16 %v2302
        %v2582 = vunpack.c.h.b16 %v2302
        %v2583 = vunpack.c.l.b16 %v2303
        %v2584 = vunpack.c.h.b16 %v2303
        %v2585 = vunpack.c.l.b16 %v2304
        %v2586 = vunpack.c.h.b16 %v2304
        %v2587 = vunpack.c.l.b16 %v2305
        %v2588 = vunpack.c.h.b16 %v2305
        %v2589 = vunpack.c.l.b16 %v2306
        %v2590 = vunpack.c.h.b16 %v2306
        %v2591 = vpack.c.b16 %v2465, %v2463
        %v2592 = vpack.c.b16 %v2466, %v2464
        %v2593 = vpack.c.b16 %v2469, %v2467
        %v2594 = vpack.c.b16 %v2470, %v2468
        %v2595 = vpack.c.b16 %v2473, %v2471
        %v2596 = vpack.c.b16 %v2474, %v2472
        %v2597 = vpack.c.b16 %v2477, %v2475
        %v2598 = vpack.c.b16 %v2478, %v2476
        %v2599 = vpack.c.b16 %v2481, %v2479
        %v2600 = vpack.c.b16 %v2482, %v2480
        %v2601 = vpack.c.b16 %v2485, %v2483
        %v2602 = vpack.c.b16 %v2486, %v2484
        %v2603 = vpack.c.b16 %v2489, %v2487
        %v2604 = vpack.c.b16 %v2490, %v2488
        %v2605 = vpack.c.b16 %v2493, %v2491
        %v2606 = vpack.c.b16 %v2494, %v2492
        %v2607 = vpack.c.b16 %v2497, %v2495
        %v2608 = vpack.c.b16 %v2498, %v2496
        %v2609 = vpack.c.b16 %v2501, %v2499
        %v2610 = vpack.c.b16 %v2502, %v2500
        %v2611 = vpack.c.b16 %v2505, %v2503
        %v2612 = vpack.c.b16 %v2506, %v2504
        %v2613 = vpack.c.b16 %v2509, %v2507
        %v2614 = vpack.c.b16 %v2510, %v2508
        %v2615 = vpack.c.b16 %v2513, %v2511
        %v2616 = vpack.c.b16 %v2514, %v2512
        %v2617 = vpack.c.b16 %v2517, %v2515
        %v2618 = vpack.c.b16 %v2518, %v2516
        %v2619 = vpack.c.b16 %v2521, %v2519
        %v2620 = vpack.c.b16 %v2522, %v2520
        %v2621 = vpack.c.b16 %v2525, %v2523
        %v2622 = vpack.c.b16 %v2526, %v2524
        %v2623 = vpack.c.b16 %v2529, %v2527
        %v2624 = vpack.c.b16 %v2530, %v2528
        %v2625 = vpack.c.b16 %v2533, %v2531
        %v2626 = vpack.c.b16 %v2534, %v2532
        %v2627 = vpack.c.b16 %v2537, %v2535
        %v2628 = vpack.c.b16 %v2538, %v2536
        %v2629 = vpack.c.b16 %v2541, %v2539
        %v2630 = vpack.c.b16 %v2542, %v2540
        %v2631 = vpack.c.b16 %v2545, %v2543
        %v2632 = vpack.c.b16 %v2546, %v2544
        %v2633 = vpack.c.b16 %v2549, %v2547
        %v2634 = vpack.c.b16 %v2550, %v2548
        %v2635 = vpack.c.b16 %v2553, %v2551
        %v2636 = vpack.c.b16 %v2554, %v2552
        %v2637 = vpack.c.b16 %v2557, %v2555
        %v2638 = vpack.c.b16 %v2558, %v2556
        %v2639 = vpack.c.b16 %v2561, %v2559
        %v2640 = vpack.c.b16 %v2562, %v2560
        %v2641 = vpack.c.b16 %v2565, %v2563
        %v2642 = vpack.c.b16 %v2566, %v2564
        %v2643 = vpack.c.b16 %v2569, %v2567
        %v2644 = vpack.c.b16 %v2570, %v2568
        %v2645 = vpack.c.b16 %v2573, %v2571
        %v2646 = vpack.c.b16 %v2574, %v2572
        %v2647 = vpack.c.b16 %v2577, %v2575
        %v2648 = vpack.c.b16 %v2578, %v2576
        %v2649 = vpack.c.b16 %v2581, %v2579
        %v2650 = vpack.c.b16 %v2582, %v2580
        %v2651 = vpack.c.b16 %v2585, %v2583
        %v2652 = vpack.c.b16 %v2586, %v2584
        %v2653 = vpack.c.b16 %v2589, %v2587
        %v2654 = vpack.c.b16 %v2590, %v2588
        %2719 = vmatprep.subr.bf16.mxu0 %v2592
        %2720 = vmatpush1.bf16.msra.mxu0 %v2591
        %2721 = vmatprep.subr.bf16.mxu0 %v2594
        %2722 = vmatpush1.bf16.msra.mxu0 %v2593
        %2723 = vmatprep.subr.bf16.mxu0 %v2596
        %2724 = vmatpush1.bf16.msra.mxu0 %v2595
        %2725 = vmatprep.subr.bf16.mxu0 %v2598
        %2726 = vmatpush1.bf16.msra.mxu0 %v2597
        %2727 = vmatprep.subr.bf16.mxu0 %v2600
        %2728 = vmatpush1.bf16.msra.mxu0 %v2599
        %2729 = vmatprep.subr.bf16.mxu0 %v2602
        %2730 = vmatpush1.bf16.msra.mxu0 %v2601
        %2731 = vmatprep.subr.bf16.mxu0 %v2604
        %2732 = vmatpush1.bf16.msra.mxu0 %v2603
        %2733 = vmatprep.subr.bf16.mxu0 %v2606
        %2734 = vmatpush1.bf16.msra.mxu0 %v2605
        %2735 = vmatprep.subr.bf16.mxu0 %v2608
        %2736 = vmatpush1.bf16.msra.mxu0 %v2607
        %2737 = vmatprep.subr.bf16.mxu0 %v2610
        %2738 = vmatpush1.bf16.msra.mxu0 %v2609
        %2739 = vmatprep.subr.bf16.mxu0 %v2612
        %2740 = vmatpush1.bf16.msra.mxu0 %v2611
        %2741 = vmatprep.subr.bf16.mxu0 %v2614
        %2742 = vmatpush1.bf16.msra.mxu0 %v2613
        %2743 = vmatprep.subr.bf16.mxu0 %v2616
        %2744 = vmatpush1.bf16.msra.mxu0 %v2615
        %2745 = vmatprep.subr.bf16.mxu0 %v2618
        %2746 = vmatpush1.bf16.msra.mxu0 %v2617
        %2747 = vmatprep.subr.bf16.mxu0 %v2620
        %2748 = vmatpush1.bf16.msra.mxu0 %v2619
        %2749 = vmatprep.subr.bf16.mxu0 %v2622
        %2750 = vmatpush1.bf16.msra.mxu0 %v2621
        %2751 = vmatprep.mubr.bf16.mxu0 %v2368
        %2752 = vmatmul.mubr.bf16.gmra.mrb[0].mxu0 %v2367
        %v2753 = vpop.f32.mrb[0].mxu0
        %v2754 = vadd.f32 %v2312, %v2753
        %v2755 = vpop.f32.mrb[0].mxu0
        %v2756 = vadd.f32 %v2316, %v2755
        %v2757 = vpop.f32.mrb[0].mxu0
        %v2758 = vadd.f32 %v2312, %v2757
        %v2759 = vpop.f32.mrb[0].mxu0
        %v2760 = vadd.f32 %v2316, %v2759
        %2761 = vmatprep.mubr.bf16.mxu0 %v2372
        %2762 = vmatmul.mubr.bf16.gmra.mrb[0].mxu0 %v2371
        %v2763 = vpop.f32.mrb[0].mxu0
        %v2764 = vadd.f32 %v2312, %v2763
        %v2765 = vpop.f32.mrb[0].mxu0
        %v2766 = vadd.f32 %v2316, %v2765
        %v2767 = vpop.f32.mrb[0].mxu0
        %v2768 = vadd.f32 %v2312, %v2767
        %v2769 = vpop.f32.mrb[0].mxu0
        %v2770 = vadd.f32 %v2316, %v2769
        %2771 = vmatprep.mubr.bf16.mxu0 %v2376
        %2772 = vmatmul.mubr.bf16.gmra.mrb[0].mxu0 %v2375
        %v2773 = vpop.f32.mrb[0].mxu0
        %v2774 = vadd.f32 %v2312, %v2773
        %v2775 = vpop.f32.mrb[0].mxu0
        %v2776 = vadd.f32 %v2316, %v2775
        %v2777 = vpop.f32.mrb[0].mxu0
        %v2778 = vadd.f32 %v2312, %v2777
        %v2779 = vpop.f32.mrb[0].mxu0
        %v2780 = vadd.f32 %v2316, %v2779
        %2781 = vmatprep.mubr.bf16.mxu0 %v2380
        %2782 = vmatmul.mubr.bf16.gmra.mrb[0].mxu0 %v2379
        %v2783 = vpop.f32.mrb[0].mxu0
        %v2784 = vadd.f32 %v2312, %v2783
        %v2785 = vpop.f32.mrb[0].mxu0
        %v2786 = vadd.f32 %v2316, %v2785
        %v2787 = vpop.f32.mrb[0].mxu0
        %v2788 = vadd.f32 %v2312, %v2787
        %v2789 = vpop.f32.mrb[0].mxu0
        %v2790 = vadd.f32 %v2316, %v2789
        %2791 = vdwg.mxu0
        %2792 = vmatprep.subr.bf16.mxu0 %v2624
        %2793 = vmatpush1.bf16.msra.mxu0 %v2623
        %2794 = vmatprep.subr.bf16.mxu0 %v2626
        %2795 = vmatpush1.bf16.msra.mxu0 %v2625
        %2796 = vmatprep.subr.bf16.mxu0 %v2628
        %2797 = vmatpush1.bf16.msra.mxu0 %v2627
        %2798 = vmatprep.subr.bf16.mxu0 %v2630
        %2799 = vmatpush1.bf16.msra.mxu0 %v2629
        %2800 = vmatprep.subr.bf16.mxu0 %v2632
        %2801 = vmatpush1.bf16.msra.mxu0 %v2631
        %2802 = vmatprep.subr.bf16.mxu0 %v2634
        %2803 = vmatpush1.bf16.msra.mxu0 %v2633
        %2804 = vmatprep.subr.bf16.mxu0 %v2636
        %2805 = vmatpush1.bf16.msra.mxu0 %v2635
        %2806 = vmatprep.subr.bf16.mxu0 %v2638
        %2807 = vmatpush1.bf16.msra.mxu0 %v2637
        %2808 = vmatprep.subr.bf16.mxu0 %v2640
        %2809 = vmatpush1.bf16.msra.mxu0 %v2639
        %2810 = vmatprep.subr.bf16.mxu0 %v2642
        %2811 = vmatpush1.bf16.msra.mxu0 %v2641
        %2812 = vmatprep.subr.bf16.mxu0 %v2644
        %2813 = vmatpush1.bf16.msra.mxu0 %v2643
        %2814 = vmatprep.subr.bf16.mxu0 %v2646
        %2815 = vmatpush1.bf16.msra.mxu0 %v2645
        %2816 = vmatprep.subr.bf16.mxu0 %v2648
        %2817 = vmatpush1.bf16.msra.mxu0 %v2647
        %2818 = vmatprep.subr.bf16.mxu0 %v2650
        %2819 = vmatpush1.bf16.msra.mxu0 %v2649
        %2820 = vmatprep.subr.bf16.mxu0 %v2652
        %2821 = vmatpush1.bf16.msra.mxu0 %v2651
        %2822 = vmatprep.subr.bf16.mxu0 %v2654
        %2823 = vmatpush1.bf16.msra.mxu0 %v2653
        %2824 = vmatprep.mubr.bf16.mxu0 %v2370
        %2825 = vmatmul.mubr.bf16.gmra.mrb[0].mxu0 %v2369
        %v2826 = vpop.f32.mrb[0].mxu0
        %v2827 = vadd.f32 %v2754, %v2826
        %v2828 = vpop.f32.mrb[0].mxu0
        %v2829 = vadd.f32 %v2756, %v2828
        %v2830 = vpop.f32.mrb[0].mxu0
        %v2831 = vadd.f32 %v2758, %v2830
        %v2832 = vpop.f32.mrb[0].mxu0
        %v2833 = vadd.f32 %v2760, %v2832
        %2834 = vmatprep.mubr.bf16.mxu0 %v2374
        %2835 = vmatmul.mubr.bf16.gmra.mrb[0].mxu0 %v2373
        %v2836 = vpop.f32.mrb[0].mxu0
        %v2837 = vadd.f32 %v2764, %v2836
        %v2838 = vpop.f32.mrb[0].mxu0
        %v2839 = vadd.f32 %v2766, %v2838
        %v2840 = vpop.f32.mrb[0].mxu0
        %v2841 = vadd.f32 %v2768, %v2840
        %v2842 = vpop.f32.mrb[0].mxu0
        %v2843 = vadd.f32 %v2770, %v2842
        %2844 = vmatprep.mubr.bf16.mxu0 %v2378
        %2845 = vmatmul.mubr.bf16.gmra.mrb[0].mxu0 %v2377
        %v2846 = vpop.f32.mrb[0].mxu0
        %v2847 = vadd.f32 %v2774, %v2846
        %v2848 = vpop.f32.mrb[0].mxu0
        %v2849 = vadd.f32 %v2776, %v2848
        %v2850 = vpop.f32.mrb[0].mxu0
        %v2851 = vadd.f32 %v2778, %v2850
        %v2852 = vpop.f32.mrb[0].mxu0
        %v2853 = vadd.f32 %v2780, %v2852
        %2854 = vmatprep.mubr.bf16.mxu0 %v2382
        %2855 = vmatmul.mubr.bf16.gmra.mrb[0].mxu0 %v2381
        %v2856 = vpop.f32.mrb[0].mxu0
        %v2857 = vadd.f32 %v2784, %v2856
        %v2858 = vpop.f32.mrb[0].mxu0
        %v2859 = vadd.f32 %v2786, %v2858
        %v2860 = vpop.f32.mrb[0].mxu0
        %v2861 = vadd.f32 %v2788, %v2860
        %v2862 = vpop.f32.mrb[0].mxu0
        %v2863 = vadd.f32 %v2790, %v2862
        %2864 = vdwg.mxu0
        %s2865 = scalar_lea.vmem %s457, %s524 [#allocation13]
        %v2866 = vld [vmem:[%s2865] sm:$0xff]
        %v2867 = vld [vmem:[%s2865 + $0x8] sm:$0xff]
        %v2868 = vld [vmem:[%s2865 + $0x10] sm:$0xff]
        %v2869 = vld [vmem:[%s2865 + $0x18] sm:$0xff]
        %v2870 = vld [vmem:[%s2865 + $0x20] sm:$0xff]
        %v2871 = vld [vmem:[%s2865 + $0x28] sm:$0xff]
        %v2872 = vld [vmem:[%s2865 + $0x30] sm:$0xff]
        %v2873 = vld [vmem:[%s2865 + $0x38] sm:$0xff]
        %s2874 = scalar_lea.vmem %s466, %s524 [#allocation15]
        %v2875 = vld [vmem:[%s2874] sm:$0xff]
        %v2876 = vld [vmem:[%s2874 + $0x8] sm:$0xff]
        %v2877 = vld [vmem:[%s2874 + $0x10] sm:$0xff]
        %v2878 = vld [vmem:[%s2874 + $0x18] sm:$0xff]
        %v2879 = vld [vmem:[%s2874 + $0x20] sm:$0xff]
        %v2880 = vld [vmem:[%s2874 + $0x28] sm:$0xff]
        %v2881 = vld [vmem:[%s2874 + $0x30] sm:$0xff]
        %v2882 = vld [vmem:[%s2874 + $0x38] sm:$0xff]
        %s2883 = smul.u32 %s40, 32
        %s2884 = smul.addr %s2883, 8
        %s2885 = scalar_lea.vmem [#allocation2], %s2884
        %v2886 = vld [vmem:[%s2885] sm:$0xff]
        %v2887 = vld [vmem:[%s2885 + $0x8] sm:$0xff]
        %v2888 = vld [vmem:[%s2885 + $0x10] sm:$0xff]
        %v2889 = vld [vmem:[%s2885 + $0x18] sm:$0xff]
        %v2890 = vld [vmem:[%s2885 + $0x20] sm:$0xff]
        %v2891 = vld [vmem:[%s2885 + $0x28] sm:$0xff]
        %v2892 = vld [vmem:[%s2885 + $0x30] sm:$0xff]
        %v2893 = vld [vmem:[%s2885 + $0x38] sm:$0xff]
        %v2894 = vld [vmem:[%s2885 + $0x40] sm:$0xff]
        %v2895 = vld [vmem:[%s2885 + $0x48] sm:$0xff]
        %v2896 = vld [vmem:[%s2885 + $0x50] sm:$0xff]
        %v2897 = vld [vmem:[%s2885 + $0x58] sm:$0xff]
        %v2898 = vld [vmem:[%s2885 + $0x60] sm:$0xff]
        %v2899 = vld [vmem:[%s2885 + $0x68] sm:$0xff]
        %v2900 = vld [vmem:[%s2885 + $0x70] sm:$0xff]
        %v2901 = vld [vmem:[%s2885 + $0x78] sm:$0xff]
        %v2902 = vld [vmem:[%s2885 + $0x80] sm:$0xff]
        %v2903 = vld [vmem:[%s2885 + $0x88] sm:$0xff]
        %v2904 = vld [vmem:[%s2885 + $0x90] sm:$0xff]
        %v2905 = vld [vmem:[%s2885 + $0x98] sm:$0xff]
        %v2906 = vld [vmem:[%s2885 + $0xa0] sm:$0xff]
        %v2907 = vld [vmem:[%s2885 + $0xa8] sm:$0xff]
        %v2908 = vld [vmem:[%s2885 + $0xb0] sm:$0xff]
        %v2909 = vld [vmem:[%s2885 + $0xb8] sm:$0xff]
        %v2910 = vld [vmem:[%s2885 + $0xc0] sm:$0xff]
        %v2911 = vld [vmem:[%s2885 + $0xc8] sm:$0xff]
        %v2912 = vld [vmem:[%s2885 + $0xd0] sm:$0xff]
        %v2913 = vld [vmem:[%s2885 + $0xd8] sm:$0xff]
        %v2914 = vld [vmem:[%s2885 + $0xe0] sm:$0xff]
        %v2915 = vld [vmem:[%s2885 + $0xe8] sm:$0xff]
        %v2916 = vld [vmem:[%s2885 + $0xf0] sm:$0xff]
        %v2917 = vld [vmem:[%s2885 + $0xf8] sm:$0xff]
        %v2918 = vmul.f32 %v2827, %v2866
        %v2919 = vmul.f32 %v2831, %v2867
        %v2920 = vmul.f32 %v2837, %v2868
        %v2921 = vmul.f32 %v2841, %v2869
        %v2922 = vmul.f32 %v2847, %v2870
        %v2923 = vmul.f32 %v2851, %v2871
        %v2924 = vmul.f32 %v2857, %v2872
        %v2925 = vmul.f32 %v2861, %v2873
        %2926 = vrot.lane.b32.xlu0 %v2827, 64
        %v2927 = vpop.permute.xlu0 %2926
        %2928 = vrot.lane.b32.xlu0 %v2831, 64
        %v2929 = vpop.permute.xlu0 %2928
        %2930 = vrot.lane.b32.xlu0 %v2837, 64
        %v2931 = vpop.permute.xlu0 %2930
        %2932 = vrot.lane.b32.xlu0 %v2841, 64
        %v2933 = vpop.permute.xlu0 %2932
        %2934 = vrot.lane.b32.xlu0 %v2847, 64
        %v2935 = vpop.permute.xlu0 %2934
        %2936 = vrot.lane.b32.xlu0 %v2851, 64
        %v2937 = vpop.permute.xlu0 %2936
        %2938 = vrot.lane.b32.xlu0 %v2857, 64
        %v2939 = vpop.permute.xlu0 %2938
        %2940 = vrot.lane.b32.xlu0 %v2861, 64
        %v2941 = vpop.permute.xlu0 %2940
        %v2942 = vmul.f32 %v2927, %v2875
        %v2943 = vmul.f32 %v2929, %v2876
        %v2944 = vmul.f32 %v2931, %v2877
        %v2945 = vmul.f32 %v2933, %v2878
        %v2946 = vmul.f32 %v2935, %v2879
        %v2947 = vmul.f32 %v2937, %v2880
        %v2948 = vmul.f32 %v2939, %v2881
        %v2949 = vmul.f32 %v2941, %v2882
        %v2950 = vadd.f32 %v2918, %v2942
        %v2951 = vadd.f32 %v2919, %v2943
        %v2952 = vadd.f32 %v2920, %v2944
        %v2953 = vadd.f32 %v2921, %v2945
        %v2954 = vadd.f32 %v2922, %v2946
        %v2955 = vadd.f32 %v2923, %v2947
        %v2956 = vadd.f32 %v2924, %v2948
        %v2957 = vadd.f32 %v2925, %v2949
        %v2958 = vpack.c.bf16 %v2951, %v2950
        %v2959 = vpack.c.bf16 %v2953, %v2952
        %v2960 = vpack.c.bf16 %v2955, %v2954
        %v2961 = vpack.c.bf16 %v2957, %v2956
        %2962 = vmatprep.subr.bf16.mxu0 0
        %2963 = vmatpush1.bf16.xpose.msra.mxu0 %v2886
        %2964 = vmatprep.subr.bf16.mxu0 0
        %2965 = vmatpush1.bf16.xpose.msra.mxu0 %v2890
        %2966 = vmatprep.subr.bf16.mxu0 0
        %2967 = vmatpush1.bf16.xpose.msra.mxu0 %v2894
        %2968 = vmatprep.subr.bf16.mxu0 0
        %2969 = vmatpush1.bf16.xpose.msra.mxu0 %v2898
        %2970 = vmatprep.subr.bf16.mxu0 0
        %2971 = vmatpush1.bf16.xpose.msra.mxu0 %v2902
        %2972 = vmatprep.subr.bf16.mxu0 0
        %2973 = vmatpush1.bf16.xpose.msra.mxu0 %v2906
        %2974 = vmatprep.subr.bf16.mxu0 0
        %2975 = vmatpush1.bf16.xpose.msra.mxu0 %v2910
        %2976 = vmatprep.subr.bf16.mxu0 0
        %2977 = vmatpush1.bf16.xpose.msra.mxu0 %v2914
        %2978 = vmatprep.subr.bf16.mxu0 0
        %2979 = vmatpush1.bf16.xpose.msra.mxu0 0
        %2980 = vmatprep.subr.bf16.mxu0 0
        %2981 = vmatpush1.bf16.xpose.msra.mxu0 0
        %2982 = vmatprep.subr.bf16.mxu0 0
        %2983 = vmatpush1.bf16.xpose.msra.mxu0 0
        %2984 = vmatprep.subr.bf16.mxu0 0
        %2985 = vmatpush1.bf16.xpose.msra.mxu0 0
        %2986 = vmatprep.subr.bf16.mxu0 0
        %2987 = vmatpush1.bf16.xpose.msra.mxu0 0
        %2988 = vmatprep.subr.bf16.mxu0 0
        %2989 = vmatpush1.bf16.xpose.msra.mxu0 0
        %2990 = vmatprep.subr.bf16.mxu0 0
        %2991 = vmatpush1.bf16.xpose.msra.mxu0 0
        %2992 = vmatprep.subr.bf16.mxu0 0
        %2993 = vmatpush1.bf16.xpose.msra.mxu0 0
        %2994 = vmatprep.mubr.bf16.mxu0 0
        %2995 = vmatmul.mubr.bf16.gmra.mrb[0].mxu0 %v2958
        %v2996 = vpop.f32.mrb[0].mxu0
        %v2997 = vadd.f32 0.0, %v2996
        %v2998 = vpop.f32.mrb[0].mxu0
        %v2999 = vpop.f32.mrb[0].mxu0
        %v3000 = vadd.f32 0.0, %v2999
        %v3001 = vpop.f32.mrb[0].mxu0
        %3002 = vmatprep.mubr.bf16.mxu0 0
        %3003 = vmatmul.mubr.bf16.gmra.mrb[0].mxu0 %v2959
        %v3004 = vpop.f32.mrb[0].mxu0
        %v3005 = vadd.f32 0.0, %v3004
        %v3006 = vpop.f32.mrb[0].mxu0
        %v3007 = vpop.f32.mrb[0].mxu0
        %v3008 = vadd.f32 0.0, %v3007
        %v3009 = vpop.f32.mrb[0].mxu0
        %3010 = vmatprep.mubr.bf16.mxu0 0
        %3011 = vmatmul.mubr.bf16.gmra.mrb[0].mxu0 %v2960
        %v3012 = vpop.f32.mrb[0].mxu0
        %v3013 = vadd.f32 0.0, %v3012
        %v3014 = vpop.f32.mrb[0].mxu0
        %v3015 = vpop.f32.mrb[0].mxu0
        %v3016 = vadd.f32 0.0, %v3015
        %v3017 = vpop.f32.mrb[0].mxu0
        %3018 = vmatprep.mubr.bf16.mxu0 0
        %3019 = vmatmul.mubr.bf16.gmra.mrb[0].mxu0 %v2961
        %v3020 = vpop.f32.mrb[0].mxu0
        %v3021 = vadd.f32 0.0, %v3020
        %v3022 = vpop.f32.mrb[0].mxu0
        %v3023 = vpop.f32.mrb[0].mxu0
        %v3024 = vadd.f32 0.0, %v3023
        %v3025 = vpop.f32.mrb[0].mxu0
        %3026 = vdwg.mxu0
        %3027 = vmax.xlane.f32.xlu0 %v2997
        %v3028 = vpop.xlane.xlu0 %3027
        %3029 = vmax.xlane.f32.xlu0 %v3000
        %v3030 = vpop.xlane.xlu0 %3029
        %3031 = vmax.xlane.f32.xlu0 %v3005
        %v3032 = vpop.xlane.xlu0 %3031
        %3033 = vmax.xlane.f32.xlu0 %v3008
        %v3034 = vpop.xlane.xlu0 %3033
        %3035 = vmax.xlane.f32.xlu0 %v3013
        %v3036 = vpop.xlane.xlu0 %3035
        %3037 = vmax.xlane.f32.xlu0 %v3016
        %v3038 = vpop.xlane.xlu0 %3037
        %3039 = vmax.xlane.f32.xlu0 %v3021
        %v3040 = vpop.xlane.xlu0 %3039
        %3041 = vmax.xlane.f32.xlu0 %v3024
        %v3042 = vpop.xlane.xlu0 %3041
        %v3043 = vsub.f32 %v2997, %v3028
        %v3044 = vsub.f32 %v3000, %v3030
        %v3045 = vsub.f32 %v3005, %v3032
        %v3046 = vsub.f32 %v3008, %v3034
        %v3047 = vsub.f32 %v3013, %v3036
        %v3048 = vsub.f32 %v3016, %v3038
        %v3049 = vsub.f32 %v3021, %v3040
        %v3050 = vsub.f32 %v3024, %v3042
        %v3051 = vmul.f32 %v3043, 1.442695
        %v3052 = vpow.pop %v3051
        %v3053 = vmul.f32 %v3044, 1.442695
        %v3054 = vpow.pop %v3053
        %v3055 = vmul.f32 %v3045, 1.442695
        %v3056 = vpow.pop %v3055
        %v3057 = vmul.f32 %v3046, 1.442695
        %v3058 = vpow.pop %v3057
        %v3059 = vmul.f32 %v3047, 1.442695
        %v3060 = vpow.pop %v3059
        %v3061 = vmul.f32 %v3048, 1.442695
        %v3062 = vpow.pop %v3061
        %v3063 = vmul.f32 %v3049, 1.442695
        %v3064 = vpow.pop %v3063
        %v3065 = vmul.f32 %v3050, 1.442695
        %v3066 = vpow.pop %v3065
        %3067 = vadd.xlane.f32.xlu0 %v3052
        %v3068 = vpop.xlane.xlu0 %3067
        %3069 = vadd.xlane.f32.xlu0 %v3054
        %v3070 = vpop.xlane.xlu0 %3069
        %3071 = vadd.xlane.f32.xlu0 %v3056
        %v3072 = vpop.xlane.xlu0 %3071
        %3073 = vadd.xlane.f32.xlu0 %v3058
        %v3074 = vpop.xlane.xlu0 %3073
        %3075 = vadd.xlane.f32.xlu0 %v3060
        %v3076 = vpop.xlane.xlu0 %3075
        %3077 = vadd.xlane.f32.xlu0 %v3062
        %v3078 = vpop.xlane.xlu0 %3077
        %3079 = vadd.xlane.f32.xlu0 %v3064
        %v3080 = vpop.xlane.xlu0 %3079
        %3081 = vadd.xlane.f32.xlu0 %v3066
        %v3082 = vpop.xlane.xlu0 %3081
        %v3083 = vpack.c.bf16 %v3054, %v3052
        %v3084 = vpack.c.bf16 %v3058, %v3056
        %v3085 = vpack.c.bf16 %v3062, %v3060
        %v3086 = vpack.c.bf16 %v3066, %v3064
        %3087 = vmatprep.subr.bf16.mxu0 0
        %3088 = vmatpush1.bf16.msra.mxu0 %v2888
        %3089 = vmatprep.subr.bf16.mxu0 0
        %3090 = vmatpush1.bf16.msra.mxu0 %v2892
        %3091 = vmatprep.subr.bf16.mxu0 0
        %3092 = vmatpush1.bf16.msra.mxu0 %v2896
        %3093 = vmatprep.subr.bf16.mxu0 0
        %3094 = vmatpush1.bf16.msra.mxu0 %v2900
        %3095 = vmatprep.subr.bf16.mxu0 0
        %3096 = vmatpush1.bf16.msra.mxu0 %v2904
        %3097 = vmatprep.subr.bf16.mxu0 0
        %3098 = vmatpush1.bf16.msra.mxu0 %v2908
        %3099 = vmatprep.subr.bf16.mxu0 0
        %3100 = vmatpush1.bf16.msra.mxu0 %v2912
        %3101 = vmatprep.subr.bf16.mxu0 0
        %3102 = vmatpush1.bf16.msra.mxu0 %v2916
        %3103 = vmatprep.subr.bf16.mxu0 0
        %3104 = vmatpush1.bf16.msra.mxu0 0
        %3105 = vmatprep.subr.bf16.mxu0 0
        %3106 = vmatpush1.bf16.msra.mxu0 0
        %3107 = vmatprep.subr.bf16.mxu0 0
        %3108 = vmatpush1.bf16.msra.mxu0 0
        %3109 = vmatprep.subr.bf16.mxu0 0
        %3110 = vmatpush1.bf16.msra.mxu0 0
        %3111 = vmatprep.subr.bf16.mxu0 0
        %3112 = vmatpush1.bf16.msra.mxu0 0
        %3113 = vmatprep.subr.bf16.mxu0 0
        %3114 = vmatpush1.bf16.msra.mxu0 0
        %3115 = vmatprep.subr.bf16.mxu0 0
        %3116 = vmatpush1.bf16.msra.mxu0 0
        %3117 = vmatprep.subr.bf16.mxu0 0
        %3118 = vmatpush1.bf16.msra.mxu0 0
        %3119 = vmatprep.mubr.bf16.mxu0 0
        %3120 = vmatmul.mubr.bf16.gmra.mrb[0].mxu0 %v3083
        %v3121 = vpop.f32.mrb[0].mxu0
        %v3122 = vadd.f32 0.0, %v3121
        %v3123 = vpop.f32.mrb[0].mxu0
        %v3124 = vpop.f32.mrb[0].mxu0
        %v3125 = vadd.f32 0.0, %v3124
        %v3126 = vpop.f32.mrb[0].mxu0
        %3127 = vmatprep.mubr.bf16.mxu0 0
        %3128 = vmatmul.mubr.bf16.gmra.mrb[0].mxu0 %v3084
        %v3129 = vpop.f32.mrb[0].mxu0
        %v3130 = vadd.f32 0.0, %v3129
        %v3131 = vpop.f32.mrb[0].mxu0
        %v3132 = vpop.f32.mrb[0].mxu0
        %v3133 = vadd.f32 0.0, %v3132
        %v3134 = vpop.f32.mrb[0].mxu0
        %3135 = vmatprep.mubr.bf16.mxu0 0
        %3136 = vmatmul.mubr.bf16.gmra.mrb[0].mxu0 %v3085
        %v3137 = vpop.f32.mrb[0].mxu0
        %v3138 = vadd.f32 0.0, %v3137
        %v3139 = vpop.f32.mrb[0].mxu0
        %v3140 = vpop.f32.mrb[0].mxu0
        %v3141 = vadd.f32 0.0, %v3140
        %v3142 = vpop.f32.mrb[0].mxu0
        %3143 = vmatprep.mubr.bf16.mxu0 0
        %3144 = vmatmul.mubr.bf16.gmra.mrb[0].mxu0 %v3086
        %v3145 = vpop.f32.mrb[0].mxu0
        %v3146 = vadd.f32 0.0, %v3145
        %v3147 = vpop.f32.mrb[0].mxu0
        %v3148 = vpop.f32.mrb[0].mxu0
        %v3149 = vadd.f32 0.0, %v3148
        %v3150 = vpop.f32.mrb[0].mxu0
        %3151 = vdwg.mxu0
        %v3152 = vrcp.pop %v3068
        %v3153 = vrcp.pop %v3070
        %v3154 = vrcp.pop %v3072
        %v3155 = vrcp.pop %v3074
        %v3156 = vrcp.pop %v3076
        %v3157 = vrcp.pop %v3078
        %v3158 = vrcp.pop %v3080
        %v3159 = vrcp.pop %v3082
        %v3160 = vmul.f32 %v3122, %v3152
        %v3161 = vmul.f32 %v3125, %v3153
        %v3162 = vmul.f32 %v3130, %v3154
        %v3163 = vmul.f32 %v3133, %v3155
        %v3164 = vmul.f32 %v3138, %v3156
        %v3165 = vmul.f32 %v3141, %v3157
        %v3166 = vmul.f32 %v3146, %v3158
        %v3167 = vmul.f32 %v3149, %v3159
        %v3168 = vpack.c.bf16 %v3161, %v3160
        %v3169 = vpack.c.bf16 %v3163, %v3162
        %v3170 = vpack.c.bf16 %v3165, %v3164
        %v3171 = vpack.c.bf16 %v3167, %v3166
        %v3172 = vmul.f32 %v2829, %v2866
        %v3173 = vmul.f32 %v2833, %v2867
        %v3174 = vmul.f32 %v2839, %v2868
        %v3175 = vmul.f32 %v2843, %v2869
        %v3176 = vmul.f32 %v2849, %v2870
        %v3177 = vmul.f32 %v2853, %v2871
        %v3178 = vmul.f32 %v2859, %v2872
        %v3179 = vmul.f32 %v2863, %v2873
        %3180 = vrot.lane.b32.xlu0 %v2829, 64
        %v3181 = vpop.permute.xlu0 %3180
        %3182 = vrot.lane.b32.xlu0 %v2833, 64
        %v3183 = vpop.permute.xlu0 %3182
        %3184 = vrot.lane.b32.xlu0 %v2839, 64
        %v3185 = vpop.permute.xlu0 %3184
        %3186 = vrot.lane.b32.xlu0 %v2843, 64
        %v3187 = vpop.permute.xlu0 %3186
        %3188 = vrot.lane.b32.xlu0 %v2849, 64
        %v3189 = vpop.permute.xlu0 %3188
        %3190 = vrot.lane.b32.xlu0 %v2853, 64
        %v3191 = vpop.permute.xlu0 %3190
        %3192 = vrot.lane.b32.xlu0 %v2859, 64
        %v3193 = vpop.permute.xlu0 %3192
        %3194 = vrot.lane.b32.xlu0 %v2863, 64
        %v3195 = vpop.permute.xlu0 %3194
        %v3196 = vmul.f32 %v3181, %v2875
        %v3197 = vmul.f32 %v3183, %v2876
        %v3198 = vmul.f32 %v3185, %v2877
        %v3199 = vmul.f32 %v3187, %v2878
        %v3200 = vmul.f32 %v3189, %v2879
        %v3201 = vmul.f32 %v3191, %v2880
        %v3202 = vmul.f32 %v3193, %v2881
        %v3203 = vmul.f32 %v3195, %v2882
        %v3204 = vadd.f32 %v3172, %v3196
        %v3205 = vadd.f32 %v3173, %v3197
        %v3206 = vadd.f32 %v3174, %v3198
        %v3207 = vadd.f32 %v3175, %v3199
        %v3208 = vadd.f32 %v3176, %v3200
        %v3209 = vadd.f32 %v3177, %v3201
        %v3210 = vadd.f32 %v3178, %v3202
        %v3211 = vadd.f32 %v3179, %v3203
        %v3212 = vpack.c.bf16 %v3205, %v3204
        %v3213 = vpack.c.bf16 %v3207, %v3206
        %v3214 = vpack.c.bf16 %v3209, %v3208
        %v3215 = vpack.c.bf16 %v3211, %v3210
        %3216 = vmatprep.subr.bf16.mxu0 0
        %3217 = vmatpush1.bf16.xpose.msra.mxu0 %v2887
        %3218 = vmatprep.subr.bf16.mxu0 0
        %3219 = vmatpush1.bf16.xpose.msra.mxu0 %v2891
        %3220 = vmatprep.subr.bf16.mxu0 0
        %3221 = vmatpush1.bf16.xpose.msra.mxu0 %v2895
        %3222 = vmatprep.subr.bf16.mxu0 0
        %3223 = vmatpush1.bf16.xpose.msra.mxu0 %v2899
        %3224 = vmatprep.subr.bf16.mxu0 0
        %3225 = vmatpush1.bf16.xpose.msra.mxu0 %v2903
        %3226 = vmatprep.subr.bf16.mxu0 0
        %3227 = vmatpush1.bf16.xpose.msra.mxu0 %v2907
        %3228 = vmatprep.subr.bf16.mxu0 0
        %3229 = vmatpush1.bf16.xpose.msra.mxu0 %v2911
        %3230 = vmatprep.subr.bf16.mxu0 0
        %3231 = vmatpush1.bf16.xpose.msra.mxu0 %v2915
        %3232 = vmatprep.subr.bf16.mxu0 0
        %3233 = vmatpush1.bf16.xpose.msra.mxu0 0
        %3234 = vmatprep.subr.bf16.mxu0 0
        %3235 = vmatpush1.bf16.xpose.msra.mxu0 0
        %3236 = vmatprep.subr.bf16.mxu0 0
        %3237 = vmatpush1.bf16.xpose.msra.mxu0 0
        %3238 = vmatprep.subr.bf16.mxu0 0
        %3239 = vmatpush1.bf16.xpose.msra.mxu0 0
        %3240 = vmatprep.subr.bf16.mxu0 0
        %3241 = vmatpush1.bf16.xpose.msra.mxu0 0
        %3242 = vmatprep.subr.bf16.mxu0 0
        %3243 = vmatpush1.bf16.xpose.msra.mxu0 0
        %3244 = vmatprep.subr.bf16.mxu0 0
        %3245 = vmatpush1.bf16.xpose.msra.mxu0 0
        %3246 = vmatprep.subr.bf16.mxu0 0
        %3247 = vmatpush1.bf16.xpose.msra.mxu0 0
        %3248 = vmatprep.mubr.bf16.mxu0 0
        %3249 = vmatmul.mubr.bf16.gmra.mrb[0].mxu0 %v3212
        %v3250 = vpop.f32.mrb[0].mxu0
        %v3251 = vadd.f32 0.0, %v3250
        %v3252 = vpop.f32.mrb[0].mxu0
        %v3253 = vpop.f32.mrb[0].mxu0
        %v3254 = vadd.f32 0.0, %v3253
        %v3255 = vpop.f32.mrb[0].mxu0
        %3256 = vmatprep.mubr.bf16.mxu0 0
        %3257 = vmatmul.mubr.bf16.gmra.mrb[0].mxu0 %v3213
        %v3258 = vpop.f32.mrb[0].mxu0
        %v3259 = vadd.f32 0.0, %v3258
        %v3260 = vpop.f32.mrb[0].mxu0
        %v3261 = vpop.f32.mrb[0].mxu0
        %v3262 = vadd.f32 0.0, %v3261
        %v3263 = vpop.f32.mrb[0].mxu0
        %3264 = vmatprep.mubr.bf16.mxu0 0
        %3265 = vmatmul.mubr.bf16.gmra.mrb[0].mxu0 %v3214
        %v3266 = vpop.f32.mrb[0].mxu0
        %v3267 = vadd.f32 0.0, %v3266
        %v3268 = vpop.f32.mrb[0].mxu0
        %v3269 = vpop.f32.mrb[0].mxu0
        %v3270 = vadd.f32 0.0, %v3269
        %v3271 = vpop.f32.mrb[0].mxu0
        %3272 = vmatprep.mubr.bf16.mxu0 0
        %3273 = vmatmul.mubr.bf16.gmra.mrb[0].mxu0 %v3215
        %v3274 = vpop.f32.mrb[0].mxu0
        %v3275 = vadd.f32 0.0, %v3274
        %v3276 = vpop.f32.mrb[0].mxu0
        %v3277 = vpop.f32.mrb[0].mxu0
        %v3278 = vadd.f32 0.0, %v3277
        %v3279 = vpop.f32.mrb[0].mxu0
        %3280 = vdwg.mxu0
        %3281 = vmax.xlane.f32.xlu0 %v3251
        %v3282 = vpop.xlane.xlu0 %3281
        %3283 = vmax.xlane.f32.xlu0 %v3254
        %v3284 = vpop.xlane.xlu0 %3283
        %3285 = vmax.xlane.f32.xlu0 %v3259
        %v3286 = vpop.xlane.xlu0 %3285
        %3287 = vmax.xlane.f32.xlu0 %v3262
        %v3288 = vpop.xlane.xlu0 %3287
        %3289 = vmax.xlane.f32.xlu0 %v3267
        %v3290 = vpop.xlane.xlu0 %3289
        %3291 = vmax.xlane.f32.xlu0 %v3270
        %v3292 = vpop.xlane.xlu0 %3291
        %3293 = vmax.xlane.f32.xlu0 %v3275
        %v3294 = vpop.xlane.xlu0 %3293
        %3295 = vmax.xlane.f32.xlu0 %v3278
        %v3296 = vpop.xlane.xlu0 %3295
        %v3297 = vsub.f32 %v3251, %v3282
        %v3298 = vsub.f32 %v3254, %v3284
        %v3299 = vsub.f32 %v3259, %v3286
        %v3300 = vsub.f32 %v3262, %v3288
        %v3301 = vsub.f32 %v3267, %v3290
        %v3302 = vsub.f32 %v3270, %v3292
        %v3303 = vsub.f32 %v3275, %v3294
        %v3304 = vsub.f32 %v3278, %v3296
        %v3305 = vmul.f32 %v3297, 1.442695
        %v3306 = vpow.pop %v3305
        %v3307 = vmul.f32 %v3298, 1.442695
        %v3308 = vpow.pop %v3307
        %v3309 = vmul.f32 %v3299, 1.442695
        %v3310 = vpow.pop %v3309
        %v3311 = vmul.f32 %v3300, 1.442695
        %v3312 = vpow.pop %v3311
        %v3313 = vmul.f32 %v3301, 1.442695
        %v3314 = vpow.pop %v3313
        %v3315 = vmul.f32 %v3302, 1.442695
        %v3316 = vpow.pop %v3315
        %v3317 = vmul.f32 %v3303, 1.442695
        %v3318 = vpow.pop %v3317
        %v3319 = vmul.f32 %v3304, 1.442695
        %v3320 = vpow.pop %v3319
        %3321 = vadd.xlane.f32.xlu0 %v3306
        %v3322 = vpop.xlane.xlu0 %3321
        %3323 = vadd.xlane.f32.xlu0 %v3308
        %v3324 = vpop.xlane.xlu0 %3323
        %3325 = vadd.xlane.f32.xlu0 %v3310
        %v3326 = vpop.xlane.xlu0 %3325
        %3327 = vadd.xlane.f32.xlu0 %v3312
        %v3328 = vpop.xlane.xlu0 %3327
        %3329 = vadd.xlane.f32.xlu0 %v3314
        %v3330 = vpop.xlane.xlu0 %3329
        %3331 = vadd.xlane.f32.xlu0 %v3316
        %v3332 = vpop.xlane.xlu0 %3331
        %3333 = vadd.xlane.f32.xlu0 %v3318
        %v3334 = vpop.xlane.xlu0 %3333
        %3335 = vadd.xlane.f32.xlu0 %v3320
        %v3336 = vpop.xlane.xlu0 %3335
        %v3337 = vpack.c.bf16 %v3308, %v3306
        %v3338 = vpack.c.bf16 %v3312, %v3310
        %v3339 = vpack.c.bf16 %v3316, %v3314
        %v3340 = vpack.c.bf16 %v3320, %v3318
        %3341 = vmatprep.subr.bf16.mxu0 0
        %3342 = vmatpush1.bf16.msra.mxu0 %v2889
        %3343 = vmatprep.subr.bf16.mxu0 0
        %3344 = vmatpush1.bf16.msra.mxu0 %v2893
        %3345 = vmatprep.subr.bf16.mxu0 0
        %3346 = vmatpush1.bf16.msra.mxu0 %v2897
        %3347 = vmatprep.subr.bf16.mxu0 0
        %3348 = vmatpush1.bf16.msra.mxu0 %v2901
        %3349 = vmatprep.subr.bf16.mxu0 0
        %3350 = vmatpush1.bf16.msra.mxu0 %v2905
        %3351 = vmatprep.subr.bf16.mxu0 0
        %3352 = vmatpush1.bf16.msra.mxu0 %v2909
        %3353 = vmatprep.subr.bf16.mxu0 0
        %3354 = vmatpush1.bf16.msra.mxu0 %v2913
        %3355 = vmatprep.subr.bf16.mxu0 0
        %3356 = vmatpush1.bf16.msra.mxu0 %v2917
        %3357 = vmatprep.subr.bf16.mxu0 0
        %3358 = vmatpush1.bf16.msra.mxu0 0
        %3359 = vmatprep.subr.bf16.mxu0 0
        %3360 = vmatpush1.bf16.msra.mxu0 0
        %3361 = vmatprep.subr.bf16.mxu0 0
        %3362 = vmatpush1.bf16.msra.mxu0 0
        %3363 = vmatprep.subr.bf16.mxu0 0
        %3364 = vmatpush1.bf16.msra.mxu0 0
        %3365 = vmatprep.subr.bf16.mxu0 0
        %3366 = vmatpush1.bf16.msra.mxu0 0
        %3367 = vmatprep.subr.bf16.mxu0 0
        %3368 = vmatpush1.bf16.msra.mxu0 0
        %3369 = vmatprep.subr.bf16.mxu0 0
        %3370 = vmatpush1.bf16.msra.mxu0 0
        %3371 = vmatprep.subr.bf16.mxu0 0
        %3372 = vmatpush1.bf16.msra.mxu0 0
        %3373 = vmatprep.mubr.bf16.mxu0 0
        %3374 = vmatmul.mubr.bf16.gmra.mrb[0].mxu0 %v3337
        %v3375 = vpop.f32.mrb[0].mxu0
        %v3376 = vadd.f32 0.0, %v3375
        %v3377 = vpop.f32.mrb[0].mxu0
        %v3378 = vpop.f32.mrb[0].mxu0
        %v3379 = vadd.f32 0.0, %v3378
        %v3380 = vpop.f32.mrb[0].mxu0
        %3381 = vmatprep.mubr.bf16.mxu0 0
        %3382 = vmatmul.mubr.bf16.gmra.mrb[0].mxu0 %v3338
        %v3383 = vpop.f32.mrb[0].mxu0
        %v3384 = vadd.f32 0.0, %v3383
        %v3385 = vpop.f32.mrb[0].mxu0
        %v3386 = vpop.f32.mrb[0].mxu0
        %v3387 = vadd.f32 0.0, %v3386
        %v3388 = vpop.f32.mrb[0].mxu0
        %3389 = vmatprep.mubr.bf16.mxu0 0
        %3390 = vmatmul.mubr.bf16.gmra.mrb[0].mxu0 %v3339
        %v3391 = vpop.f32.mrb[0].mxu0
        %v3392 = vadd.f32 0.0, %v3391
        %v3393 = vpop.f32.mrb[0].mxu0
        %v3394 = vpop.f32.mrb[0].mxu0
        %v3395 = vadd.f32 0.0, %v3394
        %v3396 = vpop.f32.mrb[0].mxu0
        %3397 = vmatprep.mubr.bf16.mxu0 0
        %3398 = vmatmul.mubr.bf16.gmra.mrb[0].mxu0 %v3340
        %v3399 = vpop.f32.mrb[0].mxu0
        %v3400 = vadd.f32 0.0, %v3399
        %v3401 = vpop.f32.mrb[0].mxu0
        %v3402 = vpop.f32.mrb[0].mxu0
        %v3403 = vadd.f32 0.0, %v3402
        %v3404 = vpop.f32.mrb[0].mxu0
        %3405 = vdwg.mxu0
        %v3406 = vrcp.pop %v3322
        %v3407 = vrcp.pop %v3324
        %v3408 = vrcp.pop %v3326
        %v3409 = vrcp.pop %v3328
        %v3410 = vrcp.pop %v3330
        %v3411 = vrcp.pop %v3332
        %v3412 = vrcp.pop %v3334
        %v3413 = vrcp.pop %v3336
        %v3414 = vmul.f32 %v3376, %v3406
        %v3415 = vmul.f32 %v3379, %v3407
        %v3416 = vmul.f32 %v3384, %v3408
        %v3417 = vmul.f32 %v3387, %v3409
        %v3418 = vmul.f32 %v3392, %v3410
        %v3419 = vmul.f32 %v3395, %v3411
        %v3420 = vmul.f32 %v3400, %v3412
        %v3421 = vmul.f32 %v3403, %v3413
        %v3422 = vpack.c.bf16 %v3415, %v3414
        %v3423 = vpack.c.bf16 %v3417, %v3416
        %v3424 = vpack.c.bf16 %v3419, %v3418
        %v3425 = vpack.c.bf16 %v3421, %v3420
        %v3426 = vld [vmem:[%s444] sm:$0xff]
        %v3427 = vld [vmem:[%s444 + $0x8] sm:$0xff]
        %v3428 = vld [vmem:[%s444 + $0x10] sm:$0xff]
        %v3429 = vld [vmem:[%s444 + $0x18] sm:$0xff]
        %v3430 = vld [vmem:[%s444 + $0x20] sm:$0xff]
        %v3431 = vld [vmem:[%s444 + $0x28] sm:$0xff]
        %v3432 = vld [vmem:[%s444 + $0x30] sm:$0xff]
        %v3433 = vld [vmem:[%s444 + $0x38] sm:$0xff]
        %v3434 = vld [vmem:[%s444 + $0x40] sm:$0xff]
        %v3435 = vld [vmem:[%s444 + $0x48] sm:$0xff]
        %v3436 = vld [vmem:[%s444 + $0x50] sm:$0xff]
        %v3437 = vld [vmem:[%s444 + $0x58] sm:$0xff]
        %v3438 = vld [vmem:[%s444 + $0x60] sm:$0xff]
        %v3439 = vld [vmem:[%s444 + $0x68] sm:$0xff]
        %v3440 = vld [vmem:[%s444 + $0x70] sm:$0xff]
        %v3441 = vld [vmem:[%s444 + $0x78] sm:$0xff]
        %v3442 = vld [vmem:[%s444 + $0x80] sm:$0xff]
        %v3443 = vld [vmem:[%s444 + $0x88] sm:$0xff]
        %v3444 = vld [vmem:[%s444 + $0x90] sm:$0xff]
        %v3445 = vld [vmem:[%s444 + $0x98] sm:$0xff]
        %v3446 = vld [vmem:[%s444 + $0xa0] sm:$0xff]
        %v3447 = vld [vmem:[%s444 + $0xa8] sm:$0xff]
        %v3448 = vld [vmem:[%s444 + $0xb0] sm:$0xff]
        %v3449 = vld [vmem:[%s444 + $0xb8] sm:$0xff]
        %v3450 = vld [vmem:[%s444 + $0xc0] sm:$0xff]
        %v3451 = vld [vmem:[%s444 + $0xc8] sm:$0xff]
        %v3452 = vld [vmem:[%s444 + $0xd0] sm:$0xff]
        %v3453 = vld [vmem:[%s444 + $0xd8] sm:$0xff]
        %v3454 = vld [vmem:[%s444 + $0xe0] sm:$0xff]
        %v3455 = vld [vmem:[%s444 + $0xe8] sm:$0xff]
        %v3456 = vld [vmem:[%s444 + $0xf0] sm:$0xff]
        %v3457 = vld [vmem:[%s444 + $0xf8] sm:$0xff]
        %v3458 = vld [vmem:[%s444 + $0x100] sm:$0xff]
        %v3459 = vld [vmem:[%s444 + $0x108] sm:$0xff]
        %v3460 = vld [vmem:[%s444 + $0x110] sm:$0xff]
        %v3461 = vld [vmem:[%s444 + $0x118] sm:$0xff]
        %v3462 = vld [vmem:[%s444 + $0x120] sm:$0xff]
        %v3463 = vld [vmem:[%s444 + $0x128] sm:$0xff]
        %v3464 = vld [vmem:[%s444 + $0x130] sm:$0xff]
        %v3465 = vld [vmem:[%s444 + $0x138] sm:$0xff]
        %v3466 = vld [vmem:[%s444 + $0x140] sm:$0xff]
        %v3467 = vld [vmem:[%s444 + $0x148] sm:$0xff]
        %v3468 = vld [vmem:[%s444 + $0x150] sm:$0xff]
        %v3469 = vld [vmem:[%s444 + $0x158] sm:$0xff]
        %v3470 = vld [vmem:[%s444 + $0x160] sm:$0xff]
        %v3471 = vld [vmem:[%s444 + $0x168] sm:$0xff]
        %v3472 = vld [vmem:[%s444 + $0x170] sm:$0xff]
        %v3473 = vld [vmem:[%s444 + $0x178] sm:$0xff]
        %v3474 = vld [vmem:[%s444 + $0x180] sm:$0xff]
        %v3475 = vld [vmem:[%s444 + $0x188] sm:$0xff]
        %v3476 = vld [vmem:[%s444 + $0x190] sm:$0xff]
        %v3477 = vld [vmem:[%s444 + $0x198] sm:$0xff]
        %v3478 = vld [vmem:[%s444 + $0x1a0] sm:$0xff]
        %v3479 = vld [vmem:[%s444 + $0x1a8] sm:$0xff]
        %v3480 = vld [vmem:[%s444 + $0x1b0] sm:$0xff]
        %v3481 = vld [vmem:[%s444 + $0x1b8] sm:$0xff]
        %v3482 = vld [vmem:[%s444 + $0x1c0] sm:$0xff]
        %v3483 = vld [vmem:[%s444 + $0x1c8] sm:$0xff]
        %v3484 = vld [vmem:[%s444 + $0x1d0] sm:$0xff]
        %v3485 = vld [vmem:[%s444 + $0x1d8] sm:$0xff]
        %v3486 = vld [vmem:[%s444 + $0x1e0] sm:$0xff]
        %v3487 = vld [vmem:[%s444 + $0x1e8] sm:$0xff]
        %v3488 = vld [vmem:[%s444 + $0x1f0] sm:$0xff]
        %v3489 = vld [vmem:[%s444 + $0x1f8] sm:$0xff]
        %v3554 = vunpack.c.l.b16 %v3426
        %v3555 = vunpack.c.h.b16 %v3426
        %v3556 = vunpack.c.l.b16 %v3427
        %v3557 = vunpack.c.h.b16 %v3427
        %v3558 = vunpack.c.l.b16 %v3428
        %v3559 = vunpack.c.h.b16 %v3428
        %v3560 = vunpack.c.l.b16 %v3429
        %v3561 = vunpack.c.h.b16 %v3429
        %v3562 = vunpack.c.l.b16 %v3430
        %v3563 = vunpack.c.h.b16 %v3430
        %v3564 = vunpack.c.l.b16 %v3431
        %v3565 = vunpack.c.h.b16 %v3431
        %v3566 = vunpack.c.l.b16 %v3432
        %v3567 = vunpack.c.h.b16 %v3432
        %v3568 = vunpack.c.l.b16 %v3433
        %v3569 = vunpack.c.h.b16 %v3433
        %v3570 = vunpack.c.l.b16 %v3434
        %v3571 = vunpack.c.h.b16 %v3434
        %v3572 = vunpack.c.l.b16 %v3435
        %v3573 = vunpack.c.h.b16 %v3435
        %v3574 = vunpack.c.l.b16 %v3436
        %v3575 = vunpack.c.h.b16 %v3436
        %v3576 = vunpack.c.l.b16 %v3437
        %v3577 = vunpack.c.h.b16 %v3437
        %v3578 = vunpack.c.l.b16 %v3438
        %v3579 = vunpack.c.h.b16 %v3438
        %v3580 = vunpack.c.l.b16 %v3439
        %v3581 = vunpack.c.h.b16 %v3439
        %v3582 = vunpack.c.l.b16 %v3440
        %v3583 = vunpack.c.h.b16 %v3440
        %v3584 = vunpack.c.l.b16 %v3441
        %v3585 = vunpack.c.h.b16 %v3441
        %v3586 = vunpack.c.l.b16 %v3442
        %v3587 = vunpack.c.h.b16 %v3442
        %v3588 = vunpack.c.l.b16 %v3443
        %v3589 = vunpack.c.h.b16 %v3443
        %v3590 = vunpack.c.l.b16 %v3444
        %v3591 = vunpack.c.h.b16 %v3444
        %v3592 = vunpack.c.l.b16 %v3445
        %v3593 = vunpack.c.h.b16 %v3445
        %v3594 = vunpack.c.l.b16 %v3446
        %v3595 = vunpack.c.h.b16 %v3446
        %v3596 = vunpack.c.l.b16 %v3447
        %v3597 = vunpack.c.h.b16 %v3447
        %v3598 = vunpack.c.l.b16 %v3448
        %v3599 = vunpack.c.h.b16 %v3448
        %v3600 = vunpack.c.l.b16 %v3449
        %v3601 = vunpack.c.h.b16 %v3449
        %v3602 = vunpack.c.l.b16 %v3450
        %v3603 = vunpack.c.h.b16 %v3450
        %v3604 = vunpack.c.l.b16 %v3451
        %v3605 = vunpack.c.h.b16 %v3451
        %v3606 = vunpack.c.l.b16 %v3452
        %v3607 = vunpack.c.h.b16 %v3452
        %v3608 = vunpack.c.l.b16 %v3453
        %v3609 = vunpack.c.h.b16 %v3453
        %v3610 = vunpack.c.l.b16 %v3454
        %v3611 = vunpack.c.h.b16 %v3454
        %v3612 = vunpack.c.l.b16 %v3455
        %v3613 = vunpack.c.h.b16 %v3455
        %v3614 = vunpack.c.l.b16 %v3456
        %v3615 = vunpack.c.h.b16 %v3456
        %v3616 = vunpack.c.l.b16 %v3457
        %v3617 = vunpack.c.h.b16 %v3457
        %v3618 = vunpack.c.l.b16 %v3458
        %v3619 = vunpack.c.h.b16 %v3458
        %v3620 = vunpack.c.l.b16 %v3459
        %v3621 = vunpack.c.h.b16 %v3459
        %v3622 = vunpack.c.l.b16 %v3460
        %v3623 = vunpack.c.h.b16 %v3460
        %v3624 = vunpack.c.l.b16 %v3461
        %v3625 = vunpack.c.h.b16 %v3461
        %v3626 = vunpack.c.l.b16 %v3462
        %v3627 = vunpack.c.h.b16 %v3462
        %v3628 = vunpack.c.l.b16 %v3463
        %v3629 = vunpack.c.h.b16 %v3463
        %v3630 = vunpack.c.l.b16 %v3464
        %v3631 = vunpack.c.h.b16 %v3464
        %v3632 = vunpack.c.l.b16 %v3465
        %v3633 = vunpack.c.h.b16 %v3465
        %v3634 = vunpack.c.l.b16 %v3466
        %v3635 = vunpack.c.h.b16 %v3466
        %v3636 = vunpack.c.l.b16 %v3467
        %v3637 = vunpack.c.h.b16 %v3467
        %v3638 = vunpack.c.l.b16 %v3468
        %v3639 = vunpack.c.h.b16 %v3468
        %v3640 = vunpack.c.l.b16 %v3469
        %v3641 = vunpack.c.h.b16 %v3469
        %v3642 = vunpack.c.l.b16 %v3470
        %v3643 = vunpack.c.h.b16 %v3470
        %v3644 = vunpack.c.l.b16 %v3471
        %v3645 = vunpack.c.h.b16 %v3471
        %v3646 = vunpack.c.l.b16 %v3472
        %v3647 = vunpack.c.h.b16 %v3472
        %v3648 = vunpack.c.l.b16 %v3473
        %v3649 = vunpack.c.h.b16 %v3473
        %v3650 = vunpack.c.l.b16 %v3474
        %v3651 = vunpack.c.h.b16 %v3474
        %v3652 = vunpack.c.l.b16 %v3475
        %v3653 = vunpack.c.h.b16 %v3475
        %v3654 = vunpack.c.l.b16 %v3476
        %v3655 = vunpack.c.h.b16 %v3476
        %v3656 = vunpack.c.l.b16 %v3477
        %v3657 = vunpack.c.h.b16 %v3477
        %v3658 = vunpack.c.l.b16 %v3478
        %v3659 = vunpack.c.h.b16 %v3478
        %v3660 = vunpack.c.l.b16 %v3479
        %v3661 = vunpack.c.h.b16 %v3479
        %v3662 = vunpack.c.l.b16 %v3480
        %v3663 = vunpack.c.h.b16 %v3480
        %v3664 = vunpack.c.l.b16 %v3481
        %v3665 = vunpack.c.h.b16 %v3481
        %v3666 = vunpack.c.l.b16 %v3482
        %v3667 = vunpack.c.h.b16 %v3482
        %v3668 = vunpack.c.l.b16 %v3483
        %v3669 = vunpack.c.h.b16 %v3483
        %v3670 = vunpack.c.l.b16 %v3484
        %v3671 = vunpack.c.h.b16 %v3484
        %v3672 = vunpack.c.l.b16 %v3485
        %v3673 = vunpack.c.h.b16 %v3485
        %v3674 = vunpack.c.l.b16 %v3486
        %v3675 = vunpack.c.h.b16 %v3486
        %v3676 = vunpack.c.l.b16 %v3487
        %v3677 = vunpack.c.h.b16 %v3487
        %v3678 = vunpack.c.l.b16 %v3488
        %v3679 = vunpack.c.h.b16 %v3488
        %v3680 = vunpack.c.l.b16 %v3489
        %v3681 = vunpack.c.h.b16 %v3489
        %v3682 = vpack.c.b16 %v3558, %v3554
        %v3683 = vpack.c.b16 %v3559, %v3555
        %v3684 = vpack.c.b16 %v3560, %v3556
        %v3685 = vpack.c.b16 %v3561, %v3557
        %v3686 = vpack.c.b16 %v3566, %v3562
        %v3687 = vpack.c.b16 %v3567, %v3563
        %v3688 = vpack.c.b16 %v3568, %v3564
        %v3689 = vpack.c.b16 %v3569, %v3565
        %v3690 = vpack.c.b16 %v3574, %v3570
        %v3691 = vpack.c.b16 %v3575, %v3571
        %v3692 = vpack.c.b16 %v3576, %v3572
        %v3693 = vpack.c.b16 %v3577, %v3573
        %v3694 = vpack.c.b16 %v3582, %v3578
        %v3695 = vpack.c.b16 %v3583, %v3579
        %v3696 = vpack.c.b16 %v3584, %v3580
        %v3697 = vpack.c.b16 %v3585, %v3581
        %v3698 = vpack.c.b16 %v3590, %v3586
        %v3699 = vpack.c.b16 %v3591, %v3587
        %v3700 = vpack.c.b16 %v3592, %v3588
        %v3701 = vpack.c.b16 %v3593, %v3589
        %v3702 = vpack.c.b16 %v3598, %v3594
        %v3703 = vpack.c.b16 %v3599, %v3595
        %v3704 = vpack.c.b16 %v3600, %v3596
        %v3705 = vpack.c.b16 %v3601, %v3597
        %v3706 = vpack.c.b16 %v3606, %v3602
        %v3707 = vpack.c.b16 %v3607, %v3603
        %v3708 = vpack.c.b16 %v3608, %v3604
        %v3709 = vpack.c.b16 %v3609, %v3605
        %v3710 = vpack.c.b16 %v3614, %v3610
        %v3711 = vpack.c.b16 %v3615, %v3611
        %v3712 = vpack.c.b16 %v3616, %v3612
        %v3713 = vpack.c.b16 %v3617, %v3613
        %v3714 = vpack.c.b16 %v3622, %v3618
        %v3715 = vpack.c.b16 %v3623, %v3619
        %v3716 = vpack.c.b16 %v3624, %v3620
        %v3717 = vpack.c.b16 %v3625, %v3621
        %v3718 = vpack.c.b16 %v3630, %v3626
        %v3719 = vpack.c.b16 %v3631, %v3627
        %v3720 = vpack.c.b16 %v3632, %v3628
        %v3721 = vpack.c.b16 %v3633, %v3629
        %v3722 = vpack.c.b16 %v3638, %v3634
        %v3723 = vpack.c.b16 %v3639, %v3635
        %v3724 = vpack.c.b16 %v3640, %v3636
        %v3725 = vpack.c.b16 %v3641, %v3637
        %v3726 = vpack.c.b16 %v3646, %v3642
        %v3727 = vpack.c.b16 %v3647, %v3643
        %v3728 = vpack.c.b16 %v3648, %v3644
        %v3729 = vpack.c.b16 %v3649, %v3645
        %v3730 = vpack.c.b16 %v3654, %v3650
        %v3731 = vpack.c.b16 %v3655, %v3651
        %v3732 = vpack.c.b16 %v3656, %v3652
        %v3733 = vpack.c.b16 %v3657, %v3653
        %v3734 = vpack.c.b16 %v3662, %v3658
        %v3735 = vpack.c.b16 %v3663, %v3659
        %v3736 = vpack.c.b16 %v3664, %v3660
        %v3737 = vpack.c.b16 %v3665, %v3661
        %v3738 = vpack.c.b16 %v3670, %v3666
        %v3739 = vpack.c.b16 %v3671, %v3667
        %v3740 = vpack.c.b16 %v3672, %v3668
        %v3741 = vpack.c.b16 %v3673, %v3669
        %v3742 = vpack.c.b16 %v3678, %v3674
        %v3743 = vpack.c.b16 %v3679, %v3675
        %v3744 = vpack.c.b16 %v3680, %v3676
        %v3745 = vpack.c.b16 %v3681, %v3677
        %3810 = vmatprep.subr.bf16.mxu0 %v3683
        %3811 = vmatpush1.bf16.msra.mxu0 %v3682
        %3812 = vmatprep.subr.bf16.mxu0 %v3687
        %3813 = vmatpush1.bf16.msra.mxu0 %v3686
        %3814 = vmatprep.subr.bf16.mxu0 %v3691
        %3815 = vmatpush1.bf16.msra.mxu0 %v3690
        %3816 = vmatprep.subr.bf16.mxu0 %v3695
        %3817 = vmatpush1.bf16.msra.mxu0 %v3694
        %3818 = vmatprep.subr.bf16.mxu0 %v3699
        %3819 = vmatpush1.bf16.msra.mxu0 %v3698
        %3820 = vmatprep.subr.bf16.mxu0 %v3703
        %3821 = vmatpush1.bf16.msra.mxu0 %v3702
        %3822 = vmatprep.subr.bf16.mxu0 %v3707
        %3823 = vmatpush1.bf16.msra.mxu0 %v3706
        %3824 = vmatprep.subr.bf16.mxu0 %v3711
        %3825 = vmatpush1.bf16.msra.mxu0 %v3710
        %3826 = vmatprep.subr.bf16.mxu0 %v3715
        %3827 = vmatpush1.bf16.msra.mxu0 %v3714
        %3828 = vmatprep.subr.bf16.mxu0 %v3719
        %3829 = vmatpush1.bf16.msra.mxu0 %v3718
        %3830 = vmatprep.subr.bf16.mxu0 %v3723
        %3831 = vmatpush1.bf16.msra.mxu0 %v3722
        %3832 = vmatprep.subr.bf16.mxu0 %v3727
        %3833 = vmatpush1.bf16.msra.mxu0 %v3726
        %3834 = vmatprep.subr.bf16.mxu0 %v3731
        %3835 = vmatpush1.bf16.msra.mxu0 %v3730
        %3836 = vmatprep.subr.bf16.mxu0 %v3735
        %3837 = vmatpush1.bf16.msra.mxu0 %v3734
        %3838 = vmatprep.subr.bf16.mxu0 %v3739
        %3839 = vmatpush1.bf16.msra.mxu0 %v3738
        %3840 = vmatprep.subr.bf16.mxu0 %v3743
        %3841 = vmatpush1.bf16.msra.mxu0 %v3742
        %3842 = vmatprep.mubr.bf16.mxu0 %v3422
        %3843 = vmatmul.mubr.bf16.gmra.mrb[0].mxu0 %v3168
        %v3844 = vpop.f32.mrb[0].mxu0
        %v3845 = vadd.f32 0.0, %v3844
        %v3846 = vpop.f32.mrb[0].mxu0
        %v3847 = vadd.f32 0.0, %v3846
        %v3848 = vpop.f32.mrb[0].mxu0
        %v3849 = vadd.f32 0.0, %v3848
        %v3850 = vpop.f32.mrb[0].mxu0
        %v3851 = vadd.f32 0.0, %v3850
        %3852 = vmatprep.mubr.bf16.mxu0 %v3423
        %3853 = vmatmul.mubr.bf16.gmra.mrb[0].mxu0 %v3169
        %v3854 = vpop.f32.mrb[0].mxu0
        %v3855 = vadd.f32 0.0, %v3854
        %v3856 = vpop.f32.mrb[0].mxu0
        %v3857 = vadd.f32 0.0, %v3856
        %v3858 = vpop.f32.mrb[0].mxu0
        %v3859 = vadd.f32 0.0, %v3858
        %v3860 = vpop.f32.mrb[0].mxu0
        %v3861 = vadd.f32 0.0, %v3860
        %3862 = vmatprep.mubr.bf16.mxu0 %v3424
        %3863 = vmatmul.mubr.bf16.gmra.mrb[0].mxu0 %v3170
        %v3864 = vpop.f32.mrb[0].mxu0
        %v3865 = vadd.f32 0.0, %v3864
        %v3866 = vpop.f32.mrb[0].mxu0
        %v3867 = vadd.f32 0.0, %v3866
        %v3868 = vpop.f32.mrb[0].mxu0
        %v3869 = vadd.f32 0.0, %v3868
        %v3870 = vpop.f32.mrb[0].mxu0
        %v3871 = vadd.f32 0.0, %v3870
        %3872 = vmatprep.mubr.bf16.mxu0 %v3425
        %3873 = vmatmul.mubr.bf16.gmra.mrb[0].mxu0 %v3171
        %v3874 = vpop.f32.mrb[0].mxu0
        %v3875 = vadd.f32 0.0, %v3874
        %v3876 = vpop.f32.mrb[0].mxu0
        %v3877 = vadd.f32 0.0, %v3876
        %v3878 = vpop.f32.mrb[0].mxu0
        %v3879 = vadd.f32 0.0, %v3878
        %v3880 = vpop.f32.mrb[0].mxu0
        %v3881 = vadd.f32 0.0, %v3880
        %3882 = vdwg.mxu0
        %3883 = vmatprep.subr.bf16.mxu0 %v3685
        %3884 = vmatpush1.bf16.msra.mxu0 %v3684
        %3885 = vmatprep.subr.bf16.mxu0 %v3689
        %3886 = vmatpush1.bf16.msra.mxu0 %v3688
        %3887 = vmatprep.subr.bf16.mxu0 %v3693
        %3888 = vmatpush1.bf16.msra.mxu0 %v3692
        %3889 = vmatprep.subr.bf16.mxu0 %v3697
        %3890 = vmatpush1.bf16.msra.mxu0 %v3696
        %3891 = vmatprep.subr.bf16.mxu0 %v3701
        %3892 = vmatpush1.bf16.msra.mxu0 %v3700
        %3893 = vmatprep.subr.bf16.mxu0 %v3705
        %3894 = vmatpush1.bf16.msra.mxu0 %v3704
        %3895 = vmatprep.subr.bf16.mxu0 %v3709
        %3896 = vmatpush1.bf16.msra.mxu0 %v3708
        %3897 = vmatprep.subr.bf16.mxu0 %v3713
        %3898 = vmatpush1.bf16.msra.mxu0 %v3712
        %3899 = vmatprep.subr.bf16.mxu0 %v3717
        %3900 = vmatpush1.bf16.msra.mxu0 %v3716
        %3901 = vmatprep.subr.bf16.mxu0 %v3721
        %3902 = vmatpush1.bf16.msra.mxu0 %v3720
        %3903 = vmatprep.subr.bf16.mxu0 %v3725
        %3904 = vmatpush1.bf16.msra.mxu0 %v3724
        %3905 = vmatprep.subr.bf16.mxu0 %v3729
        %3906 = vmatpush1.bf16.msra.mxu0 %v3728
        %3907 = vmatprep.subr.bf16.mxu0 %v3733
        %3908 = vmatpush1.bf16.msra.mxu0 %v3732
        %3909 = vmatprep.subr.bf16.mxu0 %v3737
        %3910 = vmatpush1.bf16.msra.mxu0 %v3736
        %3911 = vmatprep.subr.bf16.mxu0 %v3741
        %3912 = vmatpush1.bf16.msra.mxu0 %v3740
        %3913 = vmatprep.subr.bf16.mxu0 %v3745
        %3914 = vmatpush1.bf16.msra.mxu0 %v3744
        %3915 = vmatprep.mubr.bf16.mxu0 %v3422
        %3916 = vmatmul.mubr.bf16.gmra.mrb[0].mxu0 %v3168
        %v3917 = vpop.f32.mrb[0].mxu0
        %v3918 = vadd.f32 0.0, %v3917
        %v3919 = vpop.f32.mrb[0].mxu0
        %v3920 = vadd.f32 0.0, %v3919
        %v3921 = vpop.f32.mrb[0].mxu0
        %v3922 = vadd.f32 0.0, %v3921
        %v3923 = vpop.f32.mrb[0].mxu0
        %v3924 = vadd.f32 0.0, %v3923
        %3925 = vmatprep.mubr.bf16.mxu0 %v3423
        %3926 = vmatmul.mubr.bf16.gmra.mrb[0].mxu0 %v3169
        %v3927 = vpop.f32.mrb[0].mxu0
        %v3928 = vadd.f32 0.0, %v3927
        %v3929 = vpop.f32.mrb[0].mxu0
        %v3930 = vadd.f32 0.0, %v3929
        %v3931 = vpop.f32.mrb[0].mxu0
        %v3932 = vadd.f32 0.0, %v3931
        %v3933 = vpop.f32.mrb[0].mxu0
        %v3934 = vadd.f32 0.0, %v3933
        %3935 = vmatprep.mubr.bf16.mxu0 %v3424
        %3936 = vmatmul.mubr.bf16.gmra.mrb[0].mxu0 %v3170
        %v3937 = vpop.f32.mrb[0].mxu0
        %v3938 = vadd.f32 0.0, %v3937
        %v3939 = vpop.f32.mrb[0].mxu0
        %v3940 = vadd.f32 0.0, %v3939
        %v3941 = vpop.f32.mrb[0].mxu0
        %v3942 = vadd.f32 0.0, %v3941
        %v3943 = vpop.f32.mrb[0].mxu0
        %v3944 = vadd.f32 0.0, %v3943
        %3945 = vmatprep.mubr.bf16.mxu0 %v3425
        %3946 = vmatmul.mubr.bf16.gmra.mrb[0].mxu0 %v3171
        %v3947 = vpop.f32.mrb[0].mxu0
        %v3948 = vadd.f32 0.0, %v3947
        %v3949 = vpop.f32.mrb[0].mxu0
        %v3950 = vadd.f32 0.0, %v3949
        %v3951 = vpop.f32.mrb[0].mxu0
        %v3952 = vadd.f32 0.0, %v3951
        %v3953 = vpop.f32.mrb[0].mxu0
        %v3954 = vadd.f32 0.0, %v3953
        %3955 = vdwg.mxu0
        %p3956 = scmp.eq.s32.totalorder %s40, 0
        // Predicated region
        $region81: #{tpu_custom_call.1} parent=47 // pred_check
          %p3957 = pneg %p3956
        $region82: #{tpu_custom_call.1} parent=47 // pred_check_branch
          %3959 = sbr.rel (%p3957) target = $region84
        $region83: #{tpu_custom_call.1} parent=47 // pred_region
          %3960 = vst [vmem:[#allocation3] sm:$0xff] %v3845
          %3961 = vst [vmem:[#allocation3 + $0x8] sm:$0xff] %v3847
          %3962 = vst [vmem:[#allocation3 + $0x10] sm:$0xff] %v3918
          %3963 = vst [vmem:[#allocation3 + $0x18] sm:$0xff] %v3920
          %3964 = vst [vmem:[#allocation3 + $0x20] sm:$0xff] %v3849
          %3965 = vst [vmem:[#allocation3 + $0x28] sm:$0xff] %v3851
          %3966 = vst [vmem:[#allocation3 + $0x30] sm:$0xff] %v3922
          %3967 = vst [vmem:[#allocation3 + $0x38] sm:$0xff] %v3924
          %3968 = vst [vmem:[#allocation3 + $0x40] sm:$0xff] %v3855
          %3969 = vst [vmem:[#allocation3 + $0x48] sm:$0xff] %v3857
          %3970 = vst [vmem:[#allocation3 + $0x50] sm:$0xff] %v3928
          %3971 = vst [vmem:[#allocation3 + $0x58] sm:$0xff] %v3930
          %3972 = vst [vmem:[#allocation3 + $0x60] sm:$0xff] %v3859
          %3973 = vst [vmem:[#allocation3 + $0x68] sm:$0xff] %v3861
          %3974 = vst [vmem:[#allocation3 + $0x70] sm:$0xff] %v3932
          %3975 = vst [vmem:[#allocation3 + $0x78] sm:$0xff] %v3934
          %3976 = vst [vmem:[#allocation3 + $0x80] sm:$0xff] %v3865
          %3977 = vst [vmem:[#allocation3 + $0x88] sm:$0xff] %v3867
          %3978 = vst [vmem:[#allocation3 + $0x90] sm:$0xff] %v3938
          %3979 = vst [vmem:[#allocation3 + $0x98] sm:$0xff] %v3940
          %3980 = vst [vmem:[#allocation3 + $0xa0] sm:$0xff] %v3869
          %3981 = vst [vmem:[#allocation3 + $0xa8] sm:$0xff] %v3871
          %3982 = vst [vmem:[#allocation3 + $0xb0] sm:$0xff] %v3942
          %3983 = vst [vmem:[#allocation3 + $0xb8] sm:$0xff] %v3944
          %3984 = vst [vmem:[#allocation3 + $0xc0] sm:$0xff] %v3875
          %3985 = vst [vmem:[#allocation3 + $0xc8] sm:$0xff] %v3877
          %3986 = vst [vmem:[#allocation3 + $0xd0] sm:$0xff] %v3948
          %3987 = vst [vmem:[#allocation3 + $0xd8] sm:$0xff] %v3950
          %3988 = vst [vmem:[#allocation3 + $0xe0] sm:$0xff] %v3879
          %3989 = vst [vmem:[#allocation3 + $0xe8] sm:$0xff] %v3881
          %3990 = vst [vmem:[#allocation3 + $0xf0] sm:$0xff] %v3952
          %3991 = vst [vmem:[#allocation3 + $0xf8] sm:$0xff] %v3954
        $region84: #{tpu_custom_call.1} parent=47 // pred_fallthru
          _
        %p3992 = scmp.gt.s32.totalorder %s40, 0
        // Predicated region
        $region85: #{tpu_custom_call.1} parent=47 // pred_check
          %p3993 = pneg %p3992
        $region86: #{tpu_custom_call.1} parent=47 // pred_check_branch
          %3995 = sbr.rel (%p3993) target = $region88
        $region87: #{tpu_custom_call.1} parent=47 // pred_region
          %v3996 = vld [vmem:[#allocation3] sm:$0xff]
          %v3997 = vld [vmem:[#allocation3 + $0x8] sm:$0xff]
          %v3998 = vld [vmem:[#allocation3 + $0x10] sm:$0xff]
          %v3999 = vld [vmem:[#allocation3 + $0x18] sm:$0xff]
          %v4000 = vld [vmem:[#allocation3 + $0x20] sm:$0xff]
          %v4001 = vld [vmem:[#allocation3 + $0x28] sm:$0xff]
          %v4002 = vld [vmem:[#allocation3 + $0x30] sm:$0xff]
          %v4003 = vld [vmem:[#allocation3 + $0x38] sm:$0xff]
          %v4004 = vld [vmem:[#allocation3 + $0x40] sm:$0xff]
          %v4005 = vld [vmem:[#allocation3 + $0x48] sm:$0xff]
          %v4006 = vld [vmem:[#allocation3 + $0x50] sm:$0xff]
          %v4007 = vld [vmem:[#allocation3 + $0x58] sm:$0xff]
          %v4008 = vld [vmem:[#allocation3 + $0x60] sm:$0xff]
          %v4009 = vld [vmem:[#allocation3 + $0x68] sm:$0xff]
          %v4010 = vld [vmem:[#allocation3 + $0x70] sm:$0xff]
          %v4011 = vld [vmem:[#allocation3 + $0x78] sm:$0xff]
          %v4012 = vld [vmem:[#allocation3 + $0x80] sm:$0xff]
          %v4013 = vld [vmem:[#allocation3 + $0x88] sm:$0xff]
          %v4014 = vld [vmem:[#allocation3 + $0x90] sm:$0xff]
          %v4015 = vld [vmem:[#allocation3 + $0x98] sm:$0xff]
          %v4016 = vld [vmem:[#allocation3 + $0xa0] sm:$0xff]
          %v4017 = vld [vmem:[#allocation3 + $0xa8] sm:$0xff]
          %v4018 = vld [vmem:[#allocation3 + $0xb0] sm:$0xff]
          %v4019 = vld [vmem:[#allocation3 + $0xb8] sm:$0xff]
          %v4020 = vld [vmem:[#allocation3 + $0xc0] sm:$0xff]
          %v4021 = vld [vmem:[#allocation3 + $0xc8] sm:$0xff]
          %v4022 = vld [vmem:[#allocation3 + $0xd0] sm:$0xff]
          %v4023 = vld [vmem:[#allocation3 + $0xd8] sm:$0xff]
          %v4024 = vld [vmem:[#allocation3 + $0xe0] sm:$0xff]
          %v4025 = vld [vmem:[#allocation3 + $0xe8] sm:$0xff]
          %v4026 = vld [vmem:[#allocation3 + $0xf0] sm:$0xff]
          %v4027 = vld [vmem:[#allocation3 + $0xf8] sm:$0xff]
          %v4028 = vadd.f32 %v3996, %v3845
          %v4029 = vadd.f32 %v3997, %v3847
          %v4030 = vadd.f32 %v3998, %v3918
          %v4031 = vadd.f32 %v3999, %v3920
          %v4032 = vadd.f32 %v4000, %v3849
          %v4033 = vadd.f32 %v4001, %v3851
          %v4034 = vadd.f32 %v4002, %v3922
          %v4035 = vadd.f32 %v4003, %v3924
          %v4036 = vadd.f32 %v4004, %v3855
          %v4037 = vadd.f32 %v4005, %v3857
          %v4038 = vadd.f32 %v4006, %v3928
          %v4039 = vadd.f32 %v4007, %v3930
          %v4040 = vadd.f32 %v4008, %v3859
          %v4041 = vadd.f32 %v4009, %v3861
          %v4042 = vadd.f32 %v4010, %v3932
          %v4043 = vadd.f32 %v4011, %v3934
          %v4044 = vadd.f32 %v4012, %v3865
          %v4045 = vadd.f32 %v4013, %v3867
          %v4046 = vadd.f32 %v4014, %v3938
          %v4047 = vadd.f32 %v4015, %v3940
          %v4048 = vadd.f32 %v4016, %v3869
          %v4049 = vadd.f32 %v4017, %v3871
          %v4050 = vadd.f32 %v4018, %v3942
          %v4051 = vadd.f32 %v4019, %v3944
          %v4052 = vadd.f32 %v4020, %v3875
          %v4053 = vadd.f32 %v4021, %v3877
          %v4054 = vadd.f32 %v4022, %v3948
          %v4055 = vadd.f32 %v4023, %v3950
          %v4056 = vadd.f32 %v4024, %v3879
          %v4057 = vadd.f32 %v4025, %v3881
          %v4058 = vadd.f32 %v4026, %v3952
          %v4059 = vadd.f32 %v4027, %v3954
          %4060 = vst [vmem:[#allocation3] sm:$0xff] %v4028
          %4061 = vst [vmem:[#allocation3 + $0x8] sm:$0xff] %v4029
          %4062 = vst [vmem:[#allocation3 + $0x10] sm:$0xff] %v4030
          %4063 = vst [vmem:[#allocation3 + $0x18] sm:$0xff] %v4031
          %4064 = vst [vmem:[#allocation3 + $0x20] sm:$0xff] %v4032
          %4065 = vst [vmem:[#allocation3 + $0x28] sm:$0xff] %v4033
          %4066 = vst [vmem:[#allocation3 + $0x30] sm:$0xff] %v4034
          %4067 = vst [vmem:[#allocation3 + $0x38] sm:$0xff] %v4035
          %4068 = vst [vmem:[#allocation3 + $0x40] sm:$0xff] %v4036
          %4069 = vst [vmem:[#allocation3 + $0x48] sm:$0xff] %v4037
          %4070 = vst [vmem:[#allocation3 + $0x50] sm:$0xff] %v4038
          %4071 = vst [vmem:[#allocation3 + $0x58] sm:$0xff] %v4039
          %4072 = vst [vmem:[#allocation3 + $0x60] sm:$0xff] %v4040
          %4073 = vst [vmem:[#allocation3 + $0x68] sm:$0xff] %v4041
          %4074 = vst [vmem:[#allocation3 + $0x70] sm:$0xff] %v4042
          %4075 = vst [vmem:[#allocation3 + $0x78] sm:$0xff] %v4043
          %4076 = vst [vmem:[#allocation3 + $0x80] sm:$0xff] %v4044
          %4077 = vst [vmem:[#allocation3 + $0x88] sm:$0xff] %v4045
          %4078 = vst [vmem:[#allocation3 + $0x90] sm:$0xff] %v4046
          %4079 = vst [vmem:[#allocation3 + $0x98] sm:$0xff] %v4047
          %4080 = vst [vmem:[#allocation3 + $0xa0] sm:$0xff] %v4048
          %4081 = vst [vmem:[#allocation3 + $0xa8] sm:$0xff] %v4049
          %4082 = vst [vmem:[#allocation3 + $0xb0] sm:$0xff] %v4050
          %4083 = vst [vmem:[#allocation3 + $0xb8] sm:$0xff] %v4051
          %4084 = vst [vmem:[#allocation3 + $0xc0] sm:$0xff] %v4052
          %4085 = vst [vmem:[#allocation3 + $0xc8] sm:$0xff] %v4053
          %4086 = vst [vmem:[#allocation3 + $0xd0] sm:$0xff] %v4054
          %4087 = vst [vmem:[#allocation3 + $0xd8] sm:$0xff] %v4055
          %4088 = vst [vmem:[#allocation3 + $0xe0] sm:$0xff] %v4056
          %4089 = vst [vmem:[#allocation3 + $0xe8] sm:$0xff] %v4057
          %4090 = vst [vmem:[#allocation3 + $0xf0] sm:$0xff] %v4058
          %4091 = vst [vmem:[#allocation3 + $0xf8] sm:$0xff] %v4059
        $region88: #{tpu_custom_call.1} parent=47 // pred_fallthru
          _
        %p4092 = scmp.eq.s32.totalorder %s40, 1
        // Predicated region
        $region89: #{tpu_custom_call.1} parent=47 // pred_check
          %p4093 = pneg %p4092
        $region90: #{tpu_custom_call.1} parent=47 // pred_check_branch
          %4095 = sbr.rel (%p4093) target = $region92
        $region91: #{tpu_custom_call.1} parent=47 // pred_region
          %v4096 = vld [vmem:[#allocation3] sm:$0xff]
          %v4097 = vld [vmem:[#allocation3 + $0x8] sm:$0xff]
          %v4098 = vld [vmem:[#allocation3 + $0x10] sm:$0xff]
          %v4099 = vld [vmem:[#allocation3 + $0x18] sm:$0xff]
          %v4100 = vld [vmem:[#allocation3 + $0x20] sm:$0xff]
          %v4101 = vld [vmem:[#allocation3 + $0x28] sm:$0xff]
          %v4102 = vld [vmem:[#allocation3 + $0x30] sm:$0xff]
          %v4103 = vld [vmem:[#allocation3 + $0x38] sm:$0xff]
          %v4104 = vld [vmem:[#allocation3 + $0x40] sm:$0xff]
          %v4105 = vld [vmem:[#allocation3 + $0x48] sm:$0xff]
          %v4106 = vld [vmem:[#allocation3 + $0x50] sm:$0xff]
          %v4107 = vld [vmem:[#allocation3 + $0x58] sm:$0xff]
          %v4108 = vld [vmem:[#allocation3 + $0x60] sm:$0xff]
          %v4109 = vld [vmem:[#allocation3 + $0x68] sm:$0xff]
          %v4110 = vld [vmem:[#allocation3 + $0x70] sm:$0xff]
          %v4111 = vld [vmem:[#allocation3 + $0x78] sm:$0xff]
          %v4112 = vld [vmem:[#allocation3 + $0x80] sm:$0xff]
          %v4113 = vld [vmem:[#allocation3 + $0x88] sm:$0xff]
          %v4114 = vld [vmem:[#allocation3 + $0x90] sm:$0xff]
          %v4115 = vld [vmem:[#allocation3 + $0x98] sm:$0xff]
          %v4116 = vld [vmem:[#allocation3 + $0xa0] sm:$0xff]
          %v4117 = vld [vmem:[#allocation3 + $0xa8] sm:$0xff]
          %v4118 = vld [vmem:[#allocation3 + $0xb0] sm:$0xff]
          %v4119 = vld [vmem:[#allocation3 + $0xb8] sm:$0xff]
          %v4120 = vld [vmem:[#allocation3 + $0xc0] sm:$0xff]
          %v4121 = vld [vmem:[#allocation3 + $0xc8] sm:$0xff]
          %v4122 = vld [vmem:[#allocation3 + $0xd0] sm:$0xff]
          %v4123 = vld [vmem:[#allocation3 + $0xd8] sm:$0xff]
          %v4124 = vld [vmem:[#allocation3 + $0xe0] sm:$0xff]
          %v4125 = vld [vmem:[#allocation3 + $0xe8] sm:$0xff]
          %v4126 = vld [vmem:[#allocation3 + $0xf0] sm:$0xff]
          %v4127 = vld [vmem:[#allocation3 + $0xf8] sm:$0xff]
          %v4128 = vld [vmem:[#allocation12] sm:$0xf]
          %v4130 = vlaneseq
          %v4131 = vshrl.u32 %v4130, 7
          %v4132 = vsub.s32 0, %v4131
          %v4133 = vrot.slane %v4128, %v4132
          %v4134 = vlaneseq
          %v4135 = vshrl.u32 %v4134, 7
          %v4136 = vsub.s32 1, %v4135
          %v4137 = vrot.slane %v4128, %v4136
          %v4138 = vlaneseq
          %v4139 = vshrl.u32 %v4138, 7
          %v4140 = vsub.s32 2, %v4139
          %v4141 = vrot.slane %v4128, %v4140
          %v4142 = vlaneseq
          %v4143 = vshrl.u32 %v4142, 7
          %v4144 = vsub.s32 3, %v4143
          %v4145 = vrot.slane %v4128, %v4144
          %v4150 = vadd.f32 %v4096, %v4133
          %v4151 = vadd.f32 %v4097, %v4137
          %v4152 = vadd.f32 %v4098, %v4141
          %v4153 = vadd.f32 %v4099, %v4145
          %v4154 = vadd.f32 %v4100, %v4133
          %v4155 = vadd.f32 %v4101, %v4137
          %v4156 = vadd.f32 %v4102, %v4141
          %v4157 = vadd.f32 %v4103, %v4145
          %v4158 = vadd.f32 %v4104, %v4133
          %v4159 = vadd.f32 %v4105, %v4137
          %v4160 = vadd.f32 %v4106, %v4141
          %v4161 = vadd.f32 %v4107, %v4145
          %v4162 = vadd.f32 %v4108, %v4133
          %v4163 = vadd.f32 %v4109, %v4137
          %v4164 = vadd.f32 %v4110, %v4141
          %v4165 = vadd.f32 %v4111, %v4145
          %v4166 = vadd.f32 %v4112, %v4133
          %v4167 = vadd.f32 %v4113, %v4137
          %v4168 = vadd.f32 %v4114, %v4141
          %v4169 = vadd.f32 %v4115, %v4145
          %v4170 = vadd.f32 %v4116, %v4133
          %v4171 = vadd.f32 %v4117, %v4137
          %v4172 = vadd.f32 %v4118, %v4141
          %v4173 = vadd.f32 %v4119, %v4145
          %v4174 = vadd.f32 %v4120, %v4133
          %v4175 = vadd.f32 %v4121, %v4137
          %v4176 = vadd.f32 %v4122, %v4141
          %v4177 = vadd.f32 %v4123, %v4145
          %v4178 = vadd.f32 %v4124, %v4133
          %v4179 = vadd.f32 %v4125, %v4137
          %v4180 = vadd.f32 %v4126, %v4141
          %v4181 = vadd.f32 %v4127, %v4145
          %4182 = vst [vmem:[%s521] sm:$0xff] %v4150
          %4183 = vst [vmem:[%s521 + $0x8] sm:$0xff] %v4151
          %4184 = vst [vmem:[%s521 + $0x10] sm:$0xff] %v4152
          %4185 = vst [vmem:[%s521 + $0x18] sm:$0xff] %v4153
          %4186 = vst [vmem:[%s521 + $0x20] sm:$0xff] %v4154
          %4187 = vst [vmem:[%s521 + $0x28] sm:$0xff] %v4155
          %4188 = vst [vmem:[%s521 + $0x30] sm:$0xff] %v4156
          %4189 = vst [vmem:[%s521 + $0x38] sm:$0xff] %v4157
          %4190 = vst [vmem:[%s521 + $0x40] sm:$0xff] %v4158
          %4191 = vst [vmem:[%s521 + $0x48] sm:$0xff] %v4159
          %4192 = vst [vmem:[%s521 + $0x50] sm:$0xff] %v4160
          %4193 = vst [vmem:[%s521 + $0x58] sm:$0xff] %v4161
          %4194 = vst [vmem:[%s521 + $0x60] sm:$0xff] %v4162
          %4195 = vst [vmem:[%s521 + $0x68] sm:$0xff] %v4163
          %4196 = vst [vmem:[%s521 + $0x70] sm:$0xff] %v4164
          %4197 = vst [vmem:[%s521 + $0x78] sm:$0xff] %v4165
          %4198 = vst [vmem:[%s521 + $0x80] sm:$0xff] %v4166
          %4199 = vst [vmem:[%s521 + $0x88] sm:$0xff] %v4167
          %4200 = vst [vmem:[%s521 + $0x90] sm:$0xff] %v4168
          %4201 = vst [vmem:[%s521 + $0x98] sm:$0xff] %v4169
          %4202 = vst [vmem:[%s521 + $0xa0] sm:$0xff] %v4170
          %4203 = vst [vmem:[%s521 + $0xa8] sm:$0xff] %v4171
          %4204 = vst [vmem:[%s521 + $0xb0] sm:$0xff] %v4172
          %4205 = vst [vmem:[%s521 + $0xb8] sm:$0xff] %v4173
          %4206 = vst [vmem:[%s521 + $0xc0] sm:$0xff] %v4174
          %4207 = vst [vmem:[%s521 + $0xc8] sm:$0xff] %v4175
          %4208 = vst [vmem:[%s521 + $0xd0] sm:$0xff] %v4176
          %4209 = vst [vmem:[%s521 + $0xd8] sm:$0xff] %v4177
          %4210 = vst [vmem:[%s521 + $0xe0] sm:$0xff] %v4178
          %4211 = vst [vmem:[%s521 + $0xe8] sm:$0xff] %v4179
          %4212 = vst [vmem:[%s521 + $0xf0] sm:$0xff] %v4180
          %4213 = vst [vmem:[%s521 + $0xf8] sm:$0xff] %v4181
        $region92: #{tpu_custom_call.1} parent=47 // pred_fallthru
          _
        %s4214 = sand.u32 %s239, 1
        %s4215 = scalar_lea.sflag [#allocation6], %s4214
        %s4216 = sand.u32 %s239, 1
        %s4217 = smul.addr %s4216, 256
        %s4218 = scalar_lea.vmem [#allocation16], %s4217
        // Predicated region
        $region93: #{tpu_custom_call.1} parent=47 // pred_check
          %p4219 = pneg %p249
        $region94: #{tpu_custom_call.1} parent=47 // pred_check_branch
          %4221 = sbr.rel (%p4219) target = $region96
        $region95: #{tpu_custom_call.1} parent=47 // pred_region
          %s4222 = smul.u32 8, %s39
          %s4224 = ssub.s32 4096, 4096
          %4225 = vsyncadd %s4215, %s4224
          %s4226 = smul.addr %s4222, 4
          %s4227 = smul.addr %s38, 64
          %s4228 = sadd.s32 %s4226, %s4227
          %s4229 = smul.addr %s4228, 128
          %s4230 = scalar_lea.hbm %s7, %s4229
          %s4231 = sshll.u32 %s4218, 4
          %s4232 = int_to_ptr.vmem [resolvable:$true] %s4231
          %4237 = dma.vmem_to_hbm [thread:$0]  %s4232, 4096, %s4230, %s4215, 512, 512, 32
        $region96: #{tpu_custom_call.1} parent=47 // pred_fallthru
          _
      $region48: #{tpu_custom_call.1} parent=5 // pred_fallthru
        _
      %p4238 = scmp.le.s32.totalorder 2, %s28
      // Predicated region
      $region97: #{tpu_custom_call.1} parent=5 // pred_check
        %p4239 = pneg %p4238
      $region98: #{tpu_custom_call.1} parent=5 // pred_check_branch
        %4241 = sbr.rel (%p4239) target = $region100
      $region99: #{tpu_custom_call.1} parent=5 // pred_region
        %s4242 = ssub.s32 %s28, 2
        // Predicated region
        $region101: #{tpu_custom_call.1} parent=99 // pred_check
          %p4243 = pneg %p255
        $region102: #{tpu_custom_call.1} parent=99 // pred_check_branch
          %4245 = sbr.rel (%p4243) target = $region104
        $region103: #{tpu_custom_call.1} parent=99 // pred_region
          %s4246 = sand.u32 %s240, 1
          %s4247 = scalar_lea.sflag [#allocation6], %s4246
          %s4248 = sand.u32 %s240, 1
          %s4249 = smul.addr %s4248, 256
          %s4250 = scalar_lea.vmem [#allocation16], %s4249
          %4251 = dma.done %s4247, 4096
        $region104: #{tpu_custom_call.1} parent=99 // pred_fallthru
          _
      $region100: #{tpu_custom_call.1} parent=5 // pred_fallthru
        _
    $region6: #{tpu_custom_call.1} parent=1 // loop_footer
      %s32 = sadd.s32 1, %s28
    $region7: #{tpu_custom_call.1} parent=1 // loop_footer_branch
      %27 = sbr.rel target = $region3
    $region8: #{tpu_custom_call.1} parent=1 // loop_exit
      _
    %4252 = vsyncpa [#allocation5], 1
    %s4253 = scalar_lea.sflag [#allocation5], 1
    %4254 = vsyncpa %s4253, 1
    %4255 = vsyncpa [#allocation8], 1
    %s4256 = scalar_lea.sflag [#allocation8], 1
    %4257 = vsyncpa %s4256, 1
    %4258 = vsyncpa [#allocation11], 1
    %s4259 = scalar_lea.sflag [#allocation11], 1
    %4260 = vsyncpa %s4259, 1
    %4261 = vsyncpa [#allocation14], 1
    %s4262 = scalar_lea.sflag [#allocation14], 1
    %4263 = vsyncpa %s4262, 1
    %4264 = vsyncpa [#allocation6], 1
    %s4265 = scalar_lea.sflag [#allocation6], 1
    %4266 = vsyncpa %s4265, 1

</llo_original>
